<compile_context>
chip_gen: v5e
topology: v5e:2x2
jax: 0.10.0
libtpu: 0.0.40
codegen_flags: <defaults>
</compile_context>

<pallas_src>
import functools

import jax
import jax.numpy as jnp
from jax.experimental import pallas as pl
from jax.experimental.pallas import tpu as pltpu

EPS_ANGLE = 1e-8            # eps of ComplexLayers.stable_angle
BN_EPS = 1e-5               # nn.BatchNorm2d default eps
MXU_DTYPE = jnp.bfloat16    # MXU input dtype (f32 accumulation); jnp.float32 for exact f32 conv


# ---------------------------------------------------------------------------
# In-kernel math helpers (all elementwise / static-slice / concat / one dot)
# ---------------------------------------------------------------------------
def _stable_collapse(zr, zi):
    """collapse(|z|, stable_angle(z)).  stable_angle overwrites imag with +eps whenever
    |imag| < eps (including small negatives), exactly like the PyTorch reference."""
    m = jnp.sqrt(zr * zr + zi * zi)
    zi_st = jnp.where(jnp.abs(zi) < EPS_ANGLE, EPS_ANGLE, zi)
    inv = jax.lax.rsqrt(zr * zr + zi_st * zi_st)
    return m * zr * inv, m * zi_st * inv, m


def _bn_relu_collapse(psi_r, psi_i, m_pre, scale, shift, cpb, spb):
    """BatchNorm (precomputed per-lane scale/shift) + ReLU on the magnitude, then
    collapse(m, stable_angle(psi) + phase_bias) expressed as a rotation (no atan2)."""
    m = jnp.maximum(m_pre * scale + shift, 0.0)
    psi_i_st = jnp.where(jnp.abs(psi_i) < EPS_ANGLE, EPS_ANGLE, psi_i)
    inv = jax.lax.rsqrt(psi_r * psi_r + psi_i_st * psi_i_st)
    zr = m * (psi_r * cpb - psi_i_st * spb) * inv
    zi = m * (psi_i_st * cpb + psi_r * spb) * inv
    return zr, zi, m


def _conv_core(zr, zi, mag, wbd, magb, pre_ref, stats_ref, *, H, W, cin):
    """3x3 / stride-1 / pad-1 complex conv on one image.

    zr, zi, mag : (H, W*cin) slabs, lane index = x*cin + c (channels fastest).
    wbd         : (9*W*cin, W*cout) block-diagonal weights (taps folded into K).
    Writes pre = [psi_r; psi_i; m_pre] of shape (3H, W*cout) and per-image BN partial sums.
    """
    wc = W * cin

    def pad(x):  # zero ring: (H, W*cin) -> (H+2, (W+2)*cin)
        zlane = jnp.zeros((H, cin), x.dtype)
        x = jnp.concatenate([zlane, x, zlane], axis=1)
        zrow = jnp.zeros((1, (W + 2) * cin), x.dtype)
        return jnp.concatenate([zrow, x, zrow], axis=0)

    def im2col(xp):  # 9 shifted views folded into the lane / contraction axis
        taps = [xp[dy:dy + H, dx * cin: dx * cin + wc]
                for dy in range(3) for dx in range(3)]
        return jnp.concatenate(taps, axis=1)                    # (H, 9*W*cin)

    # Stack the three conv streams along rows -> a single deep-K MXU matmul.
    lhs = jnp.concatenate(
        [im2col(pad(zr)), im2col(pad(zi)), im2col(pad(mag))], axis=0)   # (3H, 9*W*cin)
    out = jnp.dot(lhs.astype(wbd.dtype), wbd,
                  preferred_element_type=jnp.float32)                   # (3H, W*cout) f32

    psi_r = out[0:H]
    psi_i = out[H:2 * H]
    chi = out[2 * H:3 * H]
    # 0.5*(|psi| + b_m) + 0.5*(conv(|z|) + b_m) = 0.5*|psi| + 0.5*chi + b_m
    m_pre = 0.5 * jnp.sqrt(psi_r * psi_r + psi_i * psi_i) + 0.5 * chi + magb

    pre_ref[0] = jnp.concatenate([psi_r, psi_i, m_pre], axis=0)
    stats_ref[0] = jnp.concatenate(
        [jnp.sum(m_pre, axis=0, keepdims=True),
         jnp.sum(m_pre * m_pre, axis=0, keepdims=True)], axis=0)


# ---------------------------------------------------------------------------
# Kernel factories
# ---------------------------------------------------------------------------
def _make_conv_from_input_kernel(H, W, cin):
    """conv1: input is the nearest-upsampled complex activation; the ComplexUpSampling2d
    collapse is fused into the prologue (|collapse(z)| == |z|, reused for the chi path)."""
    def kernel(zr_ref, zi_ref, wbd_ref, magb_ref, pre_ref, stats_ref):
        zr, zi, mag = _stable_collapse(zr_ref[0], zi_ref[0])
        _conv_core(zr, zi, mag, wbd_ref[...], magb_ref[...], pre_ref, stats_ref,
                   H=H, W=W, cin=cin)
    return kernel


def _make_conv_from_pre_kernel(H, W, cin):
    """conv2: input is conv1's pre-activation (psi, m_pre); conv1's BatchNorm+ReLU+Collapse
    epilogue is fused into the prologue so the collapsed activation never hits HBM.
    |collapse(m, phi)| == m (m >= 0 after ReLU), reused for the conv(|z|) path."""
    def kernel(pre_in_ref, sc_ref, sh_ref, cpb_ref, spb_ref,
               wbd_ref, magb_ref, pre_ref, stats_ref):
        blk = pre_in_ref[0]
        zr, zi, m = _bn_relu_collapse(blk[0:H], blk[H:2 * H], blk[2 * H:3 * H],
                                      sc_ref[...], sh_ref[...], cpb_ref[...], spb_ref[...])
        _conv_core(zr, zi, m, wbd_ref[...], magb_ref[...], pre_ref, stats_ref,
                   H=H, W=W, cin=cin)
    return kernel


def _make_bn_collapse_kernel(H):
    """conv2 epilogue: BatchNorm + ReLU + collapse -> lane-dense [zr; zi] slab."""
    def kernel(pre_ref, sc_ref, sh_ref, cpb_ref, spb_ref, out_ref):
        blk = pre_ref[0]
        zr, zi, _ = _bn_relu_collapse(blk[0:H], blk[H:2 * H], blk[2 * H:3 * H],
                                      sc_ref[...], sh_ref[...], cpb_ref[...], spb_ref[...])
        out_ref[0] = jnp.concatenate([zr, zi], axis=0)
    return kernel


# ---------------------------------------------------------------------------
# JAX-side glue (layout, block-diagonal weights, tiny per-channel BN reduction)
# ---------------------------------------------------------------------------
def _compiler_params():
    return pltpu.CompilerParams(dimension_semantics=("parallel",),
                                vmem_limit_bytes=48 * 1024 * 1024)


def _full_spec(shape):
    nd = len(shape)
    return pl.BlockSpec(shape, lambda n, _nd=nd: (0,) * _nd)


def _per_image_spec(shape):  # shape = (1, rows, lanes)
    return pl.BlockSpec(shape, lambda n: (n, 0, 0))


def _block_diag_weights(w9, W, dtype):
    # (9, cin, cout) -> (9*W*cin, W*cout): kron(I_W, w_t) per tap, taps stacked along K.
    eye = jnp.eye(W, dtype=jnp.float32)
    blocks = [jnp.kron(eye, w9[t]) for t in range(9)]
    return jnp.concatenate(blocks, axis=0).astype(dtype)


def _lane_tile(v, W):
    # per-channel (C,) -> per-lane (1, W*C) matching lane index x*C + c
    return jnp.tile(v, (W,))[None, :]


def _bn_scale_shift(stats, gamma, beta, count, W, C):
    # stats: (N, 2, W*C) partial [sum, sum_sq]; biased variance (matches BN normalization).
    s = stats.sum(axis=0).reshape(2, W, C).sum(axis=1)          # (2, C)
    mean = s[0] / count
    var = jnp.maximum(s[1] / count - mean * mean, 0.0)
    inv_std = jax.lax.rsqrt(var + BN_EPS)
    scale = gamma * inv_std
    shift = beta - mean * scale
    return scale, shift


def init_complex_conv_params(key, cin, cout):
    k1, k2, k3 = jax.random.split(key, 3)
    fan_in = cin * 9
    bound = 1.0 / float(fan_in) ** 0.5
    w = jax.random.uniform(k1, (cout, cin, 3, 3), jnp.float32, -bound, bound)  # PyTorch OIHW
    w9 = jnp.transpose(w, (2, 3, 1, 0)).reshape(9, cin, cout)                  # (tap, cin, cout)
    mag_bias = jax.random.uniform(k2, (cout,), jnp.float32, -bound, bound)
    phase_bias = jax.random.uniform(k3, (cout,), jnp.float32, -jnp.pi, jnp.pi)
    return dict(w9=w9,
                mag_bias=mag_bias,
                cos_pb=jnp.cos(phase_bias),
                sin_pb=jnp.sin(phase_bias),
                bn_gamma=jnp.ones((cout,), jnp.float32),
                bn_beta=jnp.zeros((cout,), jnp.float32))


@functools.partial(jax.jit, static_argnames=("out_shape",))
def complex_conv_u_block2(x, idx, out_shape, params1, params2):
    """ComplexConvUBlock2.forward(x, idx, out_shape).

    x: complex64 (N, C_in, H_in, W_in); idx is unused by the reference module's forward
    (its ComplexUpSampling2d ignores pooling indices); out_shape = (H, W).
    Returns the collapsed complex activation of conv2: complex64 (N, C_out, H, W).
    """
    del idx  # unused by the reference forward
    H, W = out_shape
    xr = jnp.real(x).astype(jnp.float32)
    xi = jnp.imag(x).astype(jnp.float32)
    N, cin, hin, win = xr.shape
    c1 = params1["w9"].shape[-1]
    c2 = params2["w9"].shape[-1]

    # --- ComplexUpSampling2d: nearest interpolation of (|z|, angle(z)) to out_shape.
    # The index gather is pure data movement (JAX); the collapse is fused into conv1's prologue.
    # TODO(synk): interpolation mode assumed 'nearest' (F.interpolate default); a bilinear
    # reference would need interpolation weights applied to magnitude/phase here instead.
    src_y = (jnp.arange(H) * hin) // H
    src_x = (jnp.arange(W) * win) // W
    xr_up = jnp.take(jnp.take(xr, src_y, axis=2), src_x, axis=3)   # (N, cin, H, W)
    xi_up = jnp.take(jnp.take(xi, src_y, axis=2), src_x, axis=3)

    def to_slab(a):  # (N, C, H, W) -> (N, H, W*C), lane index = x*C + c
        return jnp.transpose(a, (0, 2, 3, 1)).reshape(N, H, W * a.shape[1])

    zr_up = to_slab(xr_up)
    zi_up = to_slab(xi_up)

    count = float(N * H * W)

    # ---- conv1: upsample-collapse + conv + BN partial sums ----------------------------
    wbd1 = _block_diag_weights(params1["w9"], W, MXU_DTYPE)
    magb1 = _lane_tile(params1["mag_bias"], W)
    pre1, stats1 = pl.pallas_call(
        _make_conv_from_input_kernel(H, W, cin),
        grid=(N,),
        in_specs=[_per_image_spec((1, H, W * cin)),
                  _per_image_spec((1, H, W * cin)),
                  _full_spec(wbd1.shape),
                  _full_spec(magb1.shape)],
        out_specs=[_per_image_spec((1, 3 * H, W * c1)),
                   _per_image_spec((1, 2, W * c1))],
        out_shape=[jax.ShapeDtypeStruct((N, 3 * H, W * c1), jnp.float32),
                   jax.ShapeDtypeStruct((N, 2, W * c1), jnp.float32)],
        compiler_params=_compiler_params(),
    )(zr_up, zi_up, wbd1, magb1)

    # BatchNorm2d statistics (training-mode, biased batch stats) finished in JAX.
    # TODO(synk): running_mean/var tracking (eval mode) is not reproduced.
    sc1, sh1 = _bn_scale_shift(stats1, params1["bn_gamma"], params1["bn_beta"], count, W, c1)

    # ---- conv2: fused (BN1 + ReLU + collapse) prologue + conv + BN partial sums --------
    wbd2 = _block_diag_weights(params2["w9"], W, MXU_DTYPE)
    magb2 = _lane_tile(params2["mag_bias"], W)
    pre2, stats2 = pl.pallas_call(
        _make_conv_from_pre_kernel(H, W, c1),
        grid=(N,),
        in_specs=[_per_image_spec((1, 3 * H, W * c1)),
                  _full_spec((1, W * c1)), _full_spec((1, W * c1)),
                  _full_spec((1, W * c1)), _full_spec((1, W * c1)),
                  _full_spec(wbd2.shape),
                  _full_spec(magb2.shape)],
        out_specs=[_per_image_spec((1, 3 * H, W * c2)),
                   _per_image_spec((1, 2, W * c2))],
        out_shape=[jax.ShapeDtypeStruct((N, 3 * H, W * c2), jnp.float32),
                   jax.ShapeDtypeStruct((N, 2, W * c2), jnp.float32)],
        compiler_params=_compiler_params(),
    )(pre1, _lane_tile(sc1, W), _lane_tile(sh1, W),
      _lane_tile(params1["cos_pb"], W), _lane_tile(params1["sin_pb"], W),
      wbd2, magb2)

    sc2, sh2 = _bn_scale_shift(stats2, params2["bn_gamma"], params2["bn_beta"], count, W, c2)

    # ---- conv2 epilogue: BN2 + ReLU + collapse -> lane-dense [zr; zi] slab -------------
    z2 = pl.pallas_call(
        _make_bn_collapse_kernel(H),
        grid=(N,),
        in_specs=[_per_image_spec((1, 3 * H, W * c2)),
                  _full_spec((1, W * c2)), _full_spec((1, W * c2)),
                  _full_spec((1, W * c2)), _full_spec((1, W * c2))],
        out_specs=_per_image_spec((1, 2 * H, W * c2)),
        out_shape=jax.ShapeDtypeStruct((N, 2 * H, W * c2), jnp.float32),
        compiler_params=_compiler_params(),
    )(pre2, _lane_tile(sc2, W), _lane_tile(sh2, W),
      _lane_tile(params2["cos_pb"], W), _lane_tile(params2["sin_pb"], W))

    def from_slab(a):  # (N, H, W*C) -> (N, C, H, W)
        return jnp.transpose(a.reshape(N, H, W, c2), (0, 3, 1, 2))

    return jax.lax.complex(from_slab(z2[:, :H, :]), from_slab(z2[:, H:, :]))


if __name__ == "__main__":
    N, C_IN, C_OUT = 2, 4, 8
    H_IN, W_IN = 8, 8
    OUT_SHAPE = (16, 16)

    key = jax.random.PRNGKey(0)
    kr, ki, kp1, kp2 = jax.random.split(key, 4)
    x = jax.lax.complex(jax.random.normal(kr, (N, C_IN, H_IN, W_IN), jnp.float32),
                        jax.random.normal(ki, (N, C_IN, H_IN, W_IN), jnp.float32))
    idx = jnp.zeros((N, C_IN, H_IN, W_IN), jnp.int32)   # ignored by the reference forward
    params1 = init_complex_conv_params(kp1, C_IN, C_OUT)
    params2 = init_complex_conv_params(kp2, C_OUT, C_OUT)

    z = complex_conv_u_block2(x, idx, out_shape=OUT_SHAPE, params1=params1, params2=params2)
    jax.block_until_ready(z)

    assert z.shape == (N, C_OUT, OUT_SHAPE[0], OUT_SHAPE[1])
    assert z.dtype == jnp.complex64
    assert bool(jnp.all(jnp.isfinite(jnp.real(z)))) and bool(jnp.all(jnp.isfinite(jnp.imag(z))))
    print("KERNEL_OK")
</pallas_src>

<mosaic_0001>
module attributes {stable_mosaic.version = 11 : i64} {
  func.func @kernel(%arg0: i32, %arg1: memref<1x16x64xf32, #tpu.memory_space<vmem>>, %arg2: memref<1x16x64xf32, #tpu.memory_space<vmem>>, %arg3: memref<576x128xbf16, #tpu.memory_space<vmem>>, %arg4: memref<1x128xf32, #tpu.memory_space<vmem>>, %arg5: memref<1x48x128xf32, #tpu.memory_space<vmem>>, %arg6: memref<1x2x128xf32, #tpu.memory_space<vmem>>) attributes {dimension_semantics = [#tpu.dimension_semantics<parallel>], iteration_bounds = array<i64: 2>, scalar_prefetch = 0 : i64, scratch_operands = 0 : i64, tpu.core_type = #tpu.core_type<tc>, window_params = [{transform_indices = @transform_0, window_bounds = array<i64: 1, 16, 64>}, {transform_indices = @transform_1, window_bounds = array<i64: 1, 16, 64>}, {pipeline_mode = #tpu.pipeline_mode<synchronous>, transform_indices = @transform_2, window_bounds = array<i64: 576, 128>}, {pipeline_mode = #tpu.pipeline_mode<synchronous>, transform_indices = @transform_3, window_bounds = array<i64: 1, 128>}, {transform_indices = @transform_4, window_bounds = array<i64: 1, 48, 128>}, {transform_indices = @transform_5, window_bounds = array<i64: 1, 2, 128>}]} {
    %c0 = arith.constant 0 : index
    %c0_0 = arith.constant 0 : index
    %c0_1 = arith.constant 0 : index
    %0 = vector.load %arg1[%c0, %c0_0, %c0_1] : memref<1x16x64xf32, #tpu.memory_space<vmem>>, vector<1x16x64xf32>
    %1 = vector.shape_cast %0 : vector<1x16x64xf32> to vector<16x64xf32>
    %c0_2 = arith.constant 0 : index
    %c0_3 = arith.constant 0 : index
    %c0_4 = arith.constant 0 : index
    %2 = vector.load %arg2[%c0_2, %c0_3, %c0_4] : memref<1x16x64xf32, #tpu.memory_space<vmem>>, vector<1x16x64xf32>
    %3 = vector.shape_cast %2 : vector<1x16x64xf32> to vector<16x64xf32>
    %4 = arith.mulf %1, %1 : vector<16x64xf32>
    %5 = arith.mulf %3, %3 : vector<16x64xf32>
    %6 = arith.addf %4, %5 : vector<16x64xf32>
    %7 = math.sqrt %6 : vector<16x64xf32>
    %8 = math.absf %3 : vector<16x64xf32>
    %cst = arith.constant 9.99999993E-9 : f32
    %9 = vector.broadcast %cst : f32 to vector<16x64xf32>
    %10 = arith.cmpf olt, %8, %9 : vector<16x64xf32>
    %cst_5 = arith.constant 9.99999993E-9 : f32
    %11 = vector.broadcast %cst_5 : f32 to vector<16x64xf32>
    %12 = arith.select %10, %11, %3 : vector<16x64xi1>, vector<16x64xf32>
    %13 = arith.mulf %1, %1 : vector<16x64xf32>
    %14 = arith.mulf %12, %12 : vector<16x64xf32>
    %15 = arith.addf %13, %14 : vector<16x64xf32>
    %16 = math.rsqrt %15 : vector<16x64xf32>
    %17 = arith.mulf %7, %1 : vector<16x64xf32>
    %18 = arith.mulf %17, %16 : vector<16x64xf32>
    %19 = arith.mulf %7, %12 : vector<16x64xf32>
    %20 = arith.mulf %19, %16 : vector<16x64xf32>
    %c0_6 = arith.constant 0 : index
    %c0_7 = arith.constant 0 : index
    %21 = vector.load %arg3[%c0_6, %c0_7] : memref<576x128xbf16, #tpu.memory_space<vmem>>, vector<576x128xbf16>
    %c0_8 = arith.constant 0 : index
    %c0_9 = arith.constant 0 : index
    %22 = vector.load %arg4[%c0_8, %c0_9] : memref<1x128xf32, #tpu.memory_space<vmem>>, vector<1x128xf32>
    %cst_10 = arith.constant 0.000000e+00 : f32
    %23 = vector.broadcast %cst_10 : f32 to vector<16x4xf32>
    %24 = tpu.concatenate %23, %18, %23 in 1 : vector<16x4xf32>, vector<16x64xf32>, vector<16x4xf32> -> vector<16x72xf32>
    %cst_11 = arith.constant 0.000000e+00 : f32
    %25 = vector.broadcast %cst_11 : f32 to vector<1x72xf32>
    %26 = tpu.concatenate %25, %24, %25 in 0 : vector<1x72xf32>, vector<16x72xf32>, vector<1x72xf32> -> vector<18x72xf32>
    %27 = vector.extract_strided_slice %26 {offsets = [0, 0], sizes = [16, 64], strides = [1, 1]} : vector<18x72xf32> to vector<16x64xf32>
    %28 = vector.extract_strided_slice %26 {offsets = [0, 4], sizes = [16, 64], strides = [1, 1]} : vector<18x72xf32> to vector<16x64xf32>
    %29 = vector.extract_strided_slice %26 {offsets = [0, 8], sizes = [16, 64], strides = [1, 1]} : vector<18x72xf32> to vector<16x64xf32>
    %30 = vector.extract_strided_slice %26 {offsets = [1, 0], sizes = [16, 64], strides = [1, 1]} : vector<18x72xf32> to vector<16x64xf32>
    %31 = vector.extract_strided_slice %26 {offsets = [1, 4], sizes = [16, 64], strides = [1, 1]} : vector<18x72xf32> to vector<16x64xf32>
    %32 = vector.extract_strided_slice %26 {offsets = [1, 8], sizes = [16, 64], strides = [1, 1]} : vector<18x72xf32> to vector<16x64xf32>
    %33 = vector.extract_strided_slice %26 {offsets = [2, 0], sizes = [16, 64], strides = [1, 1]} : vector<18x72xf32> to vector<16x64xf32>
    %34 = vector.extract_strided_slice %26 {offsets = [2, 4], sizes = [16, 64], strides = [1, 1]} : vector<18x72xf32> to vector<16x64xf32>
    %35 = vector.extract_strided_slice %26 {offsets = [2, 8], sizes = [16, 64], strides = [1, 1]} : vector<18x72xf32> to vector<16x64xf32>
    %36 = tpu.concatenate %27, %28, %29, %30, %31, %32, %33, %34, %35 in 1 : vector<16x64xf32>, vector<16x64xf32>, vector<16x64xf32>, vector<16x64xf32>, vector<16x64xf32>, vector<16x64xf32>, vector<16x64xf32>, vector<16x64xf32>, vector<16x64xf32> -> vector<16x576xf32>
    %cst_12 = arith.constant 0.000000e+00 : f32
    %37 = vector.broadcast %cst_12 : f32 to vector<16x4xf32>
    %38 = tpu.concatenate %37, %20, %37 in 1 : vector<16x4xf32>, vector<16x64xf32>, vector<16x4xf32> -> vector<16x72xf32>
    %cst_13 = arith.constant 0.000000e+00 : f32
    %39 = vector.broadcast %cst_13 : f32 to vector<1x72xf32>
    %40 = tpu.concatenate %39, %38, %39 in 0 : vector<1x72xf32>, vector<16x72xf32>, vector<1x72xf32> -> vector<18x72xf32>
    %41 = vector.extract_strided_slice %40 {offsets = [0, 0], sizes = [16, 64], strides = [1, 1]} : vector<18x72xf32> to vector<16x64xf32>
    %42 = vector.extract_strided_slice %40 {offsets = [0, 4], sizes = [16, 64], strides = [1, 1]} : vector<18x72xf32> to vector<16x64xf32>
    %43 = vector.extract_strided_slice %40 {offsets = [0, 8], sizes = [16, 64], strides = [1, 1]} : vector<18x72xf32> to vector<16x64xf32>
    %44 = vector.extract_strided_slice %40 {offsets = [1, 0], sizes = [16, 64], strides = [1, 1]} : vector<18x72xf32> to vector<16x64xf32>
    %45 = vector.extract_strided_slice %40 {offsets = [1, 4], sizes = [16, 64], strides = [1, 1]} : vector<18x72xf32> to vector<16x64xf32>
    %46 = vector.extract_strided_slice %40 {offsets = [1, 8], sizes = [16, 64], strides = [1, 1]} : vector<18x72xf32> to vector<16x64xf32>
    %47 = vector.extract_strided_slice %40 {offsets = [2, 0], sizes = [16, 64], strides = [1, 1]} : vector<18x72xf32> to vector<16x64xf32>
    %48 = vector.extract_strided_slice %40 {offsets = [2, 4], sizes = [16, 64], strides = [1, 1]} : vector<18x72xf32> to vector<16x64xf32>
    %49 = vector.extract_strided_slice %40 {offsets = [2, 8], sizes = [16, 64], strides = [1, 1]} : vector<18x72xf32> to vector<16x64xf32>
    %50 = tpu.concatenate %41, %42, %43, %44, %45, %46, %47, %48, %49 in 1 : vector<16x64xf32>, vector<16x64xf32>, vector<16x64xf32>, vector<16x64xf32>, vector<16x64xf32>, vector<16x64xf32>, vector<16x64xf32>, vector<16x64xf32>, vector<16x64xf32> -> vector<16x576xf32>
    %cst_14 = arith.constant 0.000000e+00 : f32
    %51 = vector.broadcast %cst_14 : f32 to vector<16x4xf32>
    %52 = tpu.concatenate %51, %7, %51 in 1 : vector<16x4xf32>, vector<16x64xf32>, vector<16x4xf32> -> vector<16x72xf32>
    %cst_15 = arith.constant 0.000000e+00 : f32
    %53 = vector.broadcast %cst_15 : f32 to vector<1x72xf32>
    %54 = tpu.concatenate %53, %52, %53 in 0 : vector<1x72xf32>, vector<16x72xf32>, vector<1x72xf32> -> vector<18x72xf32>
    %55 = vector.extract_strided_slice %54 {offsets = [0, 0], sizes = [16, 64], strides = [1, 1]} : vector<18x72xf32> to vector<16x64xf32>
    %56 = vector.extract_strided_slice %54 {offsets = [0, 4], sizes = [16, 64], strides = [1, 1]} : vector<18x72xf32> to vector<16x64xf32>
    %57 = vector.extract_strided_slice %54 {offsets = [0, 8], sizes = [16, 64], strides = [1, 1]} : vector<18x72xf32> to vector<16x64xf32>
    %58 = vector.extract_strided_slice %54 {offsets = [1, 0], sizes = [16, 64], strides = [1, 1]} : vector<18x72xf32> to vector<16x64xf32>
    %59 = vector.extract_strided_slice %54 {offsets = [1, 4], sizes = [16, 64], strides = [1, 1]} : vector<18x72xf32> to vector<16x64xf32>
    %60 = vector.extract_strided_slice %54 {offsets = [1, 8], sizes = [16, 64], strides = [1, 1]} : vector<18x72xf32> to vector<16x64xf32>
    %61 = vector.extract_strided_slice %54 {offsets = [2, 0], sizes = [16, 64], strides = [1, 1]} : vector<18x72xf32> to vector<16x64xf32>
    %62 = vector.extract_strided_slice %54 {offsets = [2, 4], sizes = [16, 64], strides = [1, 1]} : vector<18x72xf32> to vector<16x64xf32>
    %63 = vector.extract_strided_slice %54 {offsets = [2, 8], sizes = [16, 64], strides = [1, 1]} : vector<18x72xf32> to vector<16x64xf32>
    %64 = tpu.concatenate %55, %56, %57, %58, %59, %60, %61, %62, %63 in 1 : vector<16x64xf32>, vector<16x64xf32>, vector<16x64xf32>, vector<16x64xf32>, vector<16x64xf32>, vector<16x64xf32>, vector<16x64xf32>, vector<16x64xf32>, vector<16x64xf32> -> vector<16x576xf32>
    %65 = tpu.concatenate %36, %50, %64 in 0 : vector<16x576xf32>, vector<16x576xf32>, vector<16x576xf32> -> vector<48x576xf32>
    %66 = arith.truncf %65 : vector<48x576xf32> to vector<48x576xbf16>
    %cst_16 = arith.constant dense<0.000000e+00> : vector<48x128xf32>
    %67 = tpu.matmul %66, %21, %cst_16 {dimension_numbers = #tpu.dot_dimension_numbers<[1], [0], [0], [1], [0, 0, 1, 1], [], []>} : vector<48x576xbf16>, vector<576x128xbf16>, vector<48x128xf32> -> vector<48x128xf32>
    %68 = vector.extract_strided_slice %67 {offsets = [0, 0], sizes = [16, 128], strides = [1, 1]} : vector<48x128xf32> to vector<16x128xf32>
    %69 = vector.extract_strided_slice %67 {offsets = [16, 0], sizes = [16, 128], strides = [1, 1]} : vector<48x128xf32> to vector<16x128xf32>
    %70 = vector.extract_strided_slice %67 {offsets = [32, 0], sizes = [16, 128], strides = [1, 1]} : vector<48x128xf32> to vector<16x128xf32>
    %71 = arith.mulf %68, %68 : vector<16x128xf32>
    %72 = arith.mulf %69, %69 : vector<16x128xf32>
    %73 = arith.addf %71, %72 : vector<16x128xf32>
    %74 = math.sqrt %73 : vector<16x128xf32>
    %cst_17 = arith.constant 5.000000e-01 : f32
    %75 = vector.broadcast %cst_17 : f32 to vector<16x128xf32>
    %76 = arith.mulf %75, %74 : vector<16x128xf32>
    %cst_18 = arith.constant 5.000000e-01 : f32
    %77 = vector.broadcast %cst_18 : f32 to vector<16x128xf32>
    %78 = arith.mulf %77, %70 : vector<16x128xf32>
    %79 = arith.addf %76, %78 : vector<16x128xf32>
    %80 = vector.broadcast %22 : vector<1x128xf32> to vector<16x128xf32>
    %81 = arith.addf %79, %80 : vector<16x128xf32>
    %82 = tpu.concatenate %68, %69, %81 in 0 : vector<16x128xf32>, vector<16x128xf32>, vector<16x128xf32> -> vector<48x128xf32>
    %c0_19 = arith.constant 0 : index
    %c0_20 = arith.constant 0 : index
    %c0_21 = arith.constant 0 : index
    %83 = vector.load %arg5[%c0_19, %c0_20, %c0_21] : memref<1x48x128xf32, #tpu.memory_space<vmem>>, vector<1x48x128xf32>
    %84 = vector.shape_cast %83 : vector<1x48x128xf32> to vector<48x128xf32>
    %85 = vector.shape_cast %82 : vector<48x128xf32> to vector<1x48x128xf32>
    tpu.vector_store %arg5[%c0_19, %c0_20, %c0_21], %85 {strides = array<i32>} : memref<1x48x128xf32, #tpu.memory_space<vmem>>, vector<1x48x128xf32>,
    %cst_22 = arith.constant dense<0.000000e+00> : vector<128xf32>
    %86 = vector.multi_reduction <add>, %81, %cst_22 [0] : vector<16x128xf32> to vector<128xf32>
    %87 = vector.shape_cast %86 : vector<128xf32> to vector<1x128xf32>
    %88 = arith.mulf %81, %81 : vector<16x128xf32>
    %cst_23 = arith.constant dense<0.000000e+00> : vector<128xf32>
    %89 = vector.multi_reduction <add>, %88, %cst_23 [0] : vector<16x128xf32> to vector<128xf32>
    %90 = vector.shape_cast %89 : vector<128xf32> to vector<1x128xf32>
    %91 = tpu.concatenate %87, %90 in 0 : vector<1x128xf32>, vector<1x128xf32> -> vector<2x128xf32>
    %c0_24 = arith.constant 0 : index
    %c0_25 = arith.constant 0 : index
    %c0_26 = arith.constant 0 : index
    %92 = vector.load %arg6[%c0_24, %c0_25, %c0_26] : memref<1x2x128xf32, #tpu.memory_space<vmem>>, vector<1x2x128xf32>
    %93 = vector.shape_cast %92 : vector<1x2x128xf32> to vector<2x128xf32>
    %94 = vector.shape_cast %91 : vector<2x128xf32> to vector<1x2x128xf32>
    tpu.vector_store %arg6[%c0_24, %c0_25, %c0_26], %94 {strides = array<i32>} : memref<1x2x128xf32, #tpu.memory_space<vmem>>, vector<1x2x128xf32>,
    return
  }
  func.func @transform_0(%arg0: i32) -> (i32, i32, i32) {
    %c0_i32 = arith.constant 0 : i32
    %c0_i32_0 = arith.constant 0 : i32
    %c0_i32_1 = arith.constant 0 : i32
    return %arg0, %c0_i32, %c0_i32_0 : i32, i32, i32
  }
  func.func @transform_1(%arg0: i32) -> (i32, i32, i32) {
    %c0_i32 = arith.constant 0 : i32
    %c0_i32_0 = arith.constant 0 : i32
    %c0_i32_1 = arith.constant 0 : i32
    return %arg0, %c0_i32, %c0_i32_0 : i32, i32, i32
  }
  func.func @transform_2(%arg0: i32) -> (i32, i32) {
    %c0_i32 = arith.constant 0 : i32
    %c0_i32_0 = arith.constant 0 : i32
    %c0_i32_1 = arith.constant 0 : i32
    return %c0_i32, %c0_i32_0 : i32, i32
  }
  func.func @transform_3(%arg0: i32) -> (i32, i32) {
    %c0_i32 = arith.constant 0 : i32
    %c0_i32_0 = arith.constant 0 : i32
    %c0_i32_1 = arith.constant 0 : i32
    return %c0_i32, %c0_i32_0 : i32, i32
  }
  func.func @transform_4(%arg0: i32) -> (i32, i32, i32) {
    %c0_i32 = arith.constant 0 : i32
    %c0_i32_0 = arith.constant 0 : i32
    %c0_i32_1 = arith.constant 0 : i32
    return %arg0, %c0_i32, %c0_i32_0 : i32, i32, i32
  }
  func.func @transform_5(%arg0: i32) -> (i32, i32, i32) {
    %c0_i32 = arith.constant 0 : i32
    %c0_i32_0 = arith.constant 0 : i32
    %c0_i32_1 = arith.constant 0 : i32
    return %arg0, %c0_i32, %c0_i32_0 : i32, i32, i32
  }
}

module attributes {stable_mosaic.version = 11 : i64} {
  func.func @kernel(%arg0: i32, %arg1: memref<1x48x128xf32, #tpu.memory_space<vmem>>, %arg2: memref<1x128xf32, #tpu.memory_space<vmem>>, %arg3: memref<1x128xf32, #tpu.memory_space<vmem>>, %arg4: memref<1x128xf32, #tpu.memory_space<vmem>>, %arg5: memref<1x128xf32, #tpu.memory_space<vmem>>, %arg6: memref<1152x128xbf16, #tpu.memory_space<vmem>>, %arg7: memref<1x128xf32, #tpu.memory_space<vmem>>, %arg8: memref<1x48x128xf32, #tpu.memory_space<vmem>>, %arg9: memref<1x2x128xf32, #tpu.memory_space<vmem>>) attributes {dimension_semantics = [#tpu.dimension_semantics<parallel>], iteration_bounds = array<i64: 2>, scalar_prefetch = 0 : i64, scratch_operands = 0 : i64, tpu.core_type = #tpu.core_type<tc>, window_params = [{transform_indices = @transform_0, window_bounds = array<i64: 1, 48, 128>}, {pipeline_mode = #tpu.pipeline_mode<synchronous>, transform_indices = @transform_1, window_bounds = array<i64: 1, 128>}, {pipeline_mode = #tpu.pipeline_mode<synchronous>, transform_indices = @transform_2, window_bounds = array<i64: 1, 128>}, {pipeline_mode = #tpu.pipeline_mode<synchronous>, transform_indices = @transform_3, window_bounds = array<i64: 1, 128>}, {pipeline_mode = #tpu.pipeline_mode<synchronous>, transform_indices = @transform_4, window_bounds = array<i64: 1, 128>}, {pipeline_mode = #tpu.pipeline_mode<synchronous>, transform_indices = @transform_5, window_bounds = array<i64: 1152, 128>}, {pipeline_mode = #tpu.pipeline_mode<synchronous>, transform_indices = @transform_6, window_bounds = array<i64: 1, 128>}, {transform_indices = @transform_7, window_bounds = array<i64: 1, 48, 128>}, {transform_indices = @transform_8, window_bounds = array<i64: 1, 2, 128>}]} {
    %c0 = arith.constant 0 : index
    %c0_0 = arith.constant 0 : index
    %c0_1 = arith.constant 0 : index
    %0 = vector.load %arg1[%c0, %c0_0, %c0_1] : memref<1x48x128xf32, #tpu.memory_space<vmem>>, vector<1x48x128xf32>
    %1 = vector.shape_cast %0 : vector<1x48x128xf32> to vector<48x128xf32>
    %2 = vector.extract_strided_slice %1 {offsets = [0, 0], sizes = [16, 128], strides = [1, 1]} : vector<48x128xf32> to vector<16x128xf32>
    %3 = vector.extract_strided_slice %1 {offsets = [16, 0], sizes = [16, 128], strides = [1, 1]} : vector<48x128xf32> to vector<16x128xf32>
    %4 = vector.extract_strided_slice %1 {offsets = [32, 0], sizes = [16, 128], strides = [1, 1]} : vector<48x128xf32> to vector<16x128xf32>
    %c0_2 = arith.constant 0 : index
    %c0_3 = arith.constant 0 : index
    %5 = vector.load %arg2[%c0_2, %c0_3] : memref<1x128xf32, #tpu.memory_space<vmem>>, vector<1x128xf32>
    %c0_4 = arith.constant 0 : index
    %c0_5 = arith.constant 0 : index
    %6 = vector.load %arg3[%c0_4, %c0_5] : memref<1x128xf32, #tpu.memory_space<vmem>>, vector<1x128xf32>
    %c0_6 = arith.constant 0 : index
    %c0_7 = arith.constant 0 : index
    %7 = vector.load %arg4[%c0_6, %c0_7] : memref<1x128xf32, #tpu.memory_space<vmem>>, vector<1x128xf32>
    %c0_8 = arith.constant 0 : index
    %c0_9 = arith.constant 0 : index
    %8 = vector.load %arg5[%c0_8, %c0_9] : memref<1x128xf32, #tpu.memory_space<vmem>>, vector<1x128xf32>
    %9 = vector.broadcast %5 : vector<1x128xf32> to vector<16x128xf32>
    %10 = arith.mulf %4, %9 : vector<16x128xf32>
    %11 = vector.broadcast %6 : vector<1x128xf32> to vector<16x128xf32>
    %12 = arith.addf %10, %11 : vector<16x128xf32>
    %cst = arith.constant 0.000000e+00 : f32
    %13 = vector.broadcast %cst : f32 to vector<16x128xf32>
    %14 = arith.maximumf %12, %13 : vector<16x128xf32>
    %15 = math.absf %3 : vector<16x128xf32>
    %cst_10 = arith.constant 9.99999993E-9 : f32
    %16 = vector.broadcast %cst_10 : f32 to vector<16x128xf32>
    %17 = arith.cmpf olt, %15, %16 : vector<16x128xf32>
    %cst_11 = arith.constant 9.99999993E-9 : f32
    %18 = vector.broadcast %cst_11 : f32 to vector<16x128xf32>
    %19 = arith.select %17, %18, %3 : vector<16x128xi1>, vector<16x128xf32>
    %20 = arith.mulf %2, %2 : vector<16x128xf32>
    %21 = arith.mulf %19, %19 : vector<16x128xf32>
    %22 = arith.addf %20, %21 : vector<16x128xf32>
    %23 = math.rsqrt %22 : vector<16x128xf32>
    %24 = vector.broadcast %7 : vector<1x128xf32> to vector<16x128xf32>
    %25 = arith.mulf %2, %24 : vector<16x128xf32>
    %26 = vector.broadcast %8 : vector<1x128xf32> to vector<16x128xf32>
    %27 = arith.mulf %19, %26 : vector<16x128xf32>
    %28 = arith.subf %25, %27 : vector<16x128xf32>
    %29 = arith.mulf %14, %28 : vector<16x128xf32>
    %30 = arith.mulf %29, %23 : vector<16x128xf32>
    %31 = vector.broadcast %7 : vector<1x128xf32> to vector<16x128xf32>
    %32 = arith.mulf %19, %31 : vector<16x128xf32>
    %33 = vector.broadcast %8 : vector<1x128xf32> to vector<16x128xf32>
    %34 = arith.mulf %2, %33 : vector<16x128xf32>
    %35 = arith.addf %32, %34 : vector<16x128xf32>
    %36 = arith.mulf %14, %35 : vector<16x128xf32>
    %37 = arith.mulf %36, %23 : vector<16x128xf32>
    %c0_12 = arith.constant 0 : index
    %c0_13 = arith.constant 0 : index
    %38 = vector.load %arg6[%c0_12, %c0_13] : memref<1152x128xbf16, #tpu.memory_space<vmem>>, vector<1152x128xbf16>
    %c0_14 = arith.constant 0 : index
    %c0_15 = arith.constant 0 : index
    %39 = vector.load %arg7[%c0_14, %c0_15] : memref<1x128xf32, #tpu.memory_space<vmem>>, vector<1x128xf32>
    %cst_16 = arith.constant 0.000000e+00 : f32
    %40 = vector.broadcast %cst_16 : f32 to vector<16x8xf32>
    %41 = tpu.concatenate %40, %30, %40 in 1 : vector<16x8xf32>, vector<16x128xf32>, vector<16x8xf32> -> vector<16x144xf32>
    %cst_17 = arith.constant 0.000000e+00 : f32
    %42 = vector.broadcast %cst_17 : f32 to vector<1x144xf32>
    %43 = tpu.concatenate %42, %41, %42 in 0 : vector<1x144xf32>, vector<16x144xf32>, vector<1x144xf32> -> vector<18x144xf32>
    %44 = vector.extract_strided_slice %43 {offsets = [0, 0], sizes = [16, 128], strides = [1, 1]} : vector<18x144xf32> to vector<16x128xf32>
    %45 = vector.extract_strided_slice %43 {offsets = [0, 8], sizes = [16, 128], strides = [1, 1]} : vector<18x144xf32> to vector<16x128xf32>
    %46 = vector.extract_strided_slice %43 {offsets = [0, 16], sizes = [16, 128], strides = [1, 1]} : vector<18x144xf32> to vector<16x128xf32>
    %47 = vector.extract_strided_slice %43 {offsets = [1, 0], sizes = [16, 128], strides = [1, 1]} : vector<18x144xf32> to vector<16x128xf32>
    %48 = vector.extract_strided_slice %43 {offsets = [1, 8], sizes = [16, 128], strides = [1, 1]} : vector<18x144xf32> to vector<16x128xf32>
    %49 = vector.extract_strided_slice %43 {offsets = [1, 16], sizes = [16, 128], strides = [1, 1]} : vector<18x144xf32> to vector<16x128xf32>
    %50 = vector.extract_strided_slice %43 {offsets = [2, 0], sizes = [16, 128], strides = [1, 1]} : vector<18x144xf32> to vector<16x128xf32>
    %51 = vector.extract_strided_slice %43 {offsets = [2, 8], sizes = [16, 128], strides = [1, 1]} : vector<18x144xf32> to vector<16x128xf32>
    %52 = vector.extract_strided_slice %43 {offsets = [2, 16], sizes = [16, 128], strides = [1, 1]} : vector<18x144xf32> to vector<16x128xf32>
    %53 = tpu.concatenate %44, %45, %46, %47, %48, %49, %50, %51, %52 in 1 : vector<16x128xf32>, vector<16x128xf32>, vector<16x128xf32>, vector<16x128xf32>, vector<16x128xf32>, vector<16x128xf32>, vector<16x128xf32>, vector<16x128xf32>, vector<16x128xf32> -> vector<16x1152xf32>
    %cst_18 = arith.constant 0.000000e+00 : f32
    %54 = vector.broadcast %cst_18 : f32 to vector<16x8xf32>
    %55 = tpu.concatenate %54, %37, %54 in 1 : vector<16x8xf32>, vector<16x128xf32>, vector<16x8xf32> -> vector<16x144xf32>
    %cst_19 = arith.constant 0.000000e+00 : f32
    %56 = vector.broadcast %cst_19 : f32 to vector<1x144xf32>
    %57 = tpu.concatenate %56, %55, %56 in 0 : vector<1x144xf32>, vector<16x144xf32>, vector<1x144xf32> -> vector<18x144xf32>
    %58 = vector.extract_strided_slice %57 {offsets = [0, 0], sizes = [16, 128], strides = [1, 1]} : vector<18x144xf32> to vector<16x128xf32>
    %59 = vector.extract_strided_slice %57 {offsets = [0, 8], sizes = [16, 128], strides = [1, 1]} : vector<18x144xf32> to vector<16x128xf32>
    %60 = vector.extract_strided_slice %57 {offsets = [0, 16], sizes = [16, 128], strides = [1, 1]} : vector<18x144xf32> to vector<16x128xf32>
    %61 = vector.extract_strided_slice %57 {offsets = [1, 0], sizes = [16, 128], strides = [1, 1]} : vector<18x144xf32> to vector<16x128xf32>
    %62 = vector.extract_strided_slice %57 {offsets = [1, 8], sizes = [16, 128], strides = [1, 1]} : vector<18x144xf32> to vector<16x128xf32>
    %63 = vector.extract_strided_slice %57 {offsets = [1, 16], sizes = [16, 128], strides = [1, 1]} : vector<18x144xf32> to vector<16x128xf32>
    %64 = vector.extract_strided_slice %57 {offsets = [2, 0], sizes = [16, 128], strides = [1, 1]} : vector<18x144xf32> to vector<16x128xf32>
    %65 = vector.extract_strided_slice %57 {offsets = [2, 8], sizes = [16, 128], strides = [1, 1]} : vector<18x144xf32> to vector<16x128xf32>
    %66 = vector.extract_strided_slice %57 {offsets = [2, 16], sizes = [16, 128], strides = [1, 1]} : vector<18x144xf32> to vector<16x128xf32>
    %67 = tpu.concatenate %58, %59, %60, %61, %62, %63, %64, %65, %66 in 1 : vector<16x128xf32>, vector<16x128xf32>, vector<16x128xf32>, vector<16x128xf32>, vector<16x128xf32>, vector<16x128xf32>, vector<16x128xf32>, vector<16x128xf32>, vector<16x128xf32> -> vector<16x1152xf32>
    %cst_20 = arith.constant 0.000000e+00 : f32
    %68 = vector.broadcast %cst_20 : f32 to vector<16x8xf32>
    %69 = tpu.concatenate %68, %14, %68 in 1 : vector<16x8xf32>, vector<16x128xf32>, vector<16x8xf32> -> vector<16x144xf32>
    %cst_21 = arith.constant 0.000000e+00 : f32
    %70 = vector.broadcast %cst_21 : f32 to vector<1x144xf32>
    %71 = tpu.concatenate %70, %69, %70 in 0 : vector<1x144xf32>, vector<16x144xf32>, vector<1x144xf32> -> vector<18x144xf32>
    %72 = vector.extract_strided_slice %71 {offsets = [0, 0], sizes = [16, 128], strides = [1, 1]} : vector<18x144xf32> to vector<16x128xf32>
    %73 = vector.extract_strided_slice %71 {offsets = [0, 8], sizes = [16, 128], strides = [1, 1]} : vector<18x144xf32> to vector<16x128xf32>
    %74 = vector.extract_strided_slice %71 {offsets = [0, 16], sizes = [16, 128], strides = [1, 1]} : vector<18x144xf32> to vector<16x128xf32>
    %75 = vector.extract_strided_slice %71 {offsets = [1, 0], sizes = [16, 128], strides = [1, 1]} : vector<18x144xf32> to vector<16x128xf32>
    %76 = vector.extract_strided_slice %71 {offsets = [1, 8], sizes = [16, 128], strides = [1, 1]} : vector<18x144xf32> to vector<16x128xf32>
    %77 = vector.extract_strided_slice %71 {offsets = [1, 16], sizes = [16, 128], strides = [1, 1]} : vector<18x144xf32> to vector<16x128xf32>
    %78 = vector.extract_strided_slice %71 {offsets = [2, 0], sizes = [16, 128], strides = [1, 1]} : vector<18x144xf32> to vector<16x128xf32>
    %79 = vector.extract_strided_slice %71 {offsets = [2, 8], sizes = [16, 128], strides = [1, 1]} : vector<18x144xf32> to vector<16x128xf32>
    %80 = vector.extract_strided_slice %71 {offsets = [2, 16], sizes = [16, 128], strides = [1, 1]} : vector<18x144xf32> to vector<16x128xf32>
    %81 = tpu.concatenate %72, %73, %74, %75, %76, %77, %78, %79, %80 in 1 : vector<16x128xf32>, vector<16x128xf32>, vector<16x128xf32>, vector<16x128xf32>, vector<16x128xf32>, vector<16x128xf32>, vector<16x128xf32>, vector<16x128xf32>, vector<16x128xf32> -> vector<16x1152xf32>
    %82 = tpu.concatenate %53, %67, %81 in 0 : vector<16x1152xf32>, vector<16x1152xf32>, vector<16x1152xf32> -> vector<48x1152xf32>
    %83 = arith.truncf %82 : vector<48x1152xf32> to vector<48x1152xbf16>
    %cst_22 = arith.constant dense<0.000000e+00> : vector<48x128xf32>
    %84 = tpu.matmul %83, %38, %cst_22 {dimension_numbers = #tpu.dot_dimension_numbers<[1], [0], [0], [1], [0, 0, 1, 1], [], []>} : vector<48x1152xbf16>, vector<1152x128xbf16>, vector<48x128xf32> -> vector<48x128xf32>
    %85 = vector.extract_strided_slice %84 {offsets = [0, 0], sizes = [16, 128], strides = [1, 1]} : vector<48x128xf32> to vector<16x128xf32>
    %86 = vector.extract_strided_slice %84 {offsets = [16, 0], sizes = [16, 128], strides = [1, 1]} : vector<48x128xf32> to vector<16x128xf32>
    %87 = vector.extract_strided_slice %84 {offsets = [32, 0], sizes = [16, 128], strides = [1, 1]} : vector<48x128xf32> to vector<16x128xf32>
    %88 = arith.mulf %85, %85 : vector<16x128xf32>
    %89 = arith.mulf %86, %86 : vector<16x128xf32>
    %90 = arith.addf %88, %89 : vector<16x128xf32>
    %91 = math.sqrt %90 : vector<16x128xf32>
    %cst_23 = arith.constant 5.000000e-01 : f32
    %92 = vector.broadcast %cst_23 : f32 to vector<16x128xf32>
    %93 = arith.mulf %92, %91 : vector<16x128xf32>
    %cst_24 = arith.constant 5.000000e-01 : f32
    %94 = vector.broadcast %cst_24 : f32 to vector<16x128xf32>
    %95 = arith.mulf %94, %87 : vector<16x128xf32>
    %96 = arith.addf %93, %95 : vector<16x128xf32>
    %97 = vector.broadcast %39 : vector<1x128xf32> to vector<16x128xf32>
    %98 = arith.addf %96, %97 : vector<16x128xf32>
    %99 = tpu.concatenate %85, %86, %98 in 0 : vector<16x128xf32>, vector<16x128xf32>, vector<16x128xf32> -> vector<48x128xf32>
    %c0_25 = arith.constant 0 : index
    %c0_26 = arith.constant 0 : index
    %c0_27 = arith.constant 0 : index
    %100 = vector.load %arg8[%c0_25, %c0_26, %c0_27] : memref<1x48x128xf32, #tpu.memory_space<vmem>>, vector<1x48x128xf32>
    %101 = vector.shape_cast %100 : vector<1x48x128xf32> to vector<48x128xf32>
    %102 = vector.shape_cast %99 : vector<48x128xf32> to vector<1x48x128xf32>
    tpu.vector_store %arg8[%c0_25, %c0_26, %c0_27], %102 {strides = array<i32>} : memref<1x48x128xf32, #tpu.memory_space<vmem>>, vector<1x48x128xf32>,
    %cst_28 = arith.constant dense<0.000000e+00> : vector<128xf32>
    %103 = vector.multi_reduction <add>, %98, %cst_28 [0] : vector<16x128xf32> to vector<128xf32>
    %104 = vector.shape_cast %103 : vector<128xf32> to vector<1x128xf32>
    %105 = arith.mulf %98, %98 : vector<16x128xf32>
    %cst_29 = arith.constant dense<0.000000e+00> : vector<128xf32>
    %106 = vector.multi_reduction <add>, %105, %cst_29 [0] : vector<16x128xf32> to vector<128xf32>
    %107 = vector.shape_cast %106 : vector<128xf32> to vector<1x128xf32>
    %108 = tpu.concatenate %104, %107 in 0 : vector<1x128xf32>, vector<1x128xf32> -> vector<2x128xf32>
    %c0_30 = arith.constant 0 : index
    %c0_31 = arith.constant 0 : index
    %c0_32 = arith.constant 0 : index
    %109 = vector.load %arg9[%c0_30, %c0_31, %c0_32] : memref<1x2x128xf32, #tpu.memory_space<vmem>>, vector<1x2x128xf32>
    %110 = vector.shape_cast %109 : vector<1x2x128xf32> to vector<2x128xf32>
    %111 = vector.shape_cast %108 : vector<2x128xf32> to vector<1x2x128xf32>
    tpu.vector_store %arg9[%c0_30, %c0_31, %c0_32], %111 {strides = array<i32>} : memref<1x2x128xf32, #tpu.memory_space<vmem>>, vector<1x2x128xf32>,
    return
  }
  func.func @transform_0(%arg0: i32) -> (i32, i32, i32) {
    %c0_i32 = arith.constant 0 : i32
    %c0_i32_0 = arith.constant 0 : i32
    %c0_i32_1 = arith.constant 0 : i32
    return %arg0, %c0_i32, %c0_i32_0 : i32, i32, i32
  }
  func.func @transform_1(%arg0: i32) -> (i32, i32) {
    %c0_i32 = arith.constant 0 : i32
    %c0_i32_0 = arith.constant 0 : i32
    %c0_i32_1 = arith.constant 0 : i32
    return %c0_i32, %c0_i32_0 : i32, i32
  }
  func.func @transform_2(%arg0: i32) -> (i32, i32) {
    %c0_i32 = arith.constant 0 : i32
    %c0_i32_0 = arith.constant 0 : i32
    %c0_i32_1 = arith.constant 0 : i32
    return %c0_i32, %c0_i32_0 : i32, i32
  }
  func.func @transform_3(%arg0: i32) -> (i32, i32) {
    %c0_i32 = arith.constant 0 : i32
    %c0_i32_0 = arith.constant 0 : i32
    %c0_i32_1 = arith.constant 0 : i32
    return %c0_i32, %c0_i32_0 : i32, i32
  }
  func.func @transform_4(%arg0: i32) -> (i32, i32) {
    %c0_i32 = arith.constant 0 : i32
    %c0_i32_0 = arith.constant 0 : i32
    %c0_i32_1 = arith.constant 0 : i32
    return %c0_i32, %c0_i32_0 : i32, i32
  }
  func.func @transform_5(%arg0: i32) -> (i32, i32) {
    %c0_i32 = arith.constant 0 : i32
    %c0_i32_0 = arith.constant 0 : i32
    %c0_i32_1 = arith.constant 0 : i32
    return %c0_i32, %c0_i32_0 : i32, i32
  }
  func.func @transform_6(%arg0: i32) -> (i32, i32) {
    %c0_i32 = arith.constant 0 : i32
    %c0_i32_0 = arith.constant 0 : i32
    %c0_i32_1 = arith.constant 0 : i32
    return %c0_i32, %c0_i32_0 : i32, i32
  }
  func.func @transform_7(%arg0: i32) -> (i32, i32, i32) {
    %c0_i32 = arith.constant 0 : i32
    %c0_i32_0 = arith.constant 0 : i32
    %c0_i32_1 = arith.constant 0 : i32
    return %arg0, %c0_i32, %c0_i32_0 : i32, i32, i32
  }
  func.func @transform_8(%arg0: i32) -> (i32, i32, i32) {
    %c0_i32 = arith.constant 0 : i32
    %c0_i32_0 = arith.constant 0 : i32
    %c0_i32_1 = arith.constant 0 : i32
    return %arg0, %c0_i32, %c0_i32_0 : i32, i32, i32
  }
}

module attributes {stable_mosaic.version = 11 : i64} {
  func.func @kernel(%arg0: i32, %arg1: memref<1x48x128xf32, #tpu.memory_space<vmem>>, %arg2: memref<1x128xf32, #tpu.memory_space<vmem>>, %arg3: memref<1x128xf32, #tpu.memory_space<vmem>>, %arg4: memref<1x128xf32, #tpu.memory_space<vmem>>, %arg5: memref<1x128xf32, #tpu.memory_space<vmem>>, %arg6: memref<1x32x128xf32, #tpu.memory_space<vmem>>) attributes {dimension_semantics = [#tpu.dimension_semantics<parallel>], iteration_bounds = array<i64: 2>, scalar_prefetch = 0 : i64, scratch_operands = 0 : i64, tpu.core_type = #tpu.core_type<tc>, window_params = [{transform_indices = @transform_0, window_bounds = array<i64: 1, 48, 128>}, {pipeline_mode = #tpu.pipeline_mode<synchronous>, transform_indices = @transform_1, window_bounds = array<i64: 1, 128>}, {pipeline_mode = #tpu.pipeline_mode<synchronous>, transform_indices = @transform_2, window_bounds = array<i64: 1, 128>}, {pipeline_mode = #tpu.pipeline_mode<synchronous>, transform_indices = @transform_3, window_bounds = array<i64: 1, 128>}, {pipeline_mode = #tpu.pipeline_mode<synchronous>, transform_indices = @transform_4, window_bounds = array<i64: 1, 128>}, {transform_indices = @transform_5, window_bounds = array<i64: 1, 32, 128>}]} {
    %c0 = arith.constant 0 : index
    %c0_0 = arith.constant 0 : index
    %c0_1 = arith.constant 0 : index
    %0 = vector.load %arg1[%c0, %c0_0, %c0_1] : memref<1x48x128xf32, #tpu.memory_space<vmem>>, vector<1x48x128xf32>
    %1 = vector.shape_cast %0 : vector<1x48x128xf32> to vector<48x128xf32>
    %2 = vector.extract_strided_slice %1 {offsets = [0, 0], sizes = [16, 128], strides = [1, 1]} : vector<48x128xf32> to vector<16x128xf32>
    %3 = vector.extract_strided_slice %1 {offsets = [16, 0], sizes = [16, 128], strides = [1, 1]} : vector<48x128xf32> to vector<16x128xf32>
    %4 = vector.extract_strided_slice %1 {offsets = [32, 0], sizes = [16, 128], strides = [1, 1]} : vector<48x128xf32> to vector<16x128xf32>
    %c0_2 = arith.constant 0 : index
    %c0_3 = arith.constant 0 : index
    %5 = vector.load %arg2[%c0_2, %c0_3] : memref<1x128xf32, #tpu.memory_space<vmem>>, vector<1x128xf32>
    %c0_4 = arith.constant 0 : index
    %c0_5 = arith.constant 0 : index
    %6 = vector.load %arg3[%c0_4, %c0_5] : memref<1x128xf32, #tpu.memory_space<vmem>>, vector<1x128xf32>
    %c0_6 = arith.constant 0 : index
    %c0_7 = arith.constant 0 : index
    %7 = vector.load %arg4[%c0_6, %c0_7] : memref<1x128xf32, #tpu.memory_space<vmem>>, vector<1x128xf32>
    %c0_8 = arith.constant 0 : index
    %c0_9 = arith.constant 0 : index
    %8 = vector.load %arg5[%c0_8, %c0_9] : memref<1x128xf32, #tpu.memory_space<vmem>>, vector<1x128xf32>
    %9 = vector.broadcast %5 : vector<1x128xf32> to vector<16x128xf32>
    %10 = arith.mulf %4, %9 : vector<16x128xf32>
    %11 = vector.broadcast %6 : vector<1x128xf32> to vector<16x128xf32>
    %12 = arith.addf %10, %11 : vector<16x128xf32>
    %cst = arith.constant 0.000000e+00 : f32
    %13 = vector.broadcast %cst : f32 to vector<16x128xf32>
    %14 = arith.maximumf %12, %13 : vector<16x128xf32>
    %15 = math.absf %3 : vector<16x128xf32>
    %cst_10 = arith.constant 9.99999993E-9 : f32
    %16 = vector.broadcast %cst_10 : f32 to vector<16x128xf32>
    %17 = arith.cmpf olt, %15, %16 : vector<16x128xf32>
    %cst_11 = arith.constant 9.99999993E-9 : f32
    %18 = vector.broadcast %cst_11 : f32 to vector<16x128xf32>
    %19 = arith.select %17, %18, %3 : vector<16x128xi1>, vector<16x128xf32>
    %20 = arith.mulf %2, %2 : vector<16x128xf32>
    %21 = arith.mulf %19, %19 : vector<16x128xf32>
    %22 = arith.addf %20, %21 : vector<16x128xf32>
    %23 = math.rsqrt %22 : vector<16x128xf32>
    %24 = vector.broadcast %7 : vector<1x128xf32> to vector<16x128xf32>
    %25 = arith.mulf %2, %24 : vector<16x128xf32>
    %26 = vector.broadcast %8 : vector<1x128xf32> to vector<16x128xf32>
    %27 = arith.mulf %19, %26 : vector<16x128xf32>
    %28 = arith.subf %25, %27 : vector<16x128xf32>
    %29 = arith.mulf %14, %28 : vector<16x128xf32>
    %30 = arith.mulf %29, %23 : vector<16x128xf32>
    %31 = vector.broadcast %7 : vector<1x128xf32> to vector<16x128xf32>
    %32 = arith.mulf %19, %31 : vector<16x128xf32>
    %33 = vector.broadcast %8 : vector<1x128xf32> to vector<16x128xf32>
    %34 = arith.mulf %2, %33 : vector<16x128xf32>
    %35 = arith.addf %32, %34 : vector<16x128xf32>
    %36 = arith.mulf %14, %35 : vector<16x128xf32>
    %37 = arith.mulf %36, %23 : vector<16x128xf32>
    %38 = tpu.concatenate %30, %37 in 0 : vector<16x128xf32>, vector<16x128xf32> -> vector<32x128xf32>
    %c0_12 = arith.constant 0 : index
    %c0_13 = arith.constant 0 : index
    %c0_14 = arith.constant 0 : index
    %39 = vector.load %arg6[%c0_12, %c0_13, %c0_14] : memref<1x32x128xf32, #tpu.memory_space<vmem>>, vector<1x32x128xf32>
    %40 = vector.shape_cast %39 : vector<1x32x128xf32> to vector<32x128xf32>
    %41 = vector.shape_cast %38 : vector<32x128xf32> to vector<1x32x128xf32>
    tpu.vector_store %arg6[%c0_12, %c0_13, %c0_14], %41 {strides = array<i32>} : memref<1x32x128xf32, #tpu.memory_space<vmem>>, vector<1x32x128xf32>,
    return
  }
  func.func @transform_0(%arg0: i32) -> (i32, i32, i32) {
    %c0_i32 = arith.constant 0 : i32
    %c0_i32_0 = arith.constant 0 : i32
    %c0_i32_1 = arith.constant 0 : i32
    return %arg0, %c0_i32, %c0_i32_0 : i32, i32, i32
  }
  func.func @transform_1(%arg0: i32) -> (i32, i32) {
    %c0_i32 = arith.constant 0 : i32
    %c0_i32_0 = arith.constant 0 : i32
    %c0_i32_1 = arith.constant 0 : i32
    return %c0_i32, %c0_i32_0 : i32, i32
  }
  func.func @transform_2(%arg0: i32) -> (i32, i32) {
    %c0_i32 = arith.constant 0 : i32
    %c0_i32_0 = arith.constant 0 : i32
    %c0_i32_1 = arith.constant 0 : i32
    return %c0_i32, %c0_i32_0 : i32, i32
  }
  func.func @transform_3(%arg0: i32) -> (i32, i32) {
    %c0_i32 = arith.constant 0 : i32
    %c0_i32_0 = arith.constant 0 : i32
    %c0_i32_1 = arith.constant 0 : i32
    return %c0_i32, %c0_i32_0 : i32, i32
  }
  func.func @transform_4(%arg0: i32) -> (i32, i32) {
    %c0_i32 = arith.constant 0 : i32
    %c0_i32_0 = arith.constant 0 : i32
    %c0_i32_1 = arith.constant 0 : i32
    return %c0_i32, %c0_i32_0 : i32, i32
  }
  func.func @transform_5(%arg0: i32) -> (i32, i32, i32) {
    %c0_i32 = arith.constant 0 : i32
    %c0_i32_0 = arith.constant 0 : i32
    %c0_i32_1 = arith.constant 0 : i32
    return %arg0, %c0_i32, %c0_i32_0 : i32, i32, i32
  }
}

</mosaic_0001>

<llo_original>
// kernel: custom-call
$region0: #{custom-call}
  %s0 = inlined_call_operand.vmem [shape: c64[2,4,8,8], index: 0, kind: input, shape index: {}]
  %s1 = inlined_call_operand.vmem [shape: f32[2,4,8,8], index: 1, kind: output, shape index: {}]
  %v2 = vld [vmem:[%s0] sm:$0xff]
  %3 = vst [vmem:[%s1] sm:$0xff] %v2
  %s4 = scalar_lea.vmem %s1, 8
  %s5 = scalar_lea.vmem %s0, 8
  %v6 = vld [vmem:[%s5] sm:$0xff]
  %7 = vst [vmem:[%s4] sm:$0xff] %v6
  %s8 = scalar_lea.vmem %s1, 16
  %s9 = scalar_lea.vmem %s0, 16
  %v10 = vld [vmem:[%s9] sm:$0xff]
  %11 = vst [vmem:[%s8] sm:$0xff] %v10
  %s12 = scalar_lea.vmem %s1, 24
  %s13 = scalar_lea.vmem %s0, 24
  %v14 = vld [vmem:[%s13] sm:$0xff]
  %15 = vst [vmem:[%s12] sm:$0xff] %v14
  %s16 = scalar_lea.vmem %s1, 32
  %s17 = scalar_lea.vmem %s0, 32
  %v18 = vld [vmem:[%s17] sm:$0xff]
  %19 = vst [vmem:[%s16] sm:$0xff] %v18
  %s20 = scalar_lea.vmem %s1, 40
  %s21 = scalar_lea.vmem %s0, 40
  %v22 = vld [vmem:[%s21] sm:$0xff]
  %23 = vst [vmem:[%s20] sm:$0xff] %v22
  %s24 = scalar_lea.vmem %s1, 48
  %s25 = scalar_lea.vmem %s0, 48
  %v26 = vld [vmem:[%s25] sm:$0xff]
  %27 = vst [vmem:[%s24] sm:$0xff] %v26
  %s28 = scalar_lea.vmem %s1, 56
  %s29 = scalar_lea.vmem %s0, 56
  %v30 = vld [vmem:[%s29] sm:$0xff]
  %31 = vst [vmem:[%s28] sm:$0xff] %v30

// kernel: custom-call.1
$region0: #{custom-call.1}
  %s0 = inlined_call_operand.vmem [shape: c64[2,4,8,8], index: 0, kind: input, shape index: {}]
  %s1 = inlined_call_operand.vmem [shape: f32[2,4,8,8], index: 1, kind: output, shape index: {}]
  %s2 = scalar_lea.vmem %s0, 64
  %v3 = vld [vmem:[%s2] sm:$0xff]
  %4 = vst [vmem:[%s1] sm:$0xff] %v3
  %s5 = scalar_lea.vmem %s1, 8
  %s6 = scalar_lea.vmem %s2, 8
  %v7 = vld [vmem:[%s6] sm:$0xff]
  %8 = vst [vmem:[%s5] sm:$0xff] %v7
  %s9 = scalar_lea.vmem %s1, 16
  %s10 = scalar_lea.vmem %s2, 16
  %v11 = vld [vmem:[%s10] sm:$0xff]
  %12 = vst [vmem:[%s9] sm:$0xff] %v11
  %s13 = scalar_lea.vmem %s1, 24
  %s14 = scalar_lea.vmem %s2, 24
  %v15 = vld [vmem:[%s14] sm:$0xff]
  %16 = vst [vmem:[%s13] sm:$0xff] %v15
  %s17 = scalar_lea.vmem %s1, 32
  %s18 = scalar_lea.vmem %s2, 32
  %v19 = vld [vmem:[%s18] sm:$0xff]
  %20 = vst [vmem:[%s17] sm:$0xff] %v19
  %s21 = scalar_lea.vmem %s1, 40
  %s22 = scalar_lea.vmem %s2, 40
  %v23 = vld [vmem:[%s22] sm:$0xff]
  %24 = vst [vmem:[%s21] sm:$0xff] %v23
  %s25 = scalar_lea.vmem %s1, 48
  %s26 = scalar_lea.vmem %s2, 48
  %v27 = vld [vmem:[%s26] sm:$0xff]
  %28 = vst [vmem:[%s25] sm:$0xff] %v27
  %s29 = scalar_lea.vmem %s1, 56
  %s30 = scalar_lea.vmem %s2, 56
  %v31 = vld [vmem:[%s30] sm:$0xff]
  %32 = vst [vmem:[%s29] sm:$0xff] %v31

// kernel: tile.53
$region0: #{tile.53}
  #allocation0 [shape = 's32[1]{0}', space=sflag, size = 0x4, scoped, tag = 'scoped memory for tile.53']
  %s0 = inlined_call_operand.vmem [shape: f32[8], index: 0, kind: input, shape index: {}]
  %s1 = inlined_call_operand.vmem [shape: f32[16,8], index: 1, kind: output, shape index: {}]
  // Predicated region
  $region2: #{tile.53} parent=0 // pred_check
    _
  $region3: #{tile.53} parent=0 // pred_check_branch
    %3 = sbr.rel (0) target = $region5
  $region4: #{tile.53} parent=0 // pred_region
    _
  $region5: #{tile.53} parent=0 // pred_fallthru
    _
  %v4 = vld [vmem:[%s0] ss:$0 sm:$0xff]
  %5 = vst [vmem:[%s1] sm:$0xff] %v4
  %s6 = scalar_lea.vmem %s1, 8
  %7 = vst [vmem:[%s6] sm:$0xff] %v4

// kernel: tile.54
$region0: #{tile.54}
  %s0 = inlined_call_operand.vmem [shape: f32[16,8], index: 0, kind: input, shape index: {}]
  %s1 = inlined_call_operand.vmem [shape: f32[1,128], index: 1, kind: output, shape index: {}]
  $region1: #{tile.54} parent=0
    #allocation0 [shape = 'u8[4096]{0}', space=vmem, size = 0x1000, scoped, tag = 'scoped mem for output reshape']
    %v2 = vld [vmem:[%s0] sm:$0x1]
    %vm3 = vcmask 64512
    %4 = vst.msk [vmem:[#allocation0] sm:$0x1] %vm3, %v2
    %s5 = scalar_lea.vmem %s0, 15
    %v6 = vld [vmem:[%s5] sm:$0x1]
    %7 = vrot.lane.b32.xlu0 %v6, 120
    %v8 = vpop.permute.xlu0 %7
    %vm9 = vcmask 1048512
    %10 = vst.msk [vmem:[#allocation0] sm:$0x1] %vm9, %v8
    %s11 = scalar_lea.vmem %s0, 14
    %v12 = vld [vmem:[%s11] sm:$0x1]
    %13 = vrot.lane.b32.xlu0 %v12, 112
    %v14 = vpop.permute.xlu0 %13
    %vm15 = vcmask 982912
    %16 = vst.msk [vmem:[#allocation0] sm:$0x1] %vm15, %v14
    %s17 = scalar_lea.vmem %s0, 13
    %v18 = vld [vmem:[%s17] sm:$0x1]
    %19 = vrot.lane.b32.xlu0 %v18, 104
    %v20 = vpop.permute.xlu0 %19
    %vm21 = vcmask 917312
    %22 = vst.msk [vmem:[#allocation0] sm:$0x1] %vm21, %v20
    %s23 = scalar_lea.vmem %s0, 12
    %v24 = vld [vmem:[%s23] sm:$0x1]
    %25 = vrot.lane.b32.xlu0 %v24, 96
    %v26 = vpop.permute.xlu0 %25
    %vm27 = vcmask 851712
    %28 = vst.msk [vmem:[#allocation0] sm:$0x1] %vm27, %v26
    %s29 = scalar_lea.vmem %s0, 11
    %v30 = vld [vmem:[%s29] sm:$0x1]
    %31 = vrot.lane.b32.xlu0 %v30, 88
    %v32 = vpop.permute.xlu0 %31
    %vm33 = vcmask 786112
    %34 = vst.msk [vmem:[#allocation0] sm:$0x1] %vm33, %v32
    %s35 = scalar_lea.vmem %s0, 10
    %v36 = vld [vmem:[%s35] sm:$0x1]
    %37 = vrot.lane.b32.xlu0 %v36, 80
    %v38 = vpop.permute.xlu0 %37
    %vm39 = vcmask 720512
    %40 = vst.msk [vmem:[#allocation0] sm:$0x1] %vm39, %v38
    %s41 = scalar_lea.vmem %s0, 9
    %v42 = vld [vmem:[%s41] sm:$0x1]
    %43 = vrot.lane.b32.xlu0 %v42, 72
    %v44 = vpop.permute.xlu0 %43
    %vm45 = vcmask 654912
    %46 = vst.msk [vmem:[#allocation0] sm:$0x1] %vm45, %v44
    %s47 = scalar_lea.vmem %s0, 8
    %v48 = vld [vmem:[%s47] sm:$0x1]
    %49 = vrot.lane.b32.xlu0 %v48, 64
    %v50 = vpop.permute.xlu0 %49
    %vm51 = vcmask 589312
    %52 = vst.msk [vmem:[#allocation0] sm:$0x1] %vm51, %v50
    %s53 = scalar_lea.vmem %s0, 7
    %v54 = vld [vmem:[%s53] sm:$0x1]
    %55 = vrot.lane.b32.xlu0 %v54, 56
    %v56 = vpop.permute.xlu0 %55
    %vm57 = vcmask 523712
    %58 = vst.msk [vmem:[#allocation0] sm:$0x1] %vm57, %v56
    %s59 = scalar_lea.vmem %s0, 6
    %v60 = vld [vmem:[%s59] sm:$0x1]
    %61 = vrot.lane.b32.xlu0 %v60, 48
    %v62 = vpop.permute.xlu0 %61
    %vm63 = vcmask 458112
    %64 = vst.msk [vmem:[#allocation0] sm:$0x1] %vm63, %v62
    %s65 = scalar_lea.vmem %s0, 5
    %v66 = vld [vmem:[%s65] sm:$0x1]
    %67 = vrot.lane.b32.xlu0 %v66, 40
    %v68 = vpop.permute.xlu0 %67
    %vm69 = vcmask 392512
    %70 = vst.msk [vmem:[#allocation0] sm:$0x1] %vm69, %v68
    %s71 = scalar_lea.vmem %s0, 4
    %v72 = vld [vmem:[%s71] sm:$0x1]
    %73 = vrot.lane.b32.xlu0 %v72, 32
    %v74 = vpop.permute.xlu0 %73
    %vm75 = vcmask 326912
    %76 = vst.msk [vmem:[#allocation0] sm:$0x1] %vm75, %v74
    %s77 = scalar_lea.vmem %s0, 3
    %v78 = vld [vmem:[%s77] sm:$0x1]
    %79 = vrot.lane.b32.xlu0 %v78, 24
    %v80 = vpop.permute.xlu0 %79
    %vm81 = vcmask 261312
    %82 = vst.msk [vmem:[#allocation0] sm:$0x1] %vm81, %v80
    %s83 = scalar_lea.vmem %s0, 2
    %v84 = vld [vmem:[%s83] sm:$0x1]
    %85 = vrot.lane.b32.xlu0 %v84, 16
    %v86 = vpop.permute.xlu0 %85
    %vm87 = vcmask 195712
    %88 = vst.msk [vmem:[#allocation0] sm:$0x1] %vm87, %v86
    %s89 = scalar_lea.vmem %s0, 1
    %v90 = vld [vmem:[%s89] sm:$0x1]
    %91 = vrot.lane.b32.xlu0 %v90, 8
    %v92 = vpop.permute.xlu0 %91
    %vm93 = vcmask 130112
    %94 = vst.msk [vmem:[#allocation0] sm:$0x1] %vm93, %v92
    %s96 = ssub.s32 2, 1
    %v97 = vld [vmem:[#allocation0] sm:%s96]
    %s99 = ssub.s32 2, 1
    %100 = vst [vmem:[%s1] sm:%s99] %v97

// kernel: custom-call.2
$region0: #{custom-call.2}
  %s0 = inlined_call_operand.vmem [shape: f32[2,8,16,16], index: 0, kind: input, shape index: {}]
  %s1 = inlined_call_operand.vmem [shape: f32[2,8,16,16], index: 1, kind: input, shape index: {}]
  %s2 = inlined_call_operand.vmem [shape: c64[2,8,16,16], index: 2, kind: output, shape index: {}]
  %s3 = scalar_lea.vmem %s2, 256
  %v4 = vld [vmem:[%s0] sm:$0xff]
  %5 = vst [vmem:[%s2] sm:$0xff] %v4
  %s6 = scalar_lea.vmem %s2, 8
  %s7 = scalar_lea.vmem %s0, 8
  %v8 = vld [vmem:[%s7] sm:$0xff]
  %9 = vst [vmem:[%s6] sm:$0xff] %v8
  %s10 = scalar_lea.vmem %s2, 16
  %s11 = scalar_lea.vmem %s0, 16
  %v12 = vld [vmem:[%s11] sm:$0xff]
  %13 = vst [vmem:[%s10] sm:$0xff] %v12
  %s14 = scalar_lea.vmem %s2, 24
  %s15 = scalar_lea.vmem %s0, 24
  %v16 = vld [vmem:[%s15] sm:$0xff]
  %17 = vst [vmem:[%s14] sm:$0xff] %v16
  %s18 = scalar_lea.vmem %s2, 32
  %s19 = scalar_lea.vmem %s0, 32
  %v20 = vld [vmem:[%s19] sm:$0xff]
  %21 = vst [vmem:[%s18] sm:$0xff] %v20
  %s22 = scalar_lea.vmem %s2, 40
  %s23 = scalar_lea.vmem %s0, 40
  %v24 = vld [vmem:[%s23] sm:$0xff]
  %25 = vst [vmem:[%s22] sm:$0xff] %v24
  %s26 = scalar_lea.vmem %s2, 48
  %s27 = scalar_lea.vmem %s0, 48
  %v28 = vld [vmem:[%s27] sm:$0xff]
  %29 = vst [vmem:[%s26] sm:$0xff] %v28
  %s30 = scalar_lea.vmem %s2, 56
  %s31 = scalar_lea.vmem %s0, 56
  %v32 = vld [vmem:[%s31] sm:$0xff]
  %33 = vst [vmem:[%s30] sm:$0xff] %v32
  %s34 = scalar_lea.vmem %s2, 64
  %s35 = scalar_lea.vmem %s0, 64
  %v36 = vld [vmem:[%s35] sm:$0xff]
  %37 = vst [vmem:[%s34] sm:$0xff] %v36
  %s38 = scalar_lea.vmem %s2, 72
  %s39 = scalar_lea.vmem %s0, 72
  %v40 = vld [vmem:[%s39] sm:$0xff]
  %41 = vst [vmem:[%s38] sm:$0xff] %v40
  %s42 = scalar_lea.vmem %s2, 80
  %s43 = scalar_lea.vmem %s0, 80
  %v44 = vld [vmem:[%s43] sm:$0xff]
  %45 = vst [vmem:[%s42] sm:$0xff] %v44
  %s46 = scalar_lea.vmem %s2, 88
  %s47 = scalar_lea.vmem %s0, 88
  %v48 = vld [vmem:[%s47] sm:$0xff]
  %49 = vst [vmem:[%s46] sm:$0xff] %v48
  %s50 = scalar_lea.vmem %s2, 96
  %s51 = scalar_lea.vmem %s0, 96
  %v52 = vld [vmem:[%s51] sm:$0xff]
  %53 = vst [vmem:[%s50] sm:$0xff] %v52
  %s54 = scalar_lea.vmem %s2, 104
  %s55 = scalar_lea.vmem %s0, 104
  %v56 = vld [vmem:[%s55] sm:$0xff]
  %57 = vst [vmem:[%s54] sm:$0xff] %v56
  %s58 = scalar_lea.vmem %s2, 112
  %s59 = scalar_lea.vmem %s0, 112
  %v60 = vld [vmem:[%s59] sm:$0xff]
  %61 = vst [vmem:[%s58] sm:$0xff] %v60
  %s62 = scalar_lea.vmem %s2, 120
  %s63 = scalar_lea.vmem %s0, 120
  %v64 = vld [vmem:[%s63] sm:$0xff]
  %65 = vst [vmem:[%s62] sm:$0xff] %v64
  %s66 = scalar_lea.vmem %s2, 128
  %s67 = scalar_lea.vmem %s0, 128
  %v68 = vld [vmem:[%s67] sm:$0xff]
  %69 = vst [vmem:[%s66] sm:$0xff] %v68
  %s70 = scalar_lea.vmem %s2, 136
  %s71 = scalar_lea.vmem %s0, 136
  %v72 = vld [vmem:[%s71] sm:$0xff]
  %73 = vst [vmem:[%s70] sm:$0xff] %v72
  %s74 = scalar_lea.vmem %s2, 144
  %s75 = scalar_lea.vmem %s0, 144
  %v76 = vld [vmem:[%s75] sm:$0xff]
  %77 = vst [vmem:[%s74] sm:$0xff] %v76
  %s78 = scalar_lea.vmem %s2, 152
  %s79 = scalar_lea.vmem %s0, 152
  %v80 = vld [vmem:[%s79] sm:$0xff]
  %81 = vst [vmem:[%s78] sm:$0xff] %v80
  %s82 = scalar_lea.vmem %s2, 160
  %s83 = scalar_lea.vmem %s0, 160
  %v84 = vld [vmem:[%s83] sm:$0xff]
  %85 = vst [vmem:[%s82] sm:$0xff] %v84
  %s86 = scalar_lea.vmem %s2, 168
  %s87 = scalar_lea.vmem %s0, 168
  %v88 = vld [vmem:[%s87] sm:$0xff]
  %89 = vst [vmem:[%s86] sm:$0xff] %v88
  %s90 = scalar_lea.vmem %s2, 176
  %s91 = scalar_lea.vmem %s0, 176
  %v92 = vld [vmem:[%s91] sm:$0xff]
  %93 = vst [vmem:[%s90] sm:$0xff] %v92
  %s94 = scalar_lea.vmem %s2, 184
  %s95 = scalar_lea.vmem %s0, 184
  %v96 = vld [vmem:[%s95] sm:$0xff]
  %97 = vst [vmem:[%s94] sm:$0xff] %v96
  %s98 = scalar_lea.vmem %s2, 192
  %s99 = scalar_lea.vmem %s0, 192
  %v100 = vld [vmem:[%s99] sm:$0xff]
  %101 = vst [vmem:[%s98] sm:$0xff] %v100
  %s102 = scalar_lea.vmem %s2, 200
  %s103 = scalar_lea.vmem %s0, 200
  %v104 = vld [vmem:[%s103] sm:$0xff]
  %105 = vst [vmem:[%s102] sm:$0xff] %v104
  %s106 = scalar_lea.vmem %s2, 208
  %s107 = scalar_lea.vmem %s0, 208
  %v108 = vld [vmem:[%s107] sm:$0xff]
  %109 = vst [vmem:[%s106] sm:$0xff] %v108
  %s110 = scalar_lea.vmem %s2, 216
  %s111 = scalar_lea.vmem %s0, 216
  %v112 = vld [vmem:[%s111] sm:$0xff]
  %113 = vst [vmem:[%s110] sm:$0xff] %v112
  %s114 = scalar_lea.vmem %s2, 224
  %s115 = scalar_lea.vmem %s0, 224
  %v116 = vld [vmem:[%s115] sm:$0xff]
  %117 = vst [vmem:[%s114] sm:$0xff] %v116
  %s118 = scalar_lea.vmem %s2, 232
  %s119 = scalar_lea.vmem %s0, 232
  %v120 = vld [vmem:[%s119] sm:$0xff]
  %121 = vst [vmem:[%s118] sm:$0xff] %v120
  %s122 = scalar_lea.vmem %s2, 240
  %s123 = scalar_lea.vmem %s0, 240
  %v124 = vld [vmem:[%s123] sm:$0xff]
  %125 = vst [vmem:[%s122] sm:$0xff] %v124
  %s126 = scalar_lea.vmem %s2, 248
  %s127 = scalar_lea.vmem %s0, 248
  %v128 = vld [vmem:[%s127] sm:$0xff]
  %129 = vst [vmem:[%s126] sm:$0xff] %v128
  %v130 = vld [vmem:[%s1] sm:$0xff]
  %131 = vst [vmem:[%s3] sm:$0xff] %v130
  %s132 = scalar_lea.vmem %s3, 8
  %s133 = scalar_lea.vmem %s1, 8
  %v134 = vld [vmem:[%s133] sm:$0xff]
  %135 = vst [vmem:[%s132] sm:$0xff] %v134
  %s136 = scalar_lea.vmem %s3, 16
  %s137 = scalar_lea.vmem %s1, 16
  %v138 = vld [vmem:[%s137] sm:$0xff]
  %139 = vst [vmem:[%s136] sm:$0xff] %v138
  %s140 = scalar_lea.vmem %s3, 24
  %s141 = scalar_lea.vmem %s1, 24
  %v142 = vld [vmem:[%s141] sm:$0xff]
  %143 = vst [vmem:[%s140] sm:$0xff] %v142
  %s144 = scalar_lea.vmem %s3, 32
  %s145 = scalar_lea.vmem %s1, 32
  %v146 = vld [vmem:[%s145] sm:$0xff]
  %147 = vst [vmem:[%s144] sm:$0xff] %v146
  %s148 = scalar_lea.vmem %s3, 40
  %s149 = scalar_lea.vmem %s1, 40
  %v150 = vld [vmem:[%s149] sm:$0xff]
  %151 = vst [vmem:[%s148] sm:$0xff] %v150
  %s152 = scalar_lea.vmem %s3, 48
  %s153 = scalar_lea.vmem %s1, 48
  %v154 = vld [vmem:[%s153] sm:$0xff]
  %155 = vst [vmem:[%s152] sm:$0xff] %v154
  %s156 = scalar_lea.vmem %s3, 56
  %s157 = scalar_lea.vmem %s1, 56
  %v158 = vld [vmem:[%s157] sm:$0xff]
  %159 = vst [vmem:[%s156] sm:$0xff] %v158
  %s160 = scalar_lea.vmem %s3, 64
  %s161 = scalar_lea.vmem %s1, 64
  %v162 = vld [vmem:[%s161] sm:$0xff]
  %163 = vst [vmem:[%s160] sm:$0xff] %v162
  %s164 = scalar_lea.vmem %s3, 72
  %s165 = scalar_lea.vmem %s1, 72
  %v166 = vld [vmem:[%s165] sm:$0xff]
  %167 = vst [vmem:[%s164] sm:$0xff] %v166
  %s168 = scalar_lea.vmem %s3, 80
  %s169 = scalar_lea.vmem %s1, 80
  %v170 = vld [vmem:[%s169] sm:$0xff]
  %171 = vst [vmem:[%s168] sm:$0xff] %v170
  %s172 = scalar_lea.vmem %s3, 88
  %s173 = scalar_lea.vmem %s1, 88
  %v174 = vld [vmem:[%s173] sm:$0xff]
  %175 = vst [vmem:[%s172] sm:$0xff] %v174
  %s176 = scalar_lea.vmem %s3, 96
  %s177 = scalar_lea.vmem %s1, 96
  %v178 = vld [vmem:[%s177] sm:$0xff]
  %179 = vst [vmem:[%s176] sm:$0xff] %v178
  %s180 = scalar_lea.vmem %s3, 104
  %s181 = scalar_lea.vmem %s1, 104
  %v182 = vld [vmem:[%s181] sm:$0xff]
  %183 = vst [vmem:[%s180] sm:$0xff] %v182
  %s184 = scalar_lea.vmem %s3, 112
  %s185 = scalar_lea.vmem %s1, 112
  %v186 = vld [vmem:[%s185] sm:$0xff]
  %187 = vst [vmem:[%s184] sm:$0xff] %v186
  %s188 = scalar_lea.vmem %s3, 120
  %s189 = scalar_lea.vmem %s1, 120
  %v190 = vld [vmem:[%s189] sm:$0xff]
  %191 = vst [vmem:[%s188] sm:$0xff] %v190
  %s192 = scalar_lea.vmem %s3, 128
  %s193 = scalar_lea.vmem %s1, 128
  %v194 = vld [vmem:[%s193] sm:$0xff]
  %195 = vst [vmem:[%s192] sm:$0xff] %v194
  %s196 = scalar_lea.vmem %s3, 136
  %s197 = scalar_lea.vmem %s1, 136
  %v198 = vld [vmem:[%s197] sm:$0xff]
  %199 = vst [vmem:[%s196] sm:$0xff] %v198
  %s200 = scalar_lea.vmem %s3, 144
  %s201 = scalar_lea.vmem %s1, 144
  %v202 = vld [vmem:[%s201] sm:$0xff]
  %203 = vst [vmem:[%s200] sm:$0xff] %v202
  %s204 = scalar_lea.vmem %s3, 152
  %s205 = scalar_lea.vmem %s1, 152
  %v206 = vld [vmem:[%s205] sm:$0xff]
  %207 = vst [vmem:[%s204] sm:$0xff] %v206
  %s208 = scalar_lea.vmem %s3, 160
  %s209 = scalar_lea.vmem %s1, 160
  %v210 = vld [vmem:[%s209] sm:$0xff]
  %211 = vst [vmem:[%s208] sm:$0xff] %v210
  %s212 = scalar_lea.vmem %s3, 168
  %s213 = scalar_lea.vmem %s1, 168
  %v214 = vld [vmem:[%s213] sm:$0xff]
  %215 = vst [vmem:[%s212] sm:$0xff] %v214
  %s216 = scalar_lea.vmem %s3, 176
  %s217 = scalar_lea.vmem %s1, 176
  %v218 = vld [vmem:[%s217] sm:$0xff]
  %219 = vst [vmem:[%s216] sm:$0xff] %v218
  %s220 = scalar_lea.vmem %s3, 184
  %s221 = scalar_lea.vmem %s1, 184
  %v222 = vld [vmem:[%s221] sm:$0xff]
  %223 = vst [vmem:[%s220] sm:$0xff] %v222
  %s224 = scalar_lea.vmem %s3, 192
  %s225 = scalar_lea.vmem %s1, 192
  %v226 = vld [vmem:[%s225] sm:$0xff]
  %227 = vst [vmem:[%s224] sm:$0xff] %v226
  %s228 = scalar_lea.vmem %s3, 200
  %s229 = scalar_lea.vmem %s1, 200
  %v230 = vld [vmem:[%s229] sm:$0xff]
  %231 = vst [vmem:[%s228] sm:$0xff] %v230
  %s232 = scalar_lea.vmem %s3, 208
  %s233 = scalar_lea.vmem %s1, 208
  %v234 = vld [vmem:[%s233] sm:$0xff]
  %235 = vst [vmem:[%s232] sm:$0xff] %v234
  %s236 = scalar_lea.vmem %s3, 216
  %s237 = scalar_lea.vmem %s1, 216
  %v238 = vld [vmem:[%s237] sm:$0xff]
  %239 = vst [vmem:[%s236] sm:$0xff] %v238
  %s240 = scalar_lea.vmem %s3, 224
  %s241 = scalar_lea.vmem %s1, 224
  %v242 = vld [vmem:[%s241] sm:$0xff]
  %243 = vst [vmem:[%s240] sm:$0xff] %v242
  %s244 = scalar_lea.vmem %s3, 232
  %s245 = scalar_lea.vmem %s1, 232
  %v246 = vld [vmem:[%s245] sm:$0xff]
  %247 = vst [vmem:[%s244] sm:$0xff] %v246
  %s248 = scalar_lea.vmem %s3, 240
  %s249 = scalar_lea.vmem %s1, 240
  %v250 = vld [vmem:[%s249] sm:$0xff]
  %251 = vst [vmem:[%s248] sm:$0xff] %v250
  %s252 = scalar_lea.vmem %s3, 248
  %s253 = scalar_lea.vmem %s1, 248
  %v254 = vld [vmem:[%s253] sm:$0xff]
  %255 = vst [vmem:[%s252] sm:$0xff] %v254

// kernel: complex_conv_u_block2.5
$region0: #{complex_conv_u_block2.5}
  #allocation0 [shape = 'u32[]', space=smem, size = 0x4, offset = 0x4, fixed_abs, tag = 'smem constant byte address 0x4 - core index']
  #allocation1 [shape = 'u32[72,128]{1,0:T(1,128)}', space=vmem, size = 0x9000, scoped, tag = 'internal scratch']
  %s0 = inlined_call_operand.vmem [shape: f32[2,48,128], index: 0, kind: input, shape index: {}]
  %s1 = inlined_call_operand.vmem [shape: f32[1,128], index: 1, kind: input, shape index: {}]
  %s2 = inlined_call_operand.vmem [shape: f32[1,128], index: 2, kind: input, shape index: {}]
  %s3 = inlined_call_operand.vmem [shape: f32[1,128], index: 3, kind: input, shape index: {}]
  %s4 = inlined_call_operand.vmem [shape: f32[1,128], index: 4, kind: input, shape index: {}]
  %s5 = inlined_call_operand.vmem [shape: f32[2,32,128], index: 5, kind: output, shape index: {}]
  %s6 = sld [smem:[#allocation0]]
  $region53: #{complex_conv_u_block2.5} parent=0
    _
  %s8 = ssub.s32 1, %s6
  %s9 = scalar_select 0, %s8, %s6
  loop: start=0, step=1, limit=4
  $region2: #{complex_conv_u_block2.5} parent=0 // loop_pre_header
    _
  $region3: #{complex_conv_u_block2.5} parent=0 // loop_header
    %s11 = sphi 0, %s15
    %p12 = scmp.ge.s32.totalorder %s11, 4
    %s21 = sphi 0, %s23
    %s24 = sphi 0, %s21
    %s25 = sphi 0, %s24
    %s41 = sphi 0, %s25
    %s45 = sphi 0, %s45
    %s47 = sphi 0, %s45
    %s48 = sphi 0, %s47
    %s62 = sphi 0, %s48
    %s66 = sphi 0, %s66
    %s68 = sphi 0, %s66
    %s69 = sphi 0, %s68
    %s83 = sphi 0, %s69
    %s87 = sphi 0, %s87
    %s89 = sphi 0, %s87
    %s90 = sphi 0, %s89
    %s104 = sphi 0, %s90
    %s108 = sphi 0, %s108
    %s110 = sphi 0, %s108
    %s111 = sphi 0, %s110
    %s125 = sphi 0, %s111
    %s131 = sphi 0, %s133
    %s134 = sphi 0, %s131
    %s135 = sphi 0, %s134
    %s151 = sphi 0, %s135
  $region4: #{complex_conv_u_block2.5} parent=0 // loop_header_branch
    %14 = sbr.rel (%p12) target = $region8
  $region5: #{complex_conv_u_block2.5} parent=0 // loop_body
    %s16 = ssub.s32 %s11, 1
    %s17 = ssub.s32 %s11, 2
    %s18 = sadd.s32 %s11, 1
    %s19 = ssub.s32 %s11, %s18
    %p20 = scmp.eq.s32.totalorder %s19, 0
    %s22 = sadd.s32 %s21, 1
    %s23 = scalar_select %p20, %s21, %s22
    %p26 = pneg %p20
    %p27 = scmp.eq.s32.totalorder %s11, 1
    %p28 = por %p26, %p27
    %p29 = scmp.ne.s32.totalorder %s21, %s24
    %p30 = scmp.eq.s32.totalorder %s11, 0
    %p31 = por %p29, %p30
    %p32 = scmp.ne.s32.totalorder %s21, %s24
    %p33 = scmp.eq.s32.totalorder %s16, 1
    %p34 = por %p32, %p33
    %p35 = scmp.ne.s32.totalorder %s24, %s25
    %p36 = scmp.eq.s32.totalorder %s16, 0
    %p37 = por %p35, %p36
    %p38 = scmp.ne.s32.totalorder %s24, %s25
    %p39 = scmp.eq.s32.totalorder %s17, 1
    %p40 = por %p38, %p39
    %p42 = scmp.ne.s32.totalorder %s25, %s41
    %p43 = scmp.eq.s32.totalorder %s17, 0
    %p44 = por %p42, %p43
    %s46 = sadd.s32 %s45, 1
    %p49 = scmp.eq.s32.totalorder %s11, 1
    %p50 = scmp.ne.s32.totalorder %s45, %s47
    %p51 = scmp.eq.s32.totalorder %s11, 0
    %p52 = por %p50, %p51
    %p53 = scmp.ne.s32.totalorder %s45, %s47
    %p54 = scmp.eq.s32.totalorder %s16, 1
    %p55 = por %p53, %p54
    %p56 = scmp.ne.s32.totalorder %s47, %s48
    %p57 = scmp.eq.s32.totalorder %s16, 0
    %p58 = por %p56, %p57
    %p59 = scmp.ne.s32.totalorder %s47, %s48
    %p60 = scmp.eq.s32.totalorder %s17, 1
    %p61 = por %p59, %p60
    %p63 = scmp.ne.s32.totalorder %s48, %s62
    %p64 = scmp.eq.s32.totalorder %s17, 0
    %p65 = por %p63, %p64
    %s67 = sadd.s32 %s66, 1
    %p70 = scmp.eq.s32.totalorder %s11, 1
    %p71 = scmp.ne.s32.totalorder %s66, %s68
    %p72 = scmp.eq.s32.totalorder %s11, 0
    %p73 = por %p71, %p72
    %p74 = scmp.ne.s32.totalorder %s66, %s68
    %p75 = scmp.eq.s32.totalorder %s16, 1
    %p76 = por %p74, %p75
    %p77 = scmp.ne.s32.totalorder %s68, %s69
    %p78 = scmp.eq.s32.totalorder %s16, 0
    %p79 = por %p77, %p78
    %p80 = scmp.ne.s32.totalorder %s68, %s69
    %p81 = scmp.eq.s32.totalorder %s17, 1
    %p82 = por %p80, %p81
    %p84 = scmp.ne.s32.totalorder %s69, %s83
    %p85 = scmp.eq.s32.totalorder %s17, 0
    %p86 = por %p84, %p85
    %s88 = sadd.s32 %s87, 1
    %p91 = scmp.eq.s32.totalorder %s11, 1
    %p92 = scmp.ne.s32.totalorder %s87, %s89
    %p93 = scmp.eq.s32.totalorder %s11, 0
    %p94 = por %p92, %p93
    %p95 = scmp.ne.s32.totalorder %s87, %s89
    %p96 = scmp.eq.s32.totalorder %s16, 1
    %p97 = por %p95, %p96
    %p98 = scmp.ne.s32.totalorder %s89, %s90
    %p99 = scmp.eq.s32.totalorder %s16, 0
    %p100 = por %p98, %p99
    %p101 = scmp.ne.s32.totalorder %s89, %s90
    %p102 = scmp.eq.s32.totalorder %s17, 1
    %p103 = por %p101, %p102
    %p105 = scmp.ne.s32.totalorder %s90, %s104
    %p106 = scmp.eq.s32.totalorder %s17, 0
    %p107 = por %p105, %p106
    %s109 = sadd.s32 %s108, 1
    %p112 = scmp.eq.s32.totalorder %s11, 1
    %p113 = scmp.ne.s32.totalorder %s108, %s110
    %p114 = scmp.eq.s32.totalorder %s11, 0
    %p115 = por %p113, %p114
    %p116 = scmp.ne.s32.totalorder %s108, %s110
    %p117 = scmp.eq.s32.totalorder %s16, 1
    %p118 = por %p116, %p117
    %p119 = scmp.ne.s32.totalorder %s110, %s111
    %p120 = scmp.eq.s32.totalorder %s16, 0
    %p121 = por %p119, %p120
    %p122 = scmp.ne.s32.totalorder %s110, %s111
    %p123 = scmp.eq.s32.totalorder %s17, 1
    %p124 = por %p122, %p123
    %p126 = scmp.ne.s32.totalorder %s111, %s125
    %p127 = scmp.eq.s32.totalorder %s17, 0
    %p128 = por %p126, %p127
    %s129 = ssub.s32 %s11, %s18
    %p130 = scmp.eq.s32.totalorder %s129, 0
    %s132 = sadd.s32 %s131, 1
    %s133 = scalar_select %p130, %s131, %s132
    %p136 = pneg %p130
    %p137 = scmp.eq.s32.totalorder %s11, 1
    %p138 = por %p136, %p137
    %p139 = scmp.ne.s32.totalorder %s131, %s134
    %p140 = scmp.eq.s32.totalorder %s11, 0
    %p141 = por %p139, %p140
    %p142 = scmp.ne.s32.totalorder %s131, %s134
    %p143 = scmp.eq.s32.totalorder %s16, 1
    %p144 = por %p142, %p143
    %p145 = scmp.ne.s32.totalorder %s134, %s135
    %p146 = scmp.eq.s32.totalorder %s16, 0
    %p147 = por %p145, %p146
    %p148 = scmp.ne.s32.totalorder %s134, %s135
    %p149 = scmp.eq.s32.totalorder %s17, 1
    %p150 = por %p148, %p149
    %p152 = scmp.ne.s32.totalorder %s135, %s151
    %p153 = scmp.eq.s32.totalorder %s17, 0
    %p154 = por %p152, %p153
    %p155 = scmp.le.s32.totalorder 1, %s11
    %p156 = scmp.lt.s32.totalorder %s11, 3
    %p157 = pnand %p155, %p156
    %p158 = pneg %p157
    // Predicated region
    $region9: #{complex_conv_u_block2.5} parent=5 // pred_check
      _
    $region10: #{complex_conv_u_block2.5} parent=5 // pred_check_branch
      %160 = sbr.rel (%p157) target = $region12
    $region11: #{complex_conv_u_block2.5} parent=5 // pred_region
      %s161 = ssub.s32 %s11, 1
      // Predicated region
      $region13: #{complex_conv_u_block2.5} parent=11 // pred_check
        %p162 = pneg %p58
      $region14: #{complex_conv_u_block2.5} parent=11 // pred_check_branch
        %164 = sbr.rel (%p162) target = $region16
      $region15: #{complex_conv_u_block2.5} parent=11 // pred_region
        _
      $region16: #{complex_conv_u_block2.5} parent=11 // pred_fallthru
        _
      // Predicated region
      $region17: #{complex_conv_u_block2.5} parent=11 // pred_check
        %p165 = pneg %p79
      $region18: #{complex_conv_u_block2.5} parent=11 // pred_check_branch
        %167 = sbr.rel (%p165) target = $region20
      $region19: #{complex_conv_u_block2.5} parent=11 // pred_region
        _
      $region20: #{complex_conv_u_block2.5} parent=11 // pred_fallthru
        _
      // Predicated region
      $region21: #{complex_conv_u_block2.5} parent=11 // pred_check
        %p168 = pneg %p100
      $region22: #{complex_conv_u_block2.5} parent=11 // pred_check_branch
        %170 = sbr.rel (%p168) target = $region24
      $region23: #{complex_conv_u_block2.5} parent=11 // pred_region
        _
      $region24: #{complex_conv_u_block2.5} parent=11 // pred_fallthru
        _
      // Predicated region
      $region25: #{complex_conv_u_block2.5} parent=11 // pred_check
        %p171 = pneg %p121
      $region26: #{complex_conv_u_block2.5} parent=11 // pred_check_branch
        %173 = sbr.rel (%p171) target = $region28
      $region27: #{complex_conv_u_block2.5} parent=11 // pred_region
        _
      $region28: #{complex_conv_u_block2.5} parent=11 // pred_fallthru
        _
    $region12: #{complex_conv_u_block2.5} parent=5 // pred_fallthru
      _
    %p174 = scmp.lt.s32.totalorder %s11, 2
    // Predicated region
    $region29: #{complex_conv_u_block2.5} parent=5 // pred_check
      %p175 = pneg %p174
    $region30: #{complex_conv_u_block2.5} parent=5 // pred_check_branch
      %177 = sbr.rel (%p175) target = $region32
    $region31: #{complex_conv_u_block2.5} parent=5 // pred_region
      // Predicated region
      $region33: #{complex_conv_u_block2.5} parent=31 // pred_check
        %p178 = pneg %p31
      $region34: #{complex_conv_u_block2.5} parent=31 // pred_check_branch
        %180 = sbr.rel (%p178) target = $region36
      $region35: #{complex_conv_u_block2.5} parent=31 // pred_region
        %p181 = scmp.lt.s32.totalorder %s11, 1
        %s182 = scalar_select %p181, %s11, 1
        %s183 = smul.addr %s182, 6
        %s184 = smul.addr %s183, 8
        %s185 = scalar_lea.vmem %s0, %s184
      $region36: #{complex_conv_u_block2.5} parent=31 // pred_fallthru
        _
    $region32: #{complex_conv_u_block2.5} parent=5 // pred_fallthru
      _
    %p186 = scmp.le.s32.totalorder 1, %s11
    %p187 = scmp.lt.s32.totalorder %s11, 3
    %p188 = pnand %p186, %p187
    %p189 = pneg %p188
    // Predicated region
    $region37: #{complex_conv_u_block2.5} parent=5 // pred_check
      _
    $region38: #{complex_conv_u_block2.5} parent=5 // pred_check_branch
      %191 = sbr.rel (%p188) target = $region40
    $region39: #{complex_conv_u_block2.5} parent=5 // pred_region
      %s192 = ssub.s32 %s11, 1
      %p193 = scmp.lt.s32.totalorder %s16, 1
      %s194 = scalar_select %p193, %s16, 1
      %s195 = smul.addr %s194, 6
      %s196 = smul.addr %s195, 8
      %s197 = scalar_lea.vmem %s0, %s196
      %p198 = pneg %p37
      %p199 = pneg %p34
      %p200 = pneg %p58
      %p201 = pneg %p55
      %p202 = pneg %p79
      %p203 = pneg %p76
      %p204 = pneg %p100
      %p205 = pneg %p97
      %p206 = pneg %p121
      %p207 = pneg %p118
      %p208 = pneg %p147
      %p209 = pneg %p144
      %p210 = scmp.lt.s32.totalorder %s16, 1
      %s211 = scalar_select %p210, %s16, 1
      %s212 = smul.addr %s211, 4
      %s213 = smul.addr %s212, 8
      %s214 = scalar_lea.vmem %s5, %s213
      %p215 = scmp.lt.s32.totalorder %s16, 1
      %s216 = scalar_select %p215, %s16, 1
      %s217 = smul.addr %s216, 6
      %s218 = smul.addr %s217, 8
      %s219 = scalar_lea.vmem %s0, %s218
      %p220 = scmp.lt.s32.totalorder %s16, 1
      %s221 = scalar_select %p220, %s16, 1
      %s222 = smul.addr %s221, 4
      %s223 = smul.addr %s222, 8
      %s224 = scalar_lea.vmem %s5, %s223
      %v225 = vld [vmem:[%s219] sm:$0xff]
      %v226 = vld [vmem:[%s219 + $0x8] sm:$0xff]
      %v227 = vld [vmem:[%s219 + $0x10] sm:$0xff]
      %v228 = vld [vmem:[%s219 + $0x18] sm:$0xff]
      %v229 = vld [vmem:[%s219 + $0x20] sm:$0xff]
      %v230 = vld [vmem:[%s219 + $0x28] sm:$0xff]
      %v231 = vld [vmem:[%s1] sm:$0x1]
      %v232 = vld [vmem:[%s2] sm:$0x1]
      %v233 = vld [vmem:[%s3] sm:$0x1]
      %v234 = vld [vmem:[%s4] sm:$0x1]
      %v236 = vperm.slane %v231, 0
      %v238 = vmul.f32 %v229, %v236
      %v239 = vmul.f32 %v230, %v236
      %v241 = vperm.slane %v232, 0
      %v243 = vadd.f32 %v238, %v241
      %v244 = vadd.f32 %v239, %v241
      %v245 = vmax.f32 %v243, 0.0
      %v246 = vmax.f32 %v244, 0.0
      %v247 = vand.u32 2147483647, %v227
      %v248 = vand.u32 2147483647, %v228
      %vm249 = vcmp.lt.f32.partialorder %v247, 1e-08
      %vm250 = vcmp.lt.f32.partialorder %v248, 1e-08
      %v251 = vsel %vm249, 1e-08, %v227
      %v252 = vsel %vm250, 1e-08, %v228
      %v253 = vmul.f32 %v225, %v225
      %v254 = vmul.f32 %v226, %v226
      %v255 = vmul.f32 %v251, %v251
      %v256 = vmul.f32 %v252, %v252
      %v257 = vadd.f32 %v253, %v255
      %v258 = vadd.f32 %v254, %v256
      %v259 = vrsqrt.pop %v257
      %v260 = vmul.f32 %v259, %v257
      %v261 = vmul.f32 %v260, %v259
      %v262 = vmul.f32 0.5, %v261
      %v263 = vsub.f32 1.5, %v262
      %v264 = vmul.f32 %v259, %v263
      %vm265 = vweird.f32 %v257
      %vm266 = vweird.f32 %v259
      %vm267 = vmor %vm265, %vm266
      %v268 = vsel %vm267, %v259, %v264
      %v269 = vrsqrt.pop %v258
      %v270 = vmul.f32 %v269, %v258
      %v271 = vmul.f32 %v270, %v269
      %v272 = vmul.f32 0.5, %v271
      %v273 = vsub.f32 1.5, %v272
      %v274 = vmul.f32 %v269, %v273
      %vm275 = vweird.f32 %v258
      %vm276 = vweird.f32 %v269
      %vm277 = vmor %vm275, %vm276
      %v278 = vsel %vm277, %v269, %v274
      %v280 = vperm.slane %v233, 0
      %v282 = vmul.f32 %v225, %v280
      %v283 = vmul.f32 %v226, %v280
      %v285 = vperm.slane %v234, 0
      %v287 = vmul.f32 %v251, %v285
      %v288 = vmul.f32 %v252, %v285
      %v289 = vsub.f32 %v282, %v287
      %v290 = vsub.f32 %v283, %v288
      %v291 = vmul.f32 %v245, %v289
      %v292 = vmul.f32 %v246, %v290
      %v293 = vmul.f32 %v291, %v268
      %v294 = vmul.f32 %v292, %v278
      %v295 = vmul.f32 %v251, %v280
      %v296 = vmul.f32 %v252, %v280
      %v297 = vmul.f32 %v225, %v285
      %v298 = vmul.f32 %v226, %v285
      %v299 = vadd.f32 %v295, %v297
      %v300 = vadd.f32 %v296, %v298
      %v301 = vmul.f32 %v245, %v299
      %v302 = vmul.f32 %v246, %v300
      %v303 = vmul.f32 %v301, %v268
      %v304 = vmul.f32 %v302, %v278
      %305 = vst [vmem:[%s224] sm:$0xff] %v293
      %306 = vst [vmem:[%s224 + $0x8] sm:$0xff] %v294
      %307 = vst [vmem:[%s224 + $0x10] sm:$0xff] %v303
      %308 = vst [vmem:[%s224 + $0x18] sm:$0xff] %v304
      %p309 = scmp.lt.s32.totalorder %s16, 1
      %s310 = scalar_select %p309, %s16, 1
      %s311 = smul.addr %s310, 4
      %s312 = smul.addr %s311, 8
      %s313 = scalar_lea.vmem %s5, %s312
      // Predicated region
      $region41: #{complex_conv_u_block2.5} parent=39 // pred_check
        %p314 = pneg %p144
      $region42: #{complex_conv_u_block2.5} parent=39 // pred_check_branch
        %316 = sbr.rel (%p314) target = $region44
      $region43: #{complex_conv_u_block2.5} parent=39 // pred_region
        _
      $region44: #{complex_conv_u_block2.5} parent=39 // pred_fallthru
        _
    $region40: #{complex_conv_u_block2.5} parent=5 // pred_fallthru
      _
    %p317 = scmp.le.s32.totalorder 2, %s11
    // Predicated region
    $region45: #{complex_conv_u_block2.5} parent=5 // pred_check
      %p318 = pneg %p317
    $region46: #{complex_conv_u_block2.5} parent=5 // pred_check_branch
      %320 = sbr.rel (%p318) target = $region48
    $region47: #{complex_conv_u_block2.5} parent=5 // pred_region
      %s321 = ssub.s32 %s11, 2
      // Predicated region
      $region49: #{complex_conv_u_block2.5} parent=47 // pred_check
        %p322 = pneg %p150
      $region50: #{complex_conv_u_block2.5} parent=47 // pred_check_branch
        %324 = sbr.rel (%p322) target = $region52
      $region51: #{complex_conv_u_block2.5} parent=47 // pred_region
        %p325 = scmp.lt.s32.totalorder %s17, 1
        %s326 = scalar_select %p325, %s17, 1
        %s327 = smul.addr %s326, 4
        %s328 = smul.addr %s327, 8
        %s329 = scalar_lea.vmem %s5, %s328
      $region52: #{complex_conv_u_block2.5} parent=47 // pred_fallthru
        _
    $region48: #{complex_conv_u_block2.5} parent=5 // pred_fallthru
      _
  $region6: #{complex_conv_u_block2.5} parent=0 // loop_footer
    %s15 = sadd.s32 1, %s11
  $region7: #{complex_conv_u_block2.5} parent=0 // loop_footer_branch
    %10 = sbr.rel target = $region3
  $region8: #{complex_conv_u_block2.5} parent=0 // loop_exit
    _

// kernel: complex_conv_u_block2.3
$region0: #{complex_conv_u_block2.3}
  #allocation0 [shape = 'u32[]', space=smem, size = 0x4, offset = 0x4, fixed_abs, tag = 'smem constant byte address 0x4 - core index']
  #allocation1 [shape = 'u32[72,128]{1,0:T(1,128)}', space=vmem, size = 0x9000, scoped, tag = 'internal scratch']
  %s0 = inlined_call_operand.vmem [shape: f32[2,16,64], index: 0, kind: input, shape index: {}]
  %s1 = inlined_call_operand.vmem [shape: f32[2,16,64], index: 1, kind: input, shape index: {}]
  %s2 = inlined_call_operand.vmem [shape: bf16[576,128], index: 2, kind: input, shape index: {}]
  %s3 = inlined_call_operand.vmem [shape: f32[1,128], index: 3, kind: input, shape index: {}]
  %s4 = inlined_call_operand.vmem [shape: f32[2,48,128], index: 4, kind: output, shape index: {0}]
  %s5 = inlined_call_operand.vmem [shape: f32[2,2,128], index: 5, kind: output, shape index: {1}]
  %6 = xla_tuple %s4, %s5
  %s7 = sld [smem:[#allocation0]]
  $region57: #{complex_conv_u_block2.3} parent=0
    _
  %s9 = ssub.s32 1, %s7
  %s10 = scalar_select 0, %s9, %s7
  loop: start=0, step=1, limit=4
  $region2: #{complex_conv_u_block2.3} parent=0 // loop_pre_header
    _
  $region3: #{complex_conv_u_block2.3} parent=0 // loop_header
    %s12 = sphi 0, %s16
    %p13 = scmp.ge.s32.totalorder %s12, 4
    %s22 = sphi 0, %s24
    %s25 = sphi 0, %s22
    %s26 = sphi 0, %s25
    %s42 = sphi 0, %s26
    %s48 = sphi 0, %s50
    %s51 = sphi 0, %s48
    %s52 = sphi 0, %s51
    %s68 = sphi 0, %s52
    %s72 = sphi 0, %s72
    %s74 = sphi 0, %s72
    %s75 = sphi 0, %s74
    %s89 = sphi 0, %s75
    %s93 = sphi 0, %s93
    %s95 = sphi 0, %s93
    %s96 = sphi 0, %s95
    %s110 = sphi 0, %s96
    %s116 = sphi 0, %s118
    %s119 = sphi 0, %s116
    %s120 = sphi 0, %s119
    %s136 = sphi 0, %s120
    %s142 = sphi 0, %s144
    %s145 = sphi 0, %s142
    %s146 = sphi 0, %s145
    %s162 = sphi 0, %s146
  $region4: #{complex_conv_u_block2.3} parent=0 // loop_header_branch
    %15 = sbr.rel (%p13) target = $region8
  $region5: #{complex_conv_u_block2.3} parent=0 // loop_body
    %s17 = ssub.s32 %s12, 1
    %s18 = ssub.s32 %s12, 2
    %s19 = sadd.s32 %s12, 1
    %s20 = ssub.s32 %s12, %s19
    %p21 = scmp.eq.s32.totalorder %s20, 0
    %s23 = sadd.s32 %s22, 1
    %s24 = scalar_select %p21, %s22, %s23
    %p27 = pneg %p21
    %p28 = scmp.eq.s32.totalorder %s12, 1
    %p29 = por %p27, %p28
    %p30 = scmp.ne.s32.totalorder %s22, %s25
    %p31 = scmp.eq.s32.totalorder %s12, 0
    %p32 = por %p30, %p31
    %p33 = scmp.ne.s32.totalorder %s22, %s25
    %p34 = scmp.eq.s32.totalorder %s17, 1
    %p35 = por %p33, %p34
    %p36 = scmp.ne.s32.totalorder %s25, %s26
    %p37 = scmp.eq.s32.totalorder %s17, 0
    %p38 = por %p36, %p37
    %p39 = scmp.ne.s32.totalorder %s25, %s26
    %p40 = scmp.eq.s32.totalorder %s18, 1
    %p41 = por %p39, %p40
    %p43 = scmp.ne.s32.totalorder %s26, %s42
    %p44 = scmp.eq.s32.totalorder %s18, 0
    %p45 = por %p43, %p44
    %s46 = ssub.s32 %s12, %s19
    %p47 = scmp.eq.s32.totalorder %s46, 0
    %s49 = sadd.s32 %s48, 1
    %s50 = scalar_select %p47, %s48, %s49
    %p53 = pneg %p47
    %p54 = scmp.eq.s32.totalorder %s12, 1
    %p55 = por %p53, %p54
    %p56 = scmp.ne.s32.totalorder %s48, %s51
    %p57 = scmp.eq.s32.totalorder %s12, 0
    %p58 = por %p56, %p57
    %p59 = scmp.ne.s32.totalorder %s48, %s51
    %p60 = scmp.eq.s32.totalorder %s17, 1
    %p61 = por %p59, %p60
    %p62 = scmp.ne.s32.totalorder %s51, %s52
    %p63 = scmp.eq.s32.totalorder %s17, 0
    %p64 = por %p62, %p63
    %p65 = scmp.ne.s32.totalorder %s51, %s52
    %p66 = scmp.eq.s32.totalorder %s18, 1
    %p67 = por %p65, %p66
    %p69 = scmp.ne.s32.totalorder %s52, %s68
    %p70 = scmp.eq.s32.totalorder %s18, 0
    %p71 = por %p69, %p70
    %s73 = sadd.s32 %s72, 1
    %p76 = scmp.eq.s32.totalorder %s12, 1
    %p77 = scmp.ne.s32.totalorder %s72, %s74
    %p78 = scmp.eq.s32.totalorder %s12, 0
    %p79 = por %p77, %p78
    %p80 = scmp.ne.s32.totalorder %s72, %s74
    %p81 = scmp.eq.s32.totalorder %s17, 1
    %p82 = por %p80, %p81
    %p83 = scmp.ne.s32.totalorder %s74, %s75
    %p84 = scmp.eq.s32.totalorder %s17, 0
    %p85 = por %p83, %p84
    %p86 = scmp.ne.s32.totalorder %s74, %s75
    %p87 = scmp.eq.s32.totalorder %s18, 1
    %p88 = por %p86, %p87
    %p90 = scmp.ne.s32.totalorder %s75, %s89
    %p91 = scmp.eq.s32.totalorder %s18, 0
    %p92 = por %p90, %p91
    %s94 = sadd.s32 %s93, 1
    %p97 = scmp.eq.s32.totalorder %s12, 1
    %p98 = scmp.ne.s32.totalorder %s93, %s95
    %p99 = scmp.eq.s32.totalorder %s12, 0
    %p100 = por %p98, %p99
    %p101 = scmp.ne.s32.totalorder %s93, %s95
    %p102 = scmp.eq.s32.totalorder %s17, 1
    %p103 = por %p101, %p102
    %p104 = scmp.ne.s32.totalorder %s95, %s96
    %p105 = scmp.eq.s32.totalorder %s17, 0
    %p106 = por %p104, %p105
    %p107 = scmp.ne.s32.totalorder %s95, %s96
    %p108 = scmp.eq.s32.totalorder %s18, 1
    %p109 = por %p107, %p108
    %p111 = scmp.ne.s32.totalorder %s96, %s110
    %p112 = scmp.eq.s32.totalorder %s18, 0
    %p113 = por %p111, %p112
    %s114 = ssub.s32 %s12, %s19
    %p115 = scmp.eq.s32.totalorder %s114, 0
    %s117 = sadd.s32 %s116, 1
    %s118 = scalar_select %p115, %s116, %s117
    %p121 = pneg %p115
    %p122 = scmp.eq.s32.totalorder %s12, 1
    %p123 = por %p121, %p122
    %p124 = scmp.ne.s32.totalorder %s116, %s119
    %p125 = scmp.eq.s32.totalorder %s12, 0
    %p126 = por %p124, %p125
    %p127 = scmp.ne.s32.totalorder %s116, %s119
    %p128 = scmp.eq.s32.totalorder %s17, 1
    %p129 = por %p127, %p128
    %p130 = scmp.ne.s32.totalorder %s119, %s120
    %p131 = scmp.eq.s32.totalorder %s17, 0
    %p132 = por %p130, %p131
    %p133 = scmp.ne.s32.totalorder %s119, %s120
    %p134 = scmp.eq.s32.totalorder %s18, 1
    %p135 = por %p133, %p134
    %p137 = scmp.ne.s32.totalorder %s120, %s136
    %p138 = scmp.eq.s32.totalorder %s18, 0
    %p139 = por %p137, %p138
    %s140 = ssub.s32 %s12, %s19
    %p141 = scmp.eq.s32.totalorder %s140, 0
    %s143 = sadd.s32 %s142, 1
    %s144 = scalar_select %p141, %s142, %s143
    %p147 = pneg %p141
    %p148 = scmp.eq.s32.totalorder %s12, 1
    %p149 = por %p147, %p148
    %p150 = scmp.ne.s32.totalorder %s142, %s145
    %p151 = scmp.eq.s32.totalorder %s12, 0
    %p152 = por %p150, %p151
    %p153 = scmp.ne.s32.totalorder %s142, %s145
    %p154 = scmp.eq.s32.totalorder %s17, 1
    %p155 = por %p153, %p154
    %p156 = scmp.ne.s32.totalorder %s145, %s146
    %p157 = scmp.eq.s32.totalorder %s17, 0
    %p158 = por %p156, %p157
    %p159 = scmp.ne.s32.totalorder %s145, %s146
    %p160 = scmp.eq.s32.totalorder %s18, 1
    %p161 = por %p159, %p160
    %p163 = scmp.ne.s32.totalorder %s146, %s162
    %p164 = scmp.eq.s32.totalorder %s18, 0
    %p165 = por %p163, %p164
    %p166 = scmp.le.s32.totalorder 1, %s12
    %p167 = scmp.lt.s32.totalorder %s12, 3
    %p168 = pnand %p166, %p167
    %p169 = pneg %p168
    // Predicated region
    $region9: #{complex_conv_u_block2.3} parent=5 // pred_check
      _
    $region10: #{complex_conv_u_block2.3} parent=5 // pred_check_branch
      %171 = sbr.rel (%p168) target = $region12
    $region11: #{complex_conv_u_block2.3} parent=5 // pred_region
      %s172 = ssub.s32 %s12, 1
      // Predicated region
      $region13: #{complex_conv_u_block2.3} parent=11 // pred_check
        %p173 = pneg %p85
      $region14: #{complex_conv_u_block2.3} parent=11 // pred_check_branch
        %175 = sbr.rel (%p173) target = $region16
      $region15: #{complex_conv_u_block2.3} parent=11 // pred_region
        _
      $region16: #{complex_conv_u_block2.3} parent=11 // pred_fallthru
        _
      // Predicated region
      $region17: #{complex_conv_u_block2.3} parent=11 // pred_check
        %p176 = pneg %p106
      $region18: #{complex_conv_u_block2.3} parent=11 // pred_check_branch
        %178 = sbr.rel (%p176) target = $region20
      $region19: #{complex_conv_u_block2.3} parent=11 // pred_region
        _
      $region20: #{complex_conv_u_block2.3} parent=11 // pred_fallthru
        _
    $region12: #{complex_conv_u_block2.3} parent=5 // pred_fallthru
      _
    %p179 = scmp.lt.s32.totalorder %s12, 2
    // Predicated region
    $region21: #{complex_conv_u_block2.3} parent=5 // pred_check
      %p180 = pneg %p179
    $region22: #{complex_conv_u_block2.3} parent=5 // pred_check_branch
      %182 = sbr.rel (%p180) target = $region24
    $region23: #{complex_conv_u_block2.3} parent=5 // pred_region
      // Predicated region
      $region25: #{complex_conv_u_block2.3} parent=23 // pred_check
        %p183 = pneg %p32
      $region26: #{complex_conv_u_block2.3} parent=23 // pred_check_branch
        %185 = sbr.rel (%p183) target = $region28
      $region27: #{complex_conv_u_block2.3} parent=23 // pred_region
        %p186 = scmp.lt.s32.totalorder %s12, 1
        %s187 = scalar_select %p186, %s12, 1
        %s188 = smul.addr %s187, 2
        %s189 = smul.addr %s188, 8
        %s190 = scalar_lea.vmem %s0, %s189
      $region28: #{complex_conv_u_block2.3} parent=23 // pred_fallthru
        _
      // Predicated region
      $region29: #{complex_conv_u_block2.3} parent=23 // pred_check
        %p191 = pneg %p58
      $region30: #{complex_conv_u_block2.3} parent=23 // pred_check_branch
        %193 = sbr.rel (%p191) target = $region32
      $region31: #{complex_conv_u_block2.3} parent=23 // pred_region
        %p194 = scmp.lt.s32.totalorder %s12, 1
        %s195 = scalar_select %p194, %s12, 1
        %s196 = smul.addr %s195, 2
        %s197 = smul.addr %s196, 8
        %s198 = scalar_lea.vmem %s1, %s197
      $region32: #{complex_conv_u_block2.3} parent=23 // pred_fallthru
        _
    $region24: #{complex_conv_u_block2.3} parent=5 // pred_fallthru
      _
    %p199 = scmp.le.s32.totalorder 1, %s12
    %p200 = scmp.lt.s32.totalorder %s12, 3
    %p201 = pnand %p199, %p200
    %p202 = pneg %p201
    // Predicated region
    $region33: #{complex_conv_u_block2.3} parent=5 // pred_check
      _
    $region34: #{complex_conv_u_block2.3} parent=5 // pred_check_branch
      %204 = sbr.rel (%p201) target = $region36
    $region35: #{complex_conv_u_block2.3} parent=5 // pred_region
      %s205 = ssub.s32 %s12, 1
      %p206 = scmp.lt.s32.totalorder %s17, 1
      %s207 = scalar_select %p206, %s17, 1
      %s208 = smul.addr %s207, 2
      %s209 = smul.addr %s208, 8
      %s210 = scalar_lea.vmem %s0, %s209
      %p211 = pneg %p38
      %p212 = pneg %p35
      %p213 = scmp.lt.s32.totalorder %s17, 1
      %s214 = scalar_select %p213, %s17, 1
      %s215 = smul.addr %s214, 2
      %s216 = smul.addr %s215, 8
      %s217 = scalar_lea.vmem %s1, %s216
      %p218 = pneg %p64
      %p219 = pneg %p61
      %p220 = pneg %p85
      %p221 = pneg %p82
      %p222 = pneg %p106
      %p223 = pneg %p103
      %p224 = pneg %p132
      %p225 = pneg %p129
      %p226 = scmp.lt.s32.totalorder %s17, 1
      %s227 = scalar_select %p226, %s17, 1
      %s228 = smul.addr %s227, 6
      %s229 = smul.addr %s228, 8
      %s230 = scalar_lea.vmem %s4, %s229
      %p231 = pneg %p158
      %p232 = pneg %p155
      %p233 = scmp.lt.s32.totalorder %s17, 1
      %s234 = scalar_select %p233, %s17, 1
      %s235 = smul.addr %s234, 2
      %s236 = scalar_lea.vmem %s5, %s235
      %p237 = scmp.lt.s32.totalorder %s17, 1
      %s238 = scalar_select %p237, %s17, 1
      %s239 = smul.addr %s238, 2
      %s240 = smul.addr %s239, 8
      %s241 = scalar_lea.vmem %s0, %s240
      %p242 = scmp.lt.s32.totalorder %s17, 1
      %s243 = scalar_select %p242, %s17, 1
      %s244 = smul.addr %s243, 2
      %s245 = smul.addr %s244, 8
      %s246 = scalar_lea.vmem %s1, %s245
      %p247 = scmp.lt.s32.totalorder %s17, 1
      %s248 = scalar_select %p247, %s17, 1
      %s249 = smul.addr %s248, 6
      %s250 = smul.addr %s249, 8
      %s251 = scalar_lea.vmem %s4, %s250
      %p252 = scmp.lt.s32.totalorder %s17, 1
      %s253 = scalar_select %p252, %s17, 1
      %s254 = smul.addr %s253, 2
      %s255 = scalar_lea.vmem %s5, %s254
      %v257 = vld [vmem:[%s241] sm:$0xff]
      %v258 = vld [vmem:[%s241 + $0x8] sm:$0xff]
      %v259 = vld [vmem:[%s246] sm:$0xff]
      %v260 = vld [vmem:[%s246 + $0x8] sm:$0xff]
      %v261 = vmul.f32 %v257, %v257
      %v262 = vmul.f32 %v258, %v258
      %v263 = vmul.f32 %v259, %v259
      %v264 = vmul.f32 %v260, %v260
      %v265 = vadd.f32 %v261, %v263
      %v266 = vadd.f32 %v262, %v264
      %v267 = vrsqrt.pop %v265
      %v268 = vmul.f32 %v267, %v265
      %v269 = vmul.f32 %v268, %v267
      %v270 = vmul.f32 0.5, %v269
      %v271 = vsub.f32 1.5, %v270
      %v272 = vmul.f32 %v267, %v271
      %v273 = vmul.f32 %v265, %v272
      %vm274 = vcmp.eq.f32.partialorder %v265, inf
      %v275 = vsel %vm274, %v265, %v273
      %vm276 = vcmp.eq.f32.partialorder %v265, 0.0
      %v277 = vand.u32 %v265, 2147483648
      %v278 = vsel %vm276, %v277, %v275
      %v279 = vrsqrt.pop %v266
      %v280 = vmul.f32 %v279, %v266
      %v281 = vmul.f32 %v280, %v279
      %v282 = vmul.f32 0.5, %v281
      %v283 = vsub.f32 1.5, %v282
      %v284 = vmul.f32 %v279, %v283
      %v285 = vmul.f32 %v266, %v284
      %vm286 = vcmp.eq.f32.partialorder %v266, inf
      %v287 = vsel %vm286, %v266, %v285
      %vm288 = vcmp.eq.f32.partialorder %v266, 0.0
      %v289 = vand.u32 %v266, 2147483648
      %v290 = vsel %vm288, %v289, %v287
      %v291 = vand.u32 2147483647, %v259
      %v292 = vand.u32 2147483647, %v260
      %vm293 = vcmp.lt.f32.partialorder %v291, 1e-08
      %vm294 = vcmp.lt.f32.partialorder %v292, 1e-08
      %v295 = vsel %vm293, 1e-08, %v259
      %v296 = vsel %vm294, 1e-08, %v260
      %v297 = vmul.f32 %v295, %v295
      %v298 = vmul.f32 %v296, %v296
      %v299 = vadd.f32 %v261, %v297
      %v300 = vadd.f32 %v262, %v298
      %v301 = vrsqrt.pop %v299
      %v302 = vmul.f32 %v301, %v299
      %v303 = vmul.f32 %v302, %v301
      %v304 = vmul.f32 0.5, %v303
      %v305 = vsub.f32 1.5, %v304
      %v306 = vmul.f32 %v301, %v305
      %vm307 = vweird.f32 %v299
      %vm308 = vweird.f32 %v301
      %vm309 = vmor %vm307, %vm308
      %v310 = vsel %vm309, %v301, %v306
      %v311 = vrsqrt.pop %v300
      %v312 = vmul.f32 %v311, %v300
      %v313 = vmul.f32 %v312, %v311
      %v314 = vmul.f32 0.5, %v313
      %v315 = vsub.f32 1.5, %v314
      %v316 = vmul.f32 %v311, %v315
      %vm317 = vweird.f32 %v300
      %vm318 = vweird.f32 %v311
      %vm319 = vmor %vm317, %vm318
      %v320 = vsel %vm319, %v311, %v316
      %v321 = vmul.f32 %v278, %v257
      %v322 = vmul.f32 %v290, %v258
      %v323 = vmul.f32 %v321, %v310
      %v324 = vmul.f32 %v322, %v320
      %v325 = vmul.f32 %v278, %v295
      %v326 = vmul.f32 %v290, %v296
      %v327 = vmul.f32 %v325, %v310
      %v328 = vmul.f32 %v326, %v320
      %v329 = vld [vmem:[%s2] sm:$0xf]
      %v330 = vld [vmem:[%s2 + $0x4] sm:$0xf]
      %v331 = vld [vmem:[%s2 + $0x8] sm:$0xf]
      %v332 = vld [vmem:[%s2 + $0xc] sm:$0xf]
      %v333 = vld [vmem:[%s2 + $0x10] sm:$0xf]
      %v334 = vld [vmem:[%s2 + $0x14] sm:$0xf]
      %v335 = vld [vmem:[%s2 + $0x18] sm:$0xf]
      %v336 = vld [vmem:[%s2 + $0x1c] sm:$0xf]
      %v337 = vld [vmem:[%s2 + $0x20] sm:$0xf]
      %v338 = vld [vmem:[%s2 + $0x24] sm:$0xf]
      %v339 = vld [vmem:[%s2 + $0x28] sm:$0xf]
      %v340 = vld [vmem:[%s2 + $0x2c] sm:$0xf]
      %v341 = vld [vmem:[%s2 + $0x30] sm:$0xf]
      %v342 = vld [vmem:[%s2 + $0x34] sm:$0xf]
      %v343 = vld [vmem:[%s2 + $0x38] sm:$0xf]
      %v344 = vld [vmem:[%s2 + $0x3c] sm:$0xf]
      %v345 = vld [vmem:[%s2 + $0x40] sm:$0xf]
      %v346 = vld [vmem:[%s2 + $0x44] sm:$0xf]
      %v347 = vld [vmem:[%s2 + $0x48] sm:$0xf]
      %v348 = vld [vmem:[%s2 + $0x4c] sm:$0xf]
      %v349 = vld [vmem:[%s2 + $0x50] sm:$0xf]
      %v350 = vld [vmem:[%s2 + $0x54] sm:$0xf]
      %v351 = vld [vmem:[%s2 + $0x58] sm:$0xf]
      %v352 = vld [vmem:[%s2 + $0x5c] sm:$0xf]
      %v353 = vld [vmem:[%s2 + $0x60] sm:$0xf]
      %v354 = vld [vmem:[%s2 + $0x64] sm:$0xf]
      %v355 = vld [vmem:[%s2 + $0x68] sm:$0xf]
      %v356 = vld [vmem:[%s2 + $0x6c] sm:$0xf]
      %v357 = vld [vmem:[%s2 + $0x70] sm:$0xf]
      %v358 = vld [vmem:[%s2 + $0x74] sm:$0xf]
      %v359 = vld [vmem:[%s2 + $0x78] sm:$0xf]
      %v360 = vld [vmem:[%s2 + $0x7c] sm:$0xf]
      %v361 = vld [vmem:[%s2 + $0x80] sm:$0xf]
      %v362 = vld [vmem:[%s2 + $0x84] sm:$0xf]
      %v363 = vld [vmem:[%s2 + $0x88] sm:$0xf]
      %v364 = vld [vmem:[%s2 + $0x8c] sm:$0xf]
      %v365 = vld [vmem:[%s2 + $0x90] sm:$0xf]
      %v366 = vld [vmem:[%s2 + $0x94] sm:$0xf]
      %v367 = vld [vmem:[%s2 + $0x98] sm:$0xf]
      %v368 = vld [vmem:[%s2 + $0x9c] sm:$0xf]
      %v369 = vld [vmem:[%s2 + $0xa0] sm:$0xf]
      %v370 = vld [vmem:[%s2 + $0xa4] sm:$0xf]
      %v371 = vld [vmem:[%s2 + $0xa8] sm:$0xf]
      %v372 = vld [vmem:[%s2 + $0xac] sm:$0xf]
      %v373 = vld [vmem:[%s2 + $0xb0] sm:$0xf]
      %v374 = vld [vmem:[%s2 + $0xb4] sm:$0xf]
      %v375 = vld [vmem:[%s2 + $0xb8] sm:$0xf]
      %v376 = vld [vmem:[%s2 + $0xbc] sm:$0xf]
      %v377 = vld [vmem:[%s2 + $0xc0] sm:$0xf]
      %v378 = vld [vmem:[%s2 + $0xc4] sm:$0xf]
      %v379 = vld [vmem:[%s2 + $0xc8] sm:$0xf]
      %v380 = vld [vmem:[%s2 + $0xcc] sm:$0xf]
      %v381 = vld [vmem:[%s2 + $0xd0] sm:$0xf]
      %v382 = vld [vmem:[%s2 + $0xd4] sm:$0xf]
      %v383 = vld [vmem:[%s2 + $0xd8] sm:$0xf]
      %v384 = vld [vmem:[%s2 + $0xdc] sm:$0xf]
      %v385 = vld [vmem:[%s2 + $0xe0] sm:$0xf]
      %v386 = vld [vmem:[%s2 + $0xe4] sm:$0xf]
      %v387 = vld [vmem:[%s2 + $0xe8] sm:$0xf]
      %v388 = vld [vmem:[%s2 + $0xec] sm:$0xf]
      %v389 = vld [vmem:[%s2 + $0xf0] sm:$0xf]
      %v390 = vld [vmem:[%s2 + $0xf4] sm:$0xf]
      %v391 = vld [vmem:[%s2 + $0xf8] sm:$0xf]
      %v392 = vld [vmem:[%s2 + $0xfc] sm:$0xf]
      %v393 = vld [vmem:[%s2 + $0x100] sm:$0xf]
      %v394 = vld [vmem:[%s2 + $0x104] sm:$0xf]
      %v395 = vld [vmem:[%s2 + $0x108] sm:$0xf]
      %v396 = vld [vmem:[%s2 + $0x10c] sm:$0xf]
      %v397 = vld [vmem:[%s2 + $0x110] sm:$0xf]
      %v398 = vld [vmem:[%s2 + $0x114] sm:$0xf]
      %v399 = vld [vmem:[%s2 + $0x118] sm:$0xf]
      %v400 = vld [vmem:[%s2 + $0x11c] sm:$0xf]
      %v401 = vld [vmem:[%s3] sm:$0x1]
      %404 = vrot.lane.b32.xlu0 %v323, 4
      %v405 = vpop.permute.xlu0 %404
      %406 = vrot.lane.b32.xlu0 %v324, 4
      %v407 = vpop.permute.xlu0 %406
      %vm410 = vcmask 31744
      %v411 = vsel %vm410, 0.0, %v405
      %v412 = vsel %vm410, 0.0, %v407
      %vm413 = vcmask 556032
      %v414 = vsel %vm413, %v411, 0.0
      %v415 = vsel %vm413, %v412, 0.0
      %vm418 = vcmask 1040384
      %v419 = vrot.slane %v414, 7
      %v420 = vrot.slane %v415, 7
      %v421 = vsel %vm418, %v419, %v420
      %v425 = vsel %vm418, 0.0, %v419
      %v426 = vsel %vm418, %v420, 0.0
      %428 = vrot.lane.b32.xlu0 %v425, 60
      %v429 = vpop.permute.xlu0 %428
      %430 = vrot.lane.b32.xlu0 %v421, 60
      %v431 = vpop.permute.xlu0 %430
      %434 = vrot.lane.b32.xlu0 %v425, 120
      %v435 = vpop.permute.xlu0 %434
      %436 = vrot.lane.b32.xlu0 %v421, 120
      %v437 = vpop.permute.xlu0 %436
      %vm441 = vcmask 1046528
      %v442 = vrot.slane %v425, 1
      %v443 = vrot.slane %v421, 1
      %v444 = vsel %vm441, %v442, %v443
      %v445 = vrot.slane %v426, 1
      %v446 = vsel %vm441, %v443, %v445
      %447 = vrot.lane.b32.xlu0 %v444, 64
      %v448 = vpop.permute.xlu0 %447
      %449 = vrot.lane.b32.xlu0 %v446, 64
      %v450 = vpop.permute.xlu0 %449
      %453 = vrot.lane.b32.xlu0 %v444, 124
      %v454 = vpop.permute.xlu0 %453
      %455 = vrot.lane.b32.xlu0 %v446, 124
      %v456 = vpop.permute.xlu0 %455
      %459 = vrot.lane.b32.xlu0 %v444, 56
      %v460 = vpop.permute.xlu0 %459
      %461 = vrot.lane.b32.xlu0 %v446, 56
      %v462 = vpop.permute.xlu0 %461
      %vm465 = vcmask 1045504
      %v466 = vrot.slane %v425, 2
      %v467 = vrot.slane %v421, 2
      %v468 = vsel %vm465, %v466, %v467
      %v469 = vrot.slane %v426, 2
      %v470 = vsel %vm465, %v467, %v469
      %473 = vrot.lane.b32.xlu0 %v468, 60
      %v474 = vpop.permute.xlu0 %473
      %475 = vrot.lane.b32.xlu0 %v470, 60
      %v476 = vpop.permute.xlu0 %475
      %479 = vrot.lane.b32.xlu0 %v468, 120
      %v480 = vpop.permute.xlu0 %479
      %481 = vrot.lane.b32.xlu0 %v470, 120
      %v482 = vpop.permute.xlu0 %481
      %vm485 = vcmask 523264
      %v486 = vsel %vm485, %v425, %v429
      %v487 = vsel %vm485, %v421, %v431
      %v488 = vsel %vm485, %v435, %v448
      %v489 = vsel %vm485, %v437, %v450
      %v490 = vsel %vm485, %v454, %v460
      %v491 = vsel %vm485, %v456, %v462
      %v492 = vsel %vm485, %v468, %v474
      %v493 = vsel %vm485, %v470, %v476
      %496 = vrot.lane.b32.xlu0 %v327, 4
      %v497 = vpop.permute.xlu0 %496
      %498 = vrot.lane.b32.xlu0 %v328, 4
      %v499 = vpop.permute.xlu0 %498
      %v502 = vsel %vm410, 0.0, %v497
      %v503 = vsel %vm410, 0.0, %v499
      %v504 = vsel %vm413, %v502, 0.0
      %v505 = vsel %vm413, %v503, 0.0
      %v508 = vrot.slane %v504, 7
      %v509 = vrot.slane %v505, 7
      %v510 = vsel %vm418, %v508, %v509
      %v514 = vsel %vm418, 0.0, %v508
      %v515 = vsel %vm418, %v509, 0.0
      %517 = vrot.lane.b32.xlu0 %v514, 60
      %v518 = vpop.permute.xlu0 %517
      %519 = vrot.lane.b32.xlu0 %v510, 60
      %v520 = vpop.permute.xlu0 %519
      %523 = vrot.lane.b32.xlu0 %v514, 120
      %v524 = vpop.permute.xlu0 %523
      %525 = vrot.lane.b32.xlu0 %v510, 120
      %v526 = vpop.permute.xlu0 %525
      %v530 = vrot.slane %v514, 1
      %v531 = vrot.slane %v510, 1
      %v532 = vsel %vm441, %v530, %v531
      %v533 = vrot.slane %v515, 1
      %v534 = vsel %vm441, %v531, %v533
      %535 = vrot.lane.b32.xlu0 %v532, 64
      %v536 = vpop.permute.xlu0 %535
      %537 = vrot.lane.b32.xlu0 %v534, 64
      %v538 = vpop.permute.xlu0 %537
      %541 = vrot.lane.b32.xlu0 %v532, 124
      %v542 = vpop.permute.xlu0 %541
      %543 = vrot.lane.b32.xlu0 %v534, 124
      %v544 = vpop.permute.xlu0 %543
      %547 = vrot.lane.b32.xlu0 %v532, 56
      %v548 = vpop.permute.xlu0 %547
      %549 = vrot.lane.b32.xlu0 %v534, 56
      %v550 = vpop.permute.xlu0 %549
      %v553 = vrot.slane %v514, 2
      %v554 = vrot.slane %v510, 2
      %v555 = vsel %vm465, %v553, %v554
      %v556 = vrot.slane %v515, 2
      %v557 = vsel %vm465, %v554, %v556
      %560 = vrot.lane.b32.xlu0 %v555, 60
      %v561 = vpop.permute.xlu0 %560
      %562 = vrot.lane.b32.xlu0 %v557, 60
      %v563 = vpop.permute.xlu0 %562
      %566 = vrot.lane.b32.xlu0 %v555, 120
      %v567 = vpop.permute.xlu0 %566
      %568 = vrot.lane.b32.xlu0 %v557, 120
      %v569 = vpop.permute.xlu0 %568
      %v572 = vsel %vm485, %v514, %v518
      %v573 = vsel %vm485, %v510, %v520
      %v574 = vsel %vm485, %v524, %v536
      %v575 = vsel %vm485, %v526, %v538
      %v576 = vsel %vm485, %v542, %v548
      %v577 = vsel %vm485, %v544, %v550
      %v578 = vsel %vm485, %v555, %v561
      %v579 = vsel %vm485, %v557, %v563
      %582 = vrot.lane.b32.xlu0 %v278, 4
      %v583 = vpop.permute.xlu0 %582
      %584 = vrot.lane.b32.xlu0 %v290, 4
      %v585 = vpop.permute.xlu0 %584
      %v588 = vsel %vm410, 0.0, %v583
      %v589 = vsel %vm410, 0.0, %v585
      %v590 = vsel %vm413, %v588, 0.0
      %v591 = vsel %vm413, %v589, 0.0
      %v594 = vrot.slane %v590, 7
      %v595 = vrot.slane %v591, 7
      %v596 = vsel %vm418, %v594, %v595
      %v600 = vsel %vm418, 0.0, %v594
      %v601 = vsel %vm418, %v595, 0.0
      %603 = vrot.lane.b32.xlu0 %v600, 60
      %v604 = vpop.permute.xlu0 %603
      %605 = vrot.lane.b32.xlu0 %v596, 60
      %v606 = vpop.permute.xlu0 %605
      %609 = vrot.lane.b32.xlu0 %v600, 120
      %v610 = vpop.permute.xlu0 %609
      %611 = vrot.lane.b32.xlu0 %v596, 120
      %v612 = vpop.permute.xlu0 %611
      %v616 = vrot.slane %v600, 1
      %v617 = vrot.slane %v596, 1
      %v618 = vsel %vm441, %v616, %v617
      %v619 = vrot.slane %v601, 1
      %v620 = vsel %vm441, %v617, %v619
      %621 = vrot.lane.b32.xlu0 %v618, 64
      %v622 = vpop.permute.xlu0 %621
      %623 = vrot.lane.b32.xlu0 %v620, 64
      %v624 = vpop.permute.xlu0 %623
      %627 = vrot.lane.b32.xlu0 %v618, 124
      %v628 = vpop.permute.xlu0 %627
      %629 = vrot.lane.b32.xlu0 %v620, 124
      %v630 = vpop.permute.xlu0 %629
      %633 = vrot.lane.b32.xlu0 %v618, 56
      %v634 = vpop.permute.xlu0 %633
      %635 = vrot.lane.b32.xlu0 %v620, 56
      %v636 = vpop.permute.xlu0 %635
      %v639 = vrot.slane %v600, 2
      %v640 = vrot.slane %v596, 2
      %v641 = vsel %vm465, %v639, %v640
      %v642 = vrot.slane %v601, 2
      %v643 = vsel %vm465, %v640, %v642
      %646 = vrot.lane.b32.xlu0 %v641, 60
      %v647 = vpop.permute.xlu0 %646
      %648 = vrot.lane.b32.xlu0 %v643, 60
      %v649 = vpop.permute.xlu0 %648
      %652 = vrot.lane.b32.xlu0 %v641, 120
      %v653 = vpop.permute.xlu0 %652
      %654 = vrot.lane.b32.xlu0 %v643, 120
      %v655 = vpop.permute.xlu0 %654
      %v658 = vsel %vm485, %v600, %v604
      %v659 = vsel %vm485, %v596, %v606
      %v660 = vsel %vm485, %v610, %v622
      %v661 = vsel %vm485, %v612, %v624
      %v662 = vsel %vm485, %v628, %v634
      %v663 = vsel %vm485, %v630, %v636
      %v664 = vsel %vm485, %v641, %v647
      %v665 = vsel %vm485, %v643, %v649
      %v666 = vpack.c.bf16 %v487, %v486
      %v667 = vpack.c.bf16 %v489, %v488
      %v668 = vpack.c.bf16 %v491, %v490
      %v669 = vpack.c.bf16 %v493, %v492
      %v670 = vpack.c.bf16 %v482, %v480
      %v671 = vpack.c.bf16 %v573, %v572
      %v672 = vpack.c.bf16 %v575, %v574
      %v673 = vpack.c.bf16 %v577, %v576
      %v674 = vpack.c.bf16 %v579, %v578
      %v675 = vpack.c.bf16 %v569, %v567
      %v676 = vpack.c.bf16 %v659, %v658
      %v677 = vpack.c.bf16 %v661, %v660
      %v678 = vpack.c.bf16 %v663, %v662
      %v679 = vpack.c.bf16 %v665, %v664
      %v680 = vpack.c.bf16 %v655, %v653
      %v753 = vunpack.c.l.b16 %v329
      %v754 = vunpack.c.l.b16 %v330
      %v755 = vunpack.c.l.b16 %v331
      %v756 = vunpack.c.l.b16 %v332
      %v757 = vunpack.c.l.b16 %v333
      %v758 = vunpack.c.l.b16 %v334
      %v759 = vunpack.c.l.b16 %v335
      %v760 = vunpack.c.l.b16 %v336
      %v761 = vunpack.c.l.b16 %v337
      %v762 = vunpack.c.l.b16 %v338
      %v763 = vunpack.c.l.b16 %v339
      %v764 = vunpack.c.l.b16 %v340
      %v765 = vunpack.c.l.b16 %v341
      %v766 = vunpack.c.l.b16 %v342
      %v767 = vunpack.c.l.b16 %v343
      %v768 = vunpack.c.l.b16 %v344
      %v769 = vunpack.c.l.b16 %v345
      %v770 = vunpack.c.l.b16 %v346
      %v771 = vunpack.c.l.b16 %v347
      %v772 = vunpack.c.l.b16 %v348
      %v773 = vunpack.c.l.b16 %v349
      %v774 = vunpack.c.l.b16 %v350
      %v775 = vunpack.c.l.b16 %v351
      %v776 = vunpack.c.l.b16 %v352
      %v777 = vunpack.c.l.b16 %v353
      %v778 = vunpack.c.l.b16 %v354
      %v779 = vunpack.c.l.b16 %v355
      %v780 = vunpack.c.l.b16 %v356
      %v781 = vunpack.c.l.b16 %v357
      %v782 = vunpack.c.l.b16 %v358
      %v783 = vunpack.c.l.b16 %v359
      %v784 = vunpack.c.l.b16 %v360
      %v785 = vunpack.c.l.b16 %v361
      %v786 = vunpack.c.l.b16 %v362
      %v787 = vunpack.c.l.b16 %v363
      %v788 = vunpack.c.l.b16 %v364
      %v789 = vunpack.c.l.b16 %v365
      %v790 = vunpack.c.l.b16 %v366
      %v791 = vunpack.c.l.b16 %v367
      %v792 = vunpack.c.l.b16 %v368
      %v793 = vunpack.c.l.b16 %v369
      %v794 = vunpack.c.l.b16 %v370
      %v795 = vunpack.c.l.b16 %v371
      %v796 = vunpack.c.l.b16 %v372
      %v797 = vunpack.c.l.b16 %v373
      %v798 = vunpack.c.l.b16 %v374
      %v799 = vunpack.c.l.b16 %v375
      %v800 = vunpack.c.l.b16 %v376
      %v801 = vunpack.c.l.b16 %v377
      %v802 = vunpack.c.l.b16 %v378
      %v803 = vunpack.c.l.b16 %v379
      %v804 = vunpack.c.l.b16 %v380
      %v805 = vunpack.c.l.b16 %v381
      %v806 = vunpack.c.l.b16 %v382
      %v807 = vunpack.c.l.b16 %v383
      %v808 = vunpack.c.l.b16 %v384
      %v809 = vunpack.c.l.b16 %v385
      %v810 = vunpack.c.l.b16 %v386
      %v811 = vunpack.c.l.b16 %v387
      %v812 = vunpack.c.l.b16 %v388
      %v813 = vunpack.c.l.b16 %v389
      %v814 = vunpack.c.l.b16 %v390
      %v815 = vunpack.c.l.b16 %v391
      %v816 = vunpack.c.l.b16 %v392
      %v817 = vunpack.c.l.b16 %v393
      %v818 = vunpack.c.l.b16 %v394
      %v819 = vunpack.c.l.b16 %v395
      %v820 = vunpack.c.l.b16 %v396
      %v821 = vunpack.c.l.b16 %v397
      %v822 = vunpack.c.l.b16 %v398
      %v823 = vunpack.c.l.b16 %v399
      %v824 = vunpack.c.l.b16 %v400
      %v825 = vpack.c.b16 %v754, %v753
      %v826 = vpack.c.b16 %v756, %v755
      %v827 = vpack.c.b16 %v758, %v757
      %v828 = vpack.c.b16 %v760, %v759
      %v829 = vpack.c.b16 %v762, %v761
      %v830 = vpack.c.b16 %v764, %v763
      %v831 = vpack.c.b16 %v766, %v765
      %v832 = vpack.c.b16 %v768, %v767
      %v833 = vpack.c.b16 %v770, %v769
      %v834 = vpack.c.b16 %v772, %v771
      %v835 = vpack.c.b16 %v774, %v773
      %v836 = vpack.c.b16 %v776, %v775
      %v837 = vpack.c.b16 %v778, %v777
      %v838 = vpack.c.b16 %v780, %v779
      %v839 = vpack.c.b16 %v782, %v781
      %v840 = vpack.c.b16 %v784, %v783
      %v841 = vpack.c.b16 %v786, %v785
      %v842 = vpack.c.b16 %v788, %v787
      %v843 = vpack.c.b16 %v790, %v789
      %v844 = vpack.c.b16 %v792, %v791
      %v845 = vpack.c.b16 %v794, %v793
      %v846 = vpack.c.b16 %v796, %v795
      %v847 = vpack.c.b16 %v798, %v797
      %v848 = vpack.c.b16 %v800, %v799
      %v849 = vpack.c.b16 %v802, %v801
      %v850 = vpack.c.b16 %v804, %v803
      %v851 = vpack.c.b16 %v806, %v805
      %v852 = vpack.c.b16 %v808, %v807
      %v853 = vpack.c.b16 %v810, %v809
      %v854 = vpack.c.b16 %v812, %v811
      %v855 = vpack.c.b16 %v814, %v813
      %v856 = vpack.c.b16 %v816, %v815
      %v857 = vpack.c.b16 %v818, %v817
      %v858 = vpack.c.b16 %v820, %v819
      %v859 = vpack.c.b16 %v822, %v821
      %v860 = vpack.c.b16 %v824, %v823
      %v898 = vsel %vm485, %v670, 0
      %v901 = vsel %vm485, %v675, 0
      %v904 = vsel %vm485, %v680, 0
      %906 = vmatpush.bf16.msra.mxu0 %v832
      %907 = vmatpush.bf16.msra.mxu0 %v831
      %908 = vmatpush.bf16.msra.mxu0 %v830
      %909 = vmatpush.bf16.msra.mxu0 %v829
      %910 = vmatpush.bf16.msra.mxu0 %v828
      %911 = vmatpush.bf16.msra.mxu0 %v827
      %912 = vmatpush.bf16.msra.mxu0 %v826
      %913 = vmatpush.bf16.msra.mxu0 %v825
      %914 = vmatmul.bf16.gmra.mxu0 %v666
      %v915 = vpop.f32.mrf.mxu0
      %v916 = vadd.f32 0.0, %v915
      %v917 = vpop.f32.mrf.mxu0
      %v918 = vadd.f32 0.0, %v917
      %919 = vmatmul.bf16.gmra.mxu0 %v671
      %v920 = vpop.f32.mrf.mxu0
      %v921 = vadd.f32 0.0, %v920
      %v922 = vpop.f32.mrf.mxu0
      %v923 = vadd.f32 0.0, %v922
      %924 = vmatmul.bf16.gmra.mxu0 %v676
      %v925 = vpop.f32.mrf.mxu0
      %v926 = vadd.f32 0.0, %v925
      %v927 = vpop.f32.mrf.mxu0
      %v928 = vadd.f32 0.0, %v927
      %929 = vdwg.mxu0
      %930 = vmatpush.bf16.msra.mxu0 %v840
      %931 = vmatpush.bf16.msra.mxu0 %v839
      %932 = vmatpush.bf16.msra.mxu0 %v838
      %933 = vmatpush.bf16.msra.mxu0 %v837
      %934 = vmatpush.bf16.msra.mxu0 %v836
      %935 = vmatpush.bf16.msra.mxu0 %v835
      %936 = vmatpush.bf16.msra.mxu0 %v834
      %937 = vmatpush.bf16.msra.mxu0 %v833
      %938 = vmatmul.bf16.gmra.mxu0 %v667
      %v939 = vpop.f32.mrf.mxu0
      %v940 = vadd.f32 %v916, %v939
      %v941 = vpop.f32.mrf.mxu0
      %v942 = vadd.f32 %v918, %v941
      %943 = vmatmul.bf16.gmra.mxu0 %v672
      %v944 = vpop.f32.mrf.mxu0
      %v945 = vadd.f32 %v921, %v944
      %v946 = vpop.f32.mrf.mxu0
      %v947 = vadd.f32 %v923, %v946
      %948 = vmatmul.bf16.gmra.mxu0 %v677
      %v949 = vpop.f32.mrf.mxu0
      %v950 = vadd.f32 %v926, %v949
      %v951 = vpop.f32.mrf.mxu0
      %v952 = vadd.f32 %v928, %v951
      %953 = vdwg.mxu0
      %954 = vmatpush.bf16.msra.mxu0 %v848
      %955 = vmatpush.bf16.msra.mxu0 %v847
      %956 = vmatpush.bf16.msra.mxu0 %v846
      %957 = vmatpush.bf16.msra.mxu0 %v845
      %958 = vmatpush.bf16.msra.mxu0 %v844
      %959 = vmatpush.bf16.msra.mxu0 %v843
      %960 = vmatpush.bf16.msra.mxu0 %v842
      %961 = vmatpush.bf16.msra.mxu0 %v841
      %962 = vmatmul.bf16.gmra.mxu0 %v668
      %v963 = vpop.f32.mrf.mxu0
      %v964 = vadd.f32 %v940, %v963
      %v965 = vpop.f32.mrf.mxu0
      %v966 = vadd.f32 %v942, %v965
      %967 = vmatmul.bf16.gmra.mxu0 %v673
      %v968 = vpop.f32.mrf.mxu0
      %v969 = vadd.f32 %v945, %v968
      %v970 = vpop.f32.mrf.mxu0
      %v971 = vadd.f32 %v947, %v970
      %972 = vmatmul.bf16.gmra.mxu0 %v678
      %v973 = vpop.f32.mrf.mxu0
      %v974 = vadd.f32 %v950, %v973
      %v975 = vpop.f32.mrf.mxu0
      %v976 = vadd.f32 %v952, %v975
      %977 = vdwg.mxu0
      %978 = vmatpush.bf16.msra.mxu0 %v856
      %979 = vmatpush.bf16.msra.mxu0 %v855
      %980 = vmatpush.bf16.msra.mxu0 %v854
      %981 = vmatpush.bf16.msra.mxu0 %v853
      %982 = vmatpush.bf16.msra.mxu0 %v852
      %983 = vmatpush.bf16.msra.mxu0 %v851
      %984 = vmatpush.bf16.msra.mxu0 %v850
      %985 = vmatpush.bf16.msra.mxu0 %v849
      %986 = vmatmul.bf16.gmra.mxu0 %v669
      %v987 = vpop.f32.mrf.mxu0
      %v988 = vadd.f32 %v964, %v987
      %v989 = vpop.f32.mrf.mxu0
      %v990 = vadd.f32 %v966, %v989
      %991 = vmatmul.bf16.gmra.mxu0 %v674
      %v992 = vpop.f32.mrf.mxu0
      %v993 = vadd.f32 %v969, %v992
      %v994 = vpop.f32.mrf.mxu0
      %v995 = vadd.f32 %v971, %v994
      %996 = vmatmul.bf16.gmra.mxu0 %v679
      %v997 = vpop.f32.mrf.mxu0
      %v998 = vadd.f32 %v974, %v997
      %v999 = vpop.f32.mrf.mxu0
      %v1000 = vadd.f32 %v976, %v999
      %1001 = vdwg.mxu0
      %1002 = vmatpush.bf16.msra.mxu0 0
      %1003 = vmatpush.bf16.msra.mxu0 0
      %1004 = vmatpush.bf16.msra.mxu0 0
      %1005 = vmatpush.bf16.msra.mxu0 0
      %1006 = vmatpush.bf16.msra.mxu0 %v860
      %1007 = vmatpush.bf16.msra.mxu0 %v859
      %1008 = vmatpush.bf16.msra.mxu0 %v858
      %1009 = vmatpush.bf16.msra.mxu0 %v857
      %1010 = vmatmul.bf16.gmra.mxu0 %v898
      %v1011 = vpop.f32.mrf.mxu0
      %v1012 = vadd.f32 %v988, %v1011
      %v1013 = vpop.f32.mrf.mxu0
      %v1014 = vadd.f32 %v990, %v1013
      %1015 = vmatmul.bf16.gmra.mxu0 %v901
      %v1016 = vpop.f32.mrf.mxu0
      %v1017 = vadd.f32 %v993, %v1016
      %v1018 = vpop.f32.mrf.mxu0
      %v1019 = vadd.f32 %v995, %v1018
      %1020 = vmatmul.bf16.gmra.mxu0 %v904
      %v1021 = vpop.f32.mrf.mxu0
      %v1022 = vadd.f32 %v998, %v1021
      %v1023 = vpop.f32.mrf.mxu0
      %v1024 = vadd.f32 %v1000, %v1023
      %1025 = vdwg.mxu0
      %v1026 = vmul.f32 %v1012, %v1012
      %v1027 = vmul.f32 %v1014, %v1014
      %v1028 = vmul.f32 %v1017, %v1017
      %v1029 = vmul.f32 %v1019, %v1019
      %v1030 = vadd.f32 %v1026, %v1028
      %v1031 = vadd.f32 %v1027, %v1029
      %v1032 = vrsqrt.pop %v1030
      %v1033 = vmul.f32 %v1032, %v1030
      %v1034 = vmul.f32 %v1033, %v1032
      %v1035 = vmul.f32 0.5, %v1034
      %v1036 = vsub.f32 1.5, %v1035
      %v1037 = vmul.f32 %v1032, %v1036
      %v1038 = vmul.f32 %v1030, %v1037
      %vm1039 = vcmp.eq.f32.partialorder %v1030, inf
      %v1040 = vsel %vm1039, %v1030, %v1038
      %vm1041 = vcmp.eq.f32.partialorder %v1030, 0.0
      %v1042 = vand.u32 %v1030, 2147483648
      %v1043 = vsel %vm1041, %v1042, %v1040
      %v1044 = vrsqrt.pop %v1031
      %v1045 = vmul.f32 %v1044, %v1031
      %v1046 = vmul.f32 %v1045, %v1044
      %v1047 = vmul.f32 0.5, %v1046
      %v1048 = vsub.f32 1.5, %v1047
      %v1049 = vmul.f32 %v1044, %v1048
      %v1050 = vmul.f32 %v1031, %v1049
      %vm1051 = vcmp.eq.f32.partialorder %v1031, inf
      %v1052 = vsel %vm1051, %v1031, %v1050
      %vm1053 = vcmp.eq.f32.partialorder %v1031, 0.0
      %v1054 = vand.u32 %v1031, 2147483648
      %v1055 = vsel %vm1053, %v1054, %v1052
      %v1056 = vmul.f32 %v1043, 0.5
      %v1057 = vmul.f32 %v1055, 0.5
      %v1058 = vmul.f32 %v1022, 0.5
      %v1059 = vmul.f32 %v1024, 0.5
      %v1060 = vadd.f32 %v1056, %v1058
      %v1061 = vadd.f32 %v1057, %v1059
      %v1063 = vperm.slane %v401, 0
      %v1065 = vadd.f32 %v1060, %v1063
      %v1066 = vadd.f32 %v1061, %v1063
      %1067 = vst [vmem:[%s251] sm:$0xff] %v1012
      %1068 = vst [vmem:[%s251 + $0x8] sm:$0xff] %v1014
      %1069 = vst [vmem:[%s251 + $0x10] sm:$0xff] %v1017
      %1070 = vst [vmem:[%s251 + $0x18] sm:$0xff] %v1019
      %1071 = vst [vmem:[%s251 + $0x20] sm:$0xff] %v1065
      %1072 = vst [vmem:[%s251 + $0x28] sm:$0xff] %v1066
      %v1073 = vadd.f32 %v1065, %v1066
      %v1074 = vrot.slane %v1073, 4
      %v1075 = vadd.f32 %v1073, %v1074
      %v1076 = vrot.slane %v1075, 2
      %v1077 = vadd.f32 %v1075, %v1076
      %v1078 = vrot.slane %v1077, 1
      %v1079 = vadd.f32 %v1077, %v1078
      %v1080 = vmul.f32 %v1065, %v1065
      %v1081 = vmul.f32 %v1066, %v1066
      %v1082 = vadd.f32 %v1080, %v1081
      %v1083 = vrot.slane %v1082, 4
      %v1084 = vadd.f32 %v1082, %v1083
      %v1085 = vrot.slane %v1084, 2
      %v1086 = vadd.f32 %v1084, %v1085
      %v1087 = vrot.slane %v1086, 1
      %v1088 = vadd.f32 %v1086, %v1087
      %v1089 = vsel %vm418, %v1079, %v1088
      %1090 = vst [vmem:[%s255] sm:$0x3] %v1089
      %p1091 = scmp.lt.s32.totalorder %s17, 1
      %s1092 = scalar_select %p1091, %s17, 1
      %s1093 = smul.addr %s1092, 6
      %s1094 = smul.addr %s1093, 8
      %s1095 = scalar_lea.vmem %s4, %s1094
      %p1096 = scmp.lt.s32.totalorder %s17, 1
      %s1097 = scalar_select %p1096, %s17, 1
      %s1098 = smul.addr %s1097, 2
      %s1099 = scalar_lea.vmem %s5, %s1098
      // Predicated region
      $region37: #{complex_conv_u_block2.3} parent=35 // pred_check
        %p1100 = pneg %p129
      $region38: #{complex_conv_u_block2.3} parent=35 // pred_check_branch
        %1102 = sbr.rel (%p1100) target = $region40
      $region39: #{complex_conv_u_block2.3} parent=35 // pred_region
        _
      $region40: #{complex_conv_u_block2.3} parent=35 // pred_fallthru
        _
      // Predicated region
      $region41: #{complex_conv_u_block2.3} parent=35 // pred_check
        %p1103 = pneg %p155
      $region42: #{complex_conv_u_block2.3} parent=35 // pred_check_branch
        %1105 = sbr.rel (%p1103) target = $region44
      $region43: #{complex_conv_u_block2.3} parent=35 // pred_region
        _
      $region44: #{complex_conv_u_block2.3} parent=35 // pred_fallthru
        _
    $region36: #{complex_conv_u_block2.3} parent=5 // pred_fallthru
      _
    %p1106 = scmp.le.s32.totalorder 2, %s12
    // Predicated region
    $region45: #{complex_conv_u_block2.3} parent=5 // pred_check
      %p1107 = pneg %p1106
    $region46: #{complex_conv_u_block2.3} parent=5 // pred_check_branch
      %1109 = sbr.rel (%p1107) target = $region48
    $region47: #{complex_conv_u_block2.3} parent=5 // pred_region
      %s1110 = ssub.s32 %s12, 2
      // Predicated region
      $region49: #{complex_conv_u_block2.3} parent=47 // pred_check
        %p1111 = pneg %p135
      $region50: #{complex_conv_u_block2.3} parent=47 // pred_check_branch
        %1113 = sbr.rel (%p1111) target = $region52
      $region51: #{complex_conv_u_block2.3} parent=47 // pred_region
        %p1114 = scmp.lt.s32.totalorder %s18, 1
        %s1115 = scalar_select %p1114, %s18, 1
        %s1116 = smul.addr %s1115, 6
        %s1117 = smul.addr %s1116, 8
        %s1118 = scalar_lea.vmem %s4, %s1117
      $region52: #{complex_conv_u_block2.3} parent=47 // pred_fallthru
        _
      // Predicated region
      $region53: #{complex_conv_u_block2.3} parent=47 // pred_check
        %p1119 = pneg %p161
      $region54: #{complex_conv_u_block2.3} parent=47 // pred_check_branch
        %1121 = sbr.rel (%p1119) target = $region56
      $region55: #{complex_conv_u_block2.3} parent=47 // pred_region
        %p1122 = scmp.lt.s32.totalorder %s18, 1
        %s1123 = scalar_select %p1122, %s18, 1
        %s1124 = smul.addr %s1123, 2
        %s1125 = scalar_lea.vmem %s5, %s1124
      $region56: #{complex_conv_u_block2.3} parent=47 // pred_fallthru
        _
    $region48: #{complex_conv_u_block2.3} parent=5 // pred_fallthru
      _
  $region6: #{complex_conv_u_block2.3} parent=0 // loop_footer
    %s16 = sadd.s32 1, %s12
  $region7: #{complex_conv_u_block2.3} parent=0 // loop_footer_branch
    %11 = sbr.rel target = $region3
  $region8: #{complex_conv_u_block2.3} parent=0 // loop_exit
    _

// kernel: complex_conv_u_block2.4
$region0: #{complex_conv_u_block2.4}
  #allocation0 [shape = 'u32[]', space=smem, size = 0x4, offset = 0x4, fixed_abs, tag = 'smem constant byte address 0x4 - core index']
  #allocation1 [shape = 'u32[72,128]{1,0:T(1,128)}', space=vmem, size = 0x9000, scoped, tag = 'internal scratch']
  %s0 = inlined_call_operand.vmem [shape: f32[2,48,128], index: 0, kind: input, shape index: {}]
  %s1 = inlined_call_operand.vmem [shape: f32[1,128], index: 1, kind: input, shape index: {}]
  %s2 = inlined_call_operand.vmem [shape: f32[1,128], index: 2, kind: input, shape index: {}]
  %s3 = inlined_call_operand.vmem [shape: f32[1,128], index: 3, kind: input, shape index: {}]
  %s4 = inlined_call_operand.vmem [shape: f32[1,128], index: 4, kind: input, shape index: {}]
  %s5 = inlined_call_operand.vmem [shape: bf16[1152,128], index: 5, kind: input, shape index: {}]
  %s6 = inlined_call_operand.vmem [shape: f32[1,128], index: 6, kind: input, shape index: {}]
  %s7 = inlined_call_operand.vmem [shape: f32[2,48,128], index: 7, kind: output, shape index: {0}]
  %s8 = inlined_call_operand.vmem [shape: f32[2,2,128], index: 8, kind: output, shape index: {1}]
  %9 = xla_tuple %s7, %s8
  %s10 = sld [smem:[#allocation0]]
  $region69: #{complex_conv_u_block2.4} parent=0
    _
  %s12 = ssub.s32 1, %s10
  %s13 = scalar_select 0, %s12, %s10
  loop: start=0, step=1, limit=4
  $region2: #{complex_conv_u_block2.4} parent=0 // loop_pre_header
    _
  $region3: #{complex_conv_u_block2.4} parent=0 // loop_header
    %s15 = sphi 0, %s19
    %p16 = scmp.ge.s32.totalorder %s15, 4
    %s25 = sphi 0, %s27
    %s28 = sphi 0, %s25
    %s29 = sphi 0, %s28
    %s45 = sphi 0, %s29
    %s49 = sphi 0, %s49
    %s51 = sphi 0, %s49
    %s52 = sphi 0, %s51
    %s66 = sphi 0, %s52
    %s70 = sphi 0, %s70
    %s72 = sphi 0, %s70
    %s73 = sphi 0, %s72
    %s87 = sphi 0, %s73
    %s91 = sphi 0, %s91
    %s93 = sphi 0, %s91
    %s94 = sphi 0, %s93
    %s108 = sphi 0, %s94
    %s112 = sphi 0, %s112
    %s114 = sphi 0, %s112
    %s115 = sphi 0, %s114
    %s129 = sphi 0, %s115
    %s133 = sphi 0, %s133
    %s135 = sphi 0, %s133
    %s136 = sphi 0, %s135
    %s150 = sphi 0, %s136
    %s154 = sphi 0, %s154
    %s156 = sphi 0, %s154
    %s157 = sphi 0, %s156
    %s171 = sphi 0, %s157
    %s177 = sphi 0, %s179
    %s180 = sphi 0, %s177
    %s181 = sphi 0, %s180
    %s197 = sphi 0, %s181
    %s203 = sphi 0, %s205
    %s206 = sphi 0, %s203
    %s207 = sphi 0, %s206
    %s223 = sphi 0, %s207
  $region4: #{complex_conv_u_block2.4} parent=0 // loop_header_branch
    %18 = sbr.rel (%p16) target = $region8
  $region5: #{complex_conv_u_block2.4} parent=0 // loop_body
    %s20 = ssub.s32 %s15, 1
    %s21 = ssub.s32 %s15, 2
    %s22 = sadd.s32 %s15, 1
    %s23 = ssub.s32 %s15, %s22
    %p24 = scmp.eq.s32.totalorder %s23, 0
    %s26 = sadd.s32 %s25, 1
    %s27 = scalar_select %p24, %s25, %s26
    %p30 = pneg %p24
    %p31 = scmp.eq.s32.totalorder %s15, 1
    %p32 = por %p30, %p31
    %p33 = scmp.ne.s32.totalorder %s25, %s28
    %p34 = scmp.eq.s32.totalorder %s15, 0
    %p35 = por %p33, %p34
    %p36 = scmp.ne.s32.totalorder %s25, %s28
    %p37 = scmp.eq.s32.totalorder %s20, 1
    %p38 = por %p36, %p37
    %p39 = scmp.ne.s32.totalorder %s28, %s29
    %p40 = scmp.eq.s32.totalorder %s20, 0
    %p41 = por %p39, %p40
    %p42 = scmp.ne.s32.totalorder %s28, %s29
    %p43 = scmp.eq.s32.totalorder %s21, 1
    %p44 = por %p42, %p43
    %p46 = scmp.ne.s32.totalorder %s29, %s45
    %p47 = scmp.eq.s32.totalorder %s21, 0
    %p48 = por %p46, %p47
    %s50 = sadd.s32 %s49, 1
    %p53 = scmp.eq.s32.totalorder %s15, 1
    %p54 = scmp.ne.s32.totalorder %s49, %s51
    %p55 = scmp.eq.s32.totalorder %s15, 0
    %p56 = por %p54, %p55
    %p57 = scmp.ne.s32.totalorder %s49, %s51
    %p58 = scmp.eq.s32.totalorder %s20, 1
    %p59 = por %p57, %p58
    %p60 = scmp.ne.s32.totalorder %s51, %s52
    %p61 = scmp.eq.s32.totalorder %s20, 0
    %p62 = por %p60, %p61
    %p63 = scmp.ne.s32.totalorder %s51, %s52
    %p64 = scmp.eq.s32.totalorder %s21, 1
    %p65 = por %p63, %p64
    %p67 = scmp.ne.s32.totalorder %s52, %s66
    %p68 = scmp.eq.s32.totalorder %s21, 0
    %p69 = por %p67, %p68
    %s71 = sadd.s32 %s70, 1
    %p74 = scmp.eq.s32.totalorder %s15, 1
    %p75 = scmp.ne.s32.totalorder %s70, %s72
    %p76 = scmp.eq.s32.totalorder %s15, 0
    %p77 = por %p75, %p76
    %p78 = scmp.ne.s32.totalorder %s70, %s72
    %p79 = scmp.eq.s32.totalorder %s20, 1
    %p80 = por %p78, %p79
    %p81 = scmp.ne.s32.totalorder %s72, %s73
    %p82 = scmp.eq.s32.totalorder %s20, 0
    %p83 = por %p81, %p82
    %p84 = scmp.ne.s32.totalorder %s72, %s73
    %p85 = scmp.eq.s32.totalorder %s21, 1
    %p86 = por %p84, %p85
    %p88 = scmp.ne.s32.totalorder %s73, %s87
    %p89 = scmp.eq.s32.totalorder %s21, 0
    %p90 = por %p88, %p89
    %s92 = sadd.s32 %s91, 1
    %p95 = scmp.eq.s32.totalorder %s15, 1
    %p96 = scmp.ne.s32.totalorder %s91, %s93
    %p97 = scmp.eq.s32.totalorder %s15, 0
    %p98 = por %p96, %p97
    %p99 = scmp.ne.s32.totalorder %s91, %s93
    %p100 = scmp.eq.s32.totalorder %s20, 1
    %p101 = por %p99, %p100
    %p102 = scmp.ne.s32.totalorder %s93, %s94
    %p103 = scmp.eq.s32.totalorder %s20, 0
    %p104 = por %p102, %p103
    %p105 = scmp.ne.s32.totalorder %s93, %s94
    %p106 = scmp.eq.s32.totalorder %s21, 1
    %p107 = por %p105, %p106
    %p109 = scmp.ne.s32.totalorder %s94, %s108
    %p110 = scmp.eq.s32.totalorder %s21, 0
    %p111 = por %p109, %p110
    %s113 = sadd.s32 %s112, 1
    %p116 = scmp.eq.s32.totalorder %s15, 1
    %p117 = scmp.ne.s32.totalorder %s112, %s114
    %p118 = scmp.eq.s32.totalorder %s15, 0
    %p119 = por %p117, %p118
    %p120 = scmp.ne.s32.totalorder %s112, %s114
    %p121 = scmp.eq.s32.totalorder %s20, 1
    %p122 = por %p120, %p121
    %p123 = scmp.ne.s32.totalorder %s114, %s115
    %p124 = scmp.eq.s32.totalorder %s20, 0
    %p125 = por %p123, %p124
    %p126 = scmp.ne.s32.totalorder %s114, %s115
    %p127 = scmp.eq.s32.totalorder %s21, 1
    %p128 = por %p126, %p127
    %p130 = scmp.ne.s32.totalorder %s115, %s129
    %p131 = scmp.eq.s32.totalorder %s21, 0
    %p132 = por %p130, %p131
    %s134 = sadd.s32 %s133, 1
    %p137 = scmp.eq.s32.totalorder %s15, 1
    %p138 = scmp.ne.s32.totalorder %s133, %s135
    %p139 = scmp.eq.s32.totalorder %s15, 0
    %p140 = por %p138, %p139
    %p141 = scmp.ne.s32.totalorder %s133, %s135
    %p142 = scmp.eq.s32.totalorder %s20, 1
    %p143 = por %p141, %p142
    %p144 = scmp.ne.s32.totalorder %s135, %s136
    %p145 = scmp.eq.s32.totalorder %s20, 0
    %p146 = por %p144, %p145
    %p147 = scmp.ne.s32.totalorder %s135, %s136
    %p148 = scmp.eq.s32.totalorder %s21, 1
    %p149 = por %p147, %p148
    %p151 = scmp.ne.s32.totalorder %s136, %s150
    %p152 = scmp.eq.s32.totalorder %s21, 0
    %p153 = por %p151, %p152
    %s155 = sadd.s32 %s154, 1
    %p158 = scmp.eq.s32.totalorder %s15, 1
    %p159 = scmp.ne.s32.totalorder %s154, %s156
    %p160 = scmp.eq.s32.totalorder %s15, 0
    %p161 = por %p159, %p160
    %p162 = scmp.ne.s32.totalorder %s154, %s156
    %p163 = scmp.eq.s32.totalorder %s20, 1
    %p164 = por %p162, %p163
    %p165 = scmp.ne.s32.totalorder %s156, %s157
    %p166 = scmp.eq.s32.totalorder %s20, 0
    %p167 = por %p165, %p166
    %p168 = scmp.ne.s32.totalorder %s156, %s157
    %p169 = scmp.eq.s32.totalorder %s21, 1
    %p170 = por %p168, %p169
    %p172 = scmp.ne.s32.totalorder %s157, %s171
    %p173 = scmp.eq.s32.totalorder %s21, 0
    %p174 = por %p172, %p173
    %s175 = ssub.s32 %s15, %s22
    %p176 = scmp.eq.s32.totalorder %s175, 0
    %s178 = sadd.s32 %s177, 1
    %s179 = scalar_select %p176, %s177, %s178
    %p182 = pneg %p176
    %p183 = scmp.eq.s32.totalorder %s15, 1
    %p184 = por %p182, %p183
    %p185 = scmp.ne.s32.totalorder %s177, %s180
    %p186 = scmp.eq.s32.totalorder %s15, 0
    %p187 = por %p185, %p186
    %p188 = scmp.ne.s32.totalorder %s177, %s180
    %p189 = scmp.eq.s32.totalorder %s20, 1
    %p190 = por %p188, %p189
    %p191 = scmp.ne.s32.totalorder %s180, %s181
    %p192 = scmp.eq.s32.totalorder %s20, 0
    %p193 = por %p191, %p192
    %p194 = scmp.ne.s32.totalorder %s180, %s181
    %p195 = scmp.eq.s32.totalorder %s21, 1
    %p196 = por %p194, %p195
    %p198 = scmp.ne.s32.totalorder %s181, %s197
    %p199 = scmp.eq.s32.totalorder %s21, 0
    %p200 = por %p198, %p199
    %s201 = ssub.s32 %s15, %s22
    %p202 = scmp.eq.s32.totalorder %s201, 0
    %s204 = sadd.s32 %s203, 1
    %s205 = scalar_select %p202, %s203, %s204
    %p208 = pneg %p202
    %p209 = scmp.eq.s32.totalorder %s15, 1
    %p210 = por %p208, %p209
    %p211 = scmp.ne.s32.totalorder %s203, %s206
    %p212 = scmp.eq.s32.totalorder %s15, 0
    %p213 = por %p211, %p212
    %p214 = scmp.ne.s32.totalorder %s203, %s206
    %p215 = scmp.eq.s32.totalorder %s20, 1
    %p216 = por %p214, %p215
    %p217 = scmp.ne.s32.totalorder %s206, %s207
    %p218 = scmp.eq.s32.totalorder %s20, 0
    %p219 = por %p217, %p218
    %p220 = scmp.ne.s32.totalorder %s206, %s207
    %p221 = scmp.eq.s32.totalorder %s21, 1
    %p222 = por %p220, %p221
    %p224 = scmp.ne.s32.totalorder %s207, %s223
    %p225 = scmp.eq.s32.totalorder %s21, 0
    %p226 = por %p224, %p225
    %p227 = scmp.le.s32.totalorder 1, %s15
    %p228 = scmp.lt.s32.totalorder %s15, 3
    %p229 = pnand %p227, %p228
    %p230 = pneg %p229
    // Predicated region
    $region9: #{complex_conv_u_block2.4} parent=5 // pred_check
      _
    $region10: #{complex_conv_u_block2.4} parent=5 // pred_check_branch
      %232 = sbr.rel (%p229) target = $region12
    $region11: #{complex_conv_u_block2.4} parent=5 // pred_region
      %s233 = ssub.s32 %s15, 1
      // Predicated region
      $region13: #{complex_conv_u_block2.4} parent=11 // pred_check
        %p234 = pneg %p62
      $region14: #{complex_conv_u_block2.4} parent=11 // pred_check_branch
        %236 = sbr.rel (%p234) target = $region16
      $region15: #{complex_conv_u_block2.4} parent=11 // pred_region
        _
      $region16: #{complex_conv_u_block2.4} parent=11 // pred_fallthru
        _
      // Predicated region
      $region17: #{complex_conv_u_block2.4} parent=11 // pred_check
        %p237 = pneg %p83
      $region18: #{complex_conv_u_block2.4} parent=11 // pred_check_branch
        %239 = sbr.rel (%p237) target = $region20
      $region19: #{complex_conv_u_block2.4} parent=11 // pred_region
        _
      $region20: #{complex_conv_u_block2.4} parent=11 // pred_fallthru
        _
      // Predicated region
      $region21: #{complex_conv_u_block2.4} parent=11 // pred_check
        %p240 = pneg %p104
      $region22: #{complex_conv_u_block2.4} parent=11 // pred_check_branch
        %242 = sbr.rel (%p240) target = $region24
      $region23: #{complex_conv_u_block2.4} parent=11 // pred_region
        _
      $region24: #{complex_conv_u_block2.4} parent=11 // pred_fallthru
        _
      // Predicated region
      $region25: #{complex_conv_u_block2.4} parent=11 // pred_check
        %p243 = pneg %p125
      $region26: #{complex_conv_u_block2.4} parent=11 // pred_check_branch
        %245 = sbr.rel (%p243) target = $region28
      $region27: #{complex_conv_u_block2.4} parent=11 // pred_region
        _
      $region28: #{complex_conv_u_block2.4} parent=11 // pred_fallthru
        _
      // Predicated region
      $region29: #{complex_conv_u_block2.4} parent=11 // pred_check
        %p246 = pneg %p146
      $region30: #{complex_conv_u_block2.4} parent=11 // pred_check_branch
        %248 = sbr.rel (%p246) target = $region32
      $region31: #{complex_conv_u_block2.4} parent=11 // pred_region
        _
      $region32: #{complex_conv_u_block2.4} parent=11 // pred_fallthru
        _
      // Predicated region
      $region33: #{complex_conv_u_block2.4} parent=11 // pred_check
        %p249 = pneg %p167
      $region34: #{complex_conv_u_block2.4} parent=11 // pred_check_branch
        %251 = sbr.rel (%p249) target = $region36
      $region35: #{complex_conv_u_block2.4} parent=11 // pred_region
        _
      $region36: #{complex_conv_u_block2.4} parent=11 // pred_fallthru
        _
    $region12: #{complex_conv_u_block2.4} parent=5 // pred_fallthru
      _
    %p252 = scmp.lt.s32.totalorder %s15, 2
    // Predicated region
    $region37: #{complex_conv_u_block2.4} parent=5 // pred_check
      %p253 = pneg %p252
    $region38: #{complex_conv_u_block2.4} parent=5 // pred_check_branch
      %255 = sbr.rel (%p253) target = $region40
    $region39: #{complex_conv_u_block2.4} parent=5 // pred_region
      // Predicated region
      $region41: #{complex_conv_u_block2.4} parent=39 // pred_check
        %p256 = pneg %p35
      $region42: #{complex_conv_u_block2.4} parent=39 // pred_check_branch
        %258 = sbr.rel (%p256) target = $region44
      $region43: #{complex_conv_u_block2.4} parent=39 // pred_region
        %p259 = scmp.lt.s32.totalorder %s15, 1
        %s260 = scalar_select %p259, %s15, 1
        %s261 = smul.addr %s260, 6
        %s262 = smul.addr %s261, 8
        %s263 = scalar_lea.vmem %s0, %s262
      $region44: #{complex_conv_u_block2.4} parent=39 // pred_fallthru
        _
    $region40: #{complex_conv_u_block2.4} parent=5 // pred_fallthru
      _
    %p264 = scmp.le.s32.totalorder 1, %s15
    %p265 = scmp.lt.s32.totalorder %s15, 3
    %p266 = pnand %p264, %p265
    %p267 = pneg %p266
    // Predicated region
    $region45: #{complex_conv_u_block2.4} parent=5 // pred_check
      _
    $region46: #{complex_conv_u_block2.4} parent=5 // pred_check_branch
      %269 = sbr.rel (%p266) target = $region48
    $region47: #{complex_conv_u_block2.4} parent=5 // pred_region
      %s270 = ssub.s32 %s15, 1
      %p271 = scmp.lt.s32.totalorder %s20, 1
      %s272 = scalar_select %p271, %s20, 1
      %s273 = smul.addr %s272, 6
      %s274 = smul.addr %s273, 8
      %s275 = scalar_lea.vmem %s0, %s274
      %p276 = pneg %p41
      %p277 = pneg %p38
      %p278 = pneg %p62
      %p279 = pneg %p59
      %p280 = pneg %p83
      %p281 = pneg %p80
      %p282 = pneg %p104
      %p283 = pneg %p101
      %p284 = pneg %p125
      %p285 = pneg %p122
      %p286 = pneg %p146
      %p287 = pneg %p143
      %p288 = pneg %p167
      %p289 = pneg %p164
      %p290 = pneg %p193
      %p291 = pneg %p190
      %p292 = scmp.lt.s32.totalorder %s20, 1
      %s293 = scalar_select %p292, %s20, 1
      %s294 = smul.addr %s293, 6
      %s295 = smul.addr %s294, 8
      %s296 = scalar_lea.vmem %s7, %s295
      %p297 = pneg %p219
      %p298 = pneg %p216
      %p299 = scmp.lt.s32.totalorder %s20, 1
      %s300 = scalar_select %p299, %s20, 1
      %s301 = smul.addr %s300, 2
      %s302 = scalar_lea.vmem %s8, %s301
      %p303 = scmp.lt.s32.totalorder %s20, 1
      %s304 = scalar_select %p303, %s20, 1
      %s305 = smul.addr %s304, 6
      %s306 = smul.addr %s305, 8
      %s307 = scalar_lea.vmem %s0, %s306
      %p308 = scmp.lt.s32.totalorder %s20, 1
      %s309 = scalar_select %p308, %s20, 1
      %s310 = smul.addr %s309, 6
      %s311 = smul.addr %s310, 8
      %s312 = scalar_lea.vmem %s7, %s311
      %p313 = scmp.lt.s32.totalorder %s20, 1
      %s314 = scalar_select %p313, %s20, 1
      %s315 = smul.addr %s314, 2
      %s316 = scalar_lea.vmem %s8, %s315
      %v317 = vld [vmem:[%s307] sm:$0xff]
      %v318 = vld [vmem:[%s307 + $0x8] sm:$0xff]
      %v319 = vld [vmem:[%s307 + $0x10] sm:$0xff]
      %v320 = vld [vmem:[%s307 + $0x18] sm:$0xff]
      %v321 = vld [vmem:[%s307 + $0x20] sm:$0xff]
      %v322 = vld [vmem:[%s307 + $0x28] sm:$0xff]
      %v323 = vld [vmem:[%s1] sm:$0x1]
      %v324 = vld [vmem:[%s2] sm:$0x1]
      %v325 = vld [vmem:[%s3] sm:$0x1]
      %v326 = vld [vmem:[%s4] sm:$0x1]
      %v328 = vperm.slane %v323, 0
      %v330 = vmul.f32 %v321, %v328
      %v331 = vmul.f32 %v322, %v328
      %v333 = vperm.slane %v324, 0
      %v335 = vadd.f32 %v330, %v333
      %v336 = vadd.f32 %v331, %v333
      %v337 = vmax.f32 %v335, 0.0
      %v338 = vmax.f32 %v336, 0.0
      %v339 = vand.u32 2147483647, %v319
      %v340 = vand.u32 2147483647, %v320
      %vm341 = vcmp.lt.f32.partialorder %v339, 1e-08
      %vm342 = vcmp.lt.f32.partialorder %v340, 1e-08
      %v343 = vsel %vm341, 1e-08, %v319
      %v344 = vsel %vm342, 1e-08, %v320
      %v345 = vmul.f32 %v317, %v317
      %v346 = vmul.f32 %v318, %v318
      %v347 = vmul.f32 %v343, %v343
      %v348 = vmul.f32 %v344, %v344
      %v349 = vadd.f32 %v345, %v347
      %v350 = vadd.f32 %v346, %v348
      %v351 = vrsqrt.pop %v349
      %v352 = vmul.f32 %v351, %v349
      %v353 = vmul.f32 %v352, %v351
      %v354 = vmul.f32 0.5, %v353
      %v355 = vsub.f32 1.5, %v354
      %v356 = vmul.f32 %v351, %v355
      %vm357 = vweird.f32 %v349
      %vm358 = vweird.f32 %v351
      %vm359 = vmor %vm357, %vm358
      %v360 = vsel %vm359, %v351, %v356
      %v361 = vrsqrt.pop %v350
      %v362 = vmul.f32 %v361, %v350
      %v363 = vmul.f32 %v362, %v361
      %v364 = vmul.f32 0.5, %v363
      %v365 = vsub.f32 1.5, %v364
      %v366 = vmul.f32 %v361, %v365
      %vm367 = vweird.f32 %v350
      %vm368 = vweird.f32 %v361
      %vm369 = vmor %vm367, %vm368
      %v370 = vsel %vm369, %v361, %v366
      %v372 = vperm.slane %v325, 0
      %v374 = vmul.f32 %v317, %v372
      %v375 = vmul.f32 %v318, %v372
      %v377 = vperm.slane %v326, 0
      %v379 = vmul.f32 %v343, %v377
      %v380 = vmul.f32 %v344, %v377
      %v381 = vsub.f32 %v374, %v379
      %v382 = vsub.f32 %v375, %v380
      %v383 = vmul.f32 %v337, %v381
      %v384 = vmul.f32 %v338, %v382
      %v385 = vmul.f32 %v383, %v360
      %v386 = vmul.f32 %v384, %v370
      %v387 = vmul.f32 %v343, %v372
      %v388 = vmul.f32 %v344, %v372
      %v389 = vmul.f32 %v317, %v377
      %v390 = vmul.f32 %v318, %v377
      %v391 = vadd.f32 %v387, %v389
      %v392 = vadd.f32 %v388, %v390
      %v393 = vmul.f32 %v337, %v391
      %v394 = vmul.f32 %v338, %v392
      %v395 = vmul.f32 %v393, %v360
      %v396 = vmul.f32 %v394, %v370
      %v397 = vld [vmem:[%s5] sm:$0xf]
      %v398 = vld [vmem:[%s5 + $0x4] sm:$0xf]
      %v399 = vld [vmem:[%s5 + $0x8] sm:$0xf]
      %v400 = vld [vmem:[%s5 + $0xc] sm:$0xf]
      %v401 = vld [vmem:[%s5 + $0x10] sm:$0xf]
      %v402 = vld [vmem:[%s5 + $0x14] sm:$0xf]
      %v403 = vld [vmem:[%s5 + $0x18] sm:$0xf]
      %v404 = vld [vmem:[%s5 + $0x1c] sm:$0xf]
      %v405 = vld [vmem:[%s5 + $0x20] sm:$0xf]
      %v406 = vld [vmem:[%s5 + $0x24] sm:$0xf]
      %v407 = vld [vmem:[%s5 + $0x28] sm:$0xf]
      %v408 = vld [vmem:[%s5 + $0x2c] sm:$0xf]
      %v409 = vld [vmem:[%s5 + $0x30] sm:$0xf]
      %v410 = vld [vmem:[%s5 + $0x34] sm:$0xf]
      %v411 = vld [vmem:[%s5 + $0x38] sm:$0xf]
      %v412 = vld [vmem:[%s5 + $0x3c] sm:$0xf]
      %v413 = vld [vmem:[%s5 + $0x40] sm:$0xf]
      %v414 = vld [vmem:[%s5 + $0x44] sm:$0xf]
      %v415 = vld [vmem:[%s5 + $0x48] sm:$0xf]
      %v416 = vld [vmem:[%s5 + $0x4c] sm:$0xf]
      %v417 = vld [vmem:[%s5 + $0x50] sm:$0xf]
      %v418 = vld [vmem:[%s5 + $0x54] sm:$0xf]
      %v419 = vld [vmem:[%s5 + $0x58] sm:$0xf]
      %v420 = vld [vmem:[%s5 + $0x5c] sm:$0xf]
      %v421 = vld [vmem:[%s5 + $0x60] sm:$0xf]
      %v422 = vld [vmem:[%s5 + $0x64] sm:$0xf]
      %v423 = vld [vmem:[%s5 + $0x68] sm:$0xf]
      %v424 = vld [vmem:[%s5 + $0x6c] sm:$0xf]
      %v425 = vld [vmem:[%s5 + $0x70] sm:$0xf]
      %v426 = vld [vmem:[%s5 + $0x74] sm:$0xf]
      %v427 = vld [vmem:[%s5 + $0x78] sm:$0xf]
      %v428 = vld [vmem:[%s5 + $0x7c] sm:$0xf]
      %v429 = vld [vmem:[%s5 + $0x80] sm:$0xf]
      %v430 = vld [vmem:[%s5 + $0x84] sm:$0xf]
      %v431 = vld [vmem:[%s5 + $0x88] sm:$0xf]
      %v432 = vld [vmem:[%s5 + $0x8c] sm:$0xf]
      %v433 = vld [vmem:[%s5 + $0x90] sm:$0xf]
      %v434 = vld [vmem:[%s5 + $0x94] sm:$0xf]
      %v435 = vld [vmem:[%s5 + $0x98] sm:$0xf]
      %v436 = vld [vmem:[%s5 + $0x9c] sm:$0xf]
      %v437 = vld [vmem:[%s5 + $0xa0] sm:$0xf]
      %v438 = vld [vmem:[%s5 + $0xa4] sm:$0xf]
      %v439 = vld [vmem:[%s5 + $0xa8] sm:$0xf]
      %v440 = vld [vmem:[%s5 + $0xac] sm:$0xf]
      %v441 = vld [vmem:[%s5 + $0xb0] sm:$0xf]
      %v442 = vld [vmem:[%s5 + $0xb4] sm:$0xf]
      %v443 = vld [vmem:[%s5 + $0xb8] sm:$0xf]
      %v444 = vld [vmem:[%s5 + $0xbc] sm:$0xf]
      %v445 = vld [vmem:[%s5 + $0xc0] sm:$0xf]
      %v446 = vld [vmem:[%s5 + $0xc4] sm:$0xf]
      %v447 = vld [vmem:[%s5 + $0xc8] sm:$0xf]
      %v448 = vld [vmem:[%s5 + $0xcc] sm:$0xf]
      %v449 = vld [vmem:[%s5 + $0xd0] sm:$0xf]
      %v450 = vld [vmem:[%s5 + $0xd4] sm:$0xf]
      %v451 = vld [vmem:[%s5 + $0xd8] sm:$0xf]
      %v452 = vld [vmem:[%s5 + $0xdc] sm:$0xf]
      %v453 = vld [vmem:[%s5 + $0xe0] sm:$0xf]
      %v454 = vld [vmem:[%s5 + $0xe4] sm:$0xf]
      %v455 = vld [vmem:[%s5 + $0xe8] sm:$0xf]
      %v456 = vld [vmem:[%s5 + $0xec] sm:$0xf]
      %v457 = vld [vmem:[%s5 + $0xf0] sm:$0xf]
      %v458 = vld [vmem:[%s5 + $0xf4] sm:$0xf]
      %v459 = vld [vmem:[%s5 + $0xf8] sm:$0xf]
      %v460 = vld [vmem:[%s5 + $0xfc] sm:$0xf]
      %v461 = vld [vmem:[%s5 + $0x100] sm:$0xf]
      %v462 = vld [vmem:[%s5 + $0x104] sm:$0xf]
      %v463 = vld [vmem:[%s5 + $0x108] sm:$0xf]
      %v464 = vld [vmem:[%s5 + $0x10c] sm:$0xf]
      %v465 = vld [vmem:[%s5 + $0x110] sm:$0xf]
      %v466 = vld [vmem:[%s5 + $0x114] sm:$0xf]
      %v467 = vld [vmem:[%s5 + $0x118] sm:$0xf]
      %v468 = vld [vmem:[%s5 + $0x11c] sm:$0xf]
      %v469 = vld [vmem:[%s5 + $0x120] sm:$0xf]
      %v470 = vld [vmem:[%s5 + $0x124] sm:$0xf]
      %v471 = vld [vmem:[%s5 + $0x128] sm:$0xf]
      %v472 = vld [vmem:[%s5 + $0x12c] sm:$0xf]
      %v473 = vld [vmem:[%s5 + $0x130] sm:$0xf]
      %v474 = vld [vmem:[%s5 + $0x134] sm:$0xf]
      %v475 = vld [vmem:[%s5 + $0x138] sm:$0xf]
      %v476 = vld [vmem:[%s5 + $0x13c] sm:$0xf]
      %v477 = vld [vmem:[%s5 + $0x140] sm:$0xf]
      %v478 = vld [vmem:[%s5 + $0x144] sm:$0xf]
      %v479 = vld [vmem:[%s5 + $0x148] sm:$0xf]
      %v480 = vld [vmem:[%s5 + $0x14c] sm:$0xf]
      %v481 = vld [vmem:[%s5 + $0x150] sm:$0xf]
      %v482 = vld [vmem:[%s5 + $0x154] sm:$0xf]
      %v483 = vld [vmem:[%s5 + $0x158] sm:$0xf]
      %v484 = vld [vmem:[%s5 + $0x15c] sm:$0xf]
      %v485 = vld [vmem:[%s5 + $0x160] sm:$0xf]
      %v486 = vld [vmem:[%s5 + $0x164] sm:$0xf]
      %v487 = vld [vmem:[%s5 + $0x168] sm:$0xf]
      %v488 = vld [vmem:[%s5 + $0x16c] sm:$0xf]
      %v489 = vld [vmem:[%s5 + $0x170] sm:$0xf]
      %v490 = vld [vmem:[%s5 + $0x174] sm:$0xf]
      %v491 = vld [vmem:[%s5 + $0x178] sm:$0xf]
      %v492 = vld [vmem:[%s5 + $0x17c] sm:$0xf]
      %v493 = vld [vmem:[%s5 + $0x180] sm:$0xf]
      %v494 = vld [vmem:[%s5 + $0x184] sm:$0xf]
      %v495 = vld [vmem:[%s5 + $0x188] sm:$0xf]
      %v496 = vld [vmem:[%s5 + $0x18c] sm:$0xf]
      %v497 = vld [vmem:[%s5 + $0x190] sm:$0xf]
      %v498 = vld [vmem:[%s5 + $0x194] sm:$0xf]
      %v499 = vld [vmem:[%s5 + $0x198] sm:$0xf]
      %v500 = vld [vmem:[%s5 + $0x19c] sm:$0xf]
      %v501 = vld [vmem:[%s5 + $0x1a0] sm:$0xf]
      %v502 = vld [vmem:[%s5 + $0x1a4] sm:$0xf]
      %v503 = vld [vmem:[%s5 + $0x1a8] sm:$0xf]
      %v504 = vld [vmem:[%s5 + $0x1ac] sm:$0xf]
      %v505 = vld [vmem:[%s5 + $0x1b0] sm:$0xf]
      %v506 = vld [vmem:[%s5 + $0x1b4] sm:$0xf]
      %v507 = vld [vmem:[%s5 + $0x1b8] sm:$0xf]
      %v508 = vld [vmem:[%s5 + $0x1bc] sm:$0xf]
      %v509 = vld [vmem:[%s5 + $0x1c0] sm:$0xf]
      %v510 = vld [vmem:[%s5 + $0x1c4] sm:$0xf]
      %v511 = vld [vmem:[%s5 + $0x1c8] sm:$0xf]
      %v512 = vld [vmem:[%s5 + $0x1cc] sm:$0xf]
      %v513 = vld [vmem:[%s5 + $0x1d0] sm:$0xf]
      %v514 = vld [vmem:[%s5 + $0x1d4] sm:$0xf]
      %v515 = vld [vmem:[%s5 + $0x1d8] sm:$0xf]
      %v516 = vld [vmem:[%s5 + $0x1dc] sm:$0xf]
      %v517 = vld [vmem:[%s5 + $0x1e0] sm:$0xf]
      %v518 = vld [vmem:[%s5 + $0x1e4] sm:$0xf]
      %v519 = vld [vmem:[%s5 + $0x1e8] sm:$0xf]
      %v520 = vld [vmem:[%s5 + $0x1ec] sm:$0xf]
      %v521 = vld [vmem:[%s5 + $0x1f0] sm:$0xf]
      %v522 = vld [vmem:[%s5 + $0x1f4] sm:$0xf]
      %v523 = vld [vmem:[%s5 + $0x1f8] sm:$0xf]
      %v524 = vld [vmem:[%s5 + $0x1fc] sm:$0xf]
      %v525 = vld [vmem:[%s5 + $0x200] sm:$0xf]
      %v526 = vld [vmem:[%s5 + $0x204] sm:$0xf]
      %v527 = vld [vmem:[%s5 + $0x208] sm:$0xf]
      %v528 = vld [vmem:[%s5 + $0x20c] sm:$0xf]
      %v529 = vld [vmem:[%s5 + $0x210] sm:$0xf]
      %v530 = vld [vmem:[%s5 + $0x214] sm:$0xf]
      %v531 = vld [vmem:[%s5 + $0x218] sm:$0xf]
      %v532 = vld [vmem:[%s5 + $0x21c] sm:$0xf]
      %v533 = vld [vmem:[%s5 + $0x220] sm:$0xf]
      %v534 = vld [vmem:[%s5 + $0x224] sm:$0xf]
      %v535 = vld [vmem:[%s5 + $0x228] sm:$0xf]
      %v536 = vld [vmem:[%s5 + $0x22c] sm:$0xf]
      %v537 = vld [vmem:[%s5 + $0x230] sm:$0xf]
      %v538 = vld [vmem:[%s5 + $0x234] sm:$0xf]
      %v539 = vld [vmem:[%s5 + $0x238] sm:$0xf]
      %v540 = vld [vmem:[%s5 + $0x23c] sm:$0xf]
      %v541 = vld [vmem:[%s6] sm:$0x1]
      %544 = vrot.lane.b32.xlu0 %v385, 8
      %v545 = vpop.permute.xlu0 %544
      %546 = vrot.lane.b32.xlu0 %v386, 8
      %v547 = vpop.permute.xlu0 %546
      %vm550 = vcmask 64512
      %v551 = vsel %vm550, 0.0, %v545
      %v552 = vsel %vm550, 0.0, %v547
      %v553 = vsel %vm550, %v545, 0.0
      %v554 = vsel %vm550, %v547, 0.0
      %vm559 = vcmask 1040384
      %v560 = vrot.slane %v551, 7
      %v561 = vrot.slane %v553, 7
      %v562 = vrot.slane %v552, 7
      %v563 = vsel %vm559, %v560, %v562
      %v564 = vrot.slane %v554, 7
      %v565 = vsel %vm559, %v561, %v564
      %v571 = vsel %vm559, 0.0, %v560
      %v572 = vsel %vm559, 0.0, %v561
      %v573 = vsel %vm559, %v562, 0.0
      %v574 = vsel %vm559, %v564, 0.0
      %577 = vrot.lane.b32.xlu0 %v571, 120
      %v578 = vpop.permute.xlu0 %577
      %579 = vrot.lane.b32.xlu0 %v572, 120
      %v580 = vpop.permute.xlu0 %579
      %581 = vrot.lane.b32.xlu0 %v563, 120
      %v582 = vpop.permute.xlu0 %581
      %583 = vrot.lane.b32.xlu0 %v565, 120
      %v584 = vpop.permute.xlu0 %583
      %vm585 = vcmask 982016
      %v586 = vsel %vm585, %v578, %v580
      %v587 = vsel %vm585, %v582, %v584
      %590 = vrot.lane.b32.xlu0 %v571, 112
      %v591 = vpop.permute.xlu0 %590
      %592 = vrot.lane.b32.xlu0 %v572, 112
      %v593 = vpop.permute.xlu0 %592
      %594 = vrot.lane.b32.xlu0 %v563, 112
      %v595 = vpop.permute.xlu0 %594
      %596 = vrot.lane.b32.xlu0 %v565, 112
      %v597 = vpop.permute.xlu0 %596
      %vm598 = vcmask 916480
      %v599 = vsel %vm598, %v591, %v593
      %v600 = vsel %vm598, %v595, %v597
      %vm604 = vcmask 1046528
      %v605 = vrot.slane %v571, 1
      %v606 = vrot.slane %v563, 1
      %v607 = vsel %vm604, %v605, %v606
      %v608 = vrot.slane %v573, 1
      %v609 = vsel %vm604, %v606, %v608
      %v613 = vrot.slane %v572, 1
      %v614 = vrot.slane %v565, 1
      %v615 = vsel %vm604, %v613, %v614
      %v616 = vrot.slane %v574, 1
      %v617 = vsel %vm604, %v614, %v616
      %618 = vrot.lane.b32.xlu0 %v607, 120
      %v619 = vpop.permute.xlu0 %618
      %620 = vrot.lane.b32.xlu0 %v615, 120
      %v621 = vpop.permute.xlu0 %620
      %622 = vrot.lane.b32.xlu0 %v609, 120
      %v623 = vpop.permute.xlu0 %622
      %624 = vrot.lane.b32.xlu0 %v617, 120
      %v625 = vpop.permute.xlu0 %624
      %v626 = vsel %vm585, %v619, %v621
      %v627 = vsel %vm585, %v623, %v625
      %630 = vrot.lane.b32.xlu0 %v607, 112
      %v631 = vpop.permute.xlu0 %630
      %632 = vrot.lane.b32.xlu0 %v615, 112
      %v633 = vpop.permute.xlu0 %632
      %634 = vrot.lane.b32.xlu0 %v609, 112
      %v635 = vpop.permute.xlu0 %634
      %636 = vrot.lane.b32.xlu0 %v617, 112
      %v637 = vpop.permute.xlu0 %636
      %v638 = vsel %vm598, %v631, %v633
      %v639 = vsel %vm598, %v635, %v637
      %vm642 = vcmask 1045504
      %v643 = vrot.slane %v571, 2
      %v644 = vrot.slane %v563, 2
      %v645 = vsel %vm642, %v643, %v644
      %v646 = vrot.slane %v573, 2
      %v647 = vsel %vm642, %v644, %v646
      %v650 = vrot.slane %v572, 2
      %v651 = vrot.slane %v565, 2
      %v652 = vsel %vm642, %v650, %v651
      %v653 = vrot.slane %v574, 2
      %v654 = vsel %vm642, %v651, %v653
      %655 = vrot.lane.b32.xlu0 %v645, 120
      %v656 = vpop.permute.xlu0 %655
      %657 = vrot.lane.b32.xlu0 %v652, 120
      %v658 = vpop.permute.xlu0 %657
      %659 = vrot.lane.b32.xlu0 %v647, 120
      %v660 = vpop.permute.xlu0 %659
      %661 = vrot.lane.b32.xlu0 %v654, 120
      %v662 = vpop.permute.xlu0 %661
      %v663 = vsel %vm585, %v656, %v658
      %v664 = vsel %vm585, %v660, %v662
      %667 = vrot.lane.b32.xlu0 %v645, 112
      %v668 = vpop.permute.xlu0 %667
      %669 = vrot.lane.b32.xlu0 %v652, 112
      %v670 = vpop.permute.xlu0 %669
      %671 = vrot.lane.b32.xlu0 %v647, 112
      %v672 = vpop.permute.xlu0 %671
      %673 = vrot.lane.b32.xlu0 %v654, 112
      %v674 = vpop.permute.xlu0 %673
      %v675 = vsel %vm598, %v668, %v670
      %v676 = vsel %vm598, %v672, %v674
      %681 = vrot.lane.b32.xlu0 %v395, 8
      %v682 = vpop.permute.xlu0 %681
      %683 = vrot.lane.b32.xlu0 %v396, 8
      %v684 = vpop.permute.xlu0 %683
      %v687 = vsel %vm550, 0.0, %v682
      %v688 = vsel %vm550, 0.0, %v684
      %v689 = vsel %vm550, %v682, 0.0
      %v690 = vsel %vm550, %v684, 0.0
      %v695 = vrot.slane %v687, 7
      %v696 = vrot.slane %v689, 7
      %v697 = vrot.slane %v688, 7
      %v698 = vsel %vm559, %v695, %v697
      %v699 = vrot.slane %v690, 7
      %v700 = vsel %vm559, %v696, %v699
      %v706 = vsel %vm559, 0.0, %v695
      %v707 = vsel %vm559, 0.0, %v696
      %v708 = vsel %vm559, %v697, 0.0
      %v709 = vsel %vm559, %v699, 0.0
      %712 = vrot.lane.b32.xlu0 %v706, 120
      %v713 = vpop.permute.xlu0 %712
      %714 = vrot.lane.b32.xlu0 %v707, 120
      %v715 = vpop.permute.xlu0 %714
      %716 = vrot.lane.b32.xlu0 %v698, 120
      %v717 = vpop.permute.xlu0 %716
      %718 = vrot.lane.b32.xlu0 %v700, 120
      %v719 = vpop.permute.xlu0 %718
      %v720 = vsel %vm585, %v713, %v715
      %v721 = vsel %vm585, %v717, %v719
      %724 = vrot.lane.b32.xlu0 %v706, 112
      %v725 = vpop.permute.xlu0 %724
      %726 = vrot.lane.b32.xlu0 %v707, 112
      %v727 = vpop.permute.xlu0 %726
      %728 = vrot.lane.b32.xlu0 %v698, 112
      %v729 = vpop.permute.xlu0 %728
      %730 = vrot.lane.b32.xlu0 %v700, 112
      %v731 = vpop.permute.xlu0 %730
      %v732 = vsel %vm598, %v725, %v727
      %v733 = vsel %vm598, %v729, %v731
      %v737 = vrot.slane %v706, 1
      %v738 = vrot.slane %v698, 1
      %v739 = vsel %vm604, %v737, %v738
      %v740 = vrot.slane %v708, 1
      %v741 = vsel %vm604, %v738, %v740
      %v745 = vrot.slane %v707, 1
      %v746 = vrot.slane %v700, 1
      %v747 = vsel %vm604, %v745, %v746
      %v748 = vrot.slane %v709, 1
      %v749 = vsel %vm604, %v746, %v748
      %750 = vrot.lane.b32.xlu0 %v739, 120
      %v751 = vpop.permute.xlu0 %750
      %752 = vrot.lane.b32.xlu0 %v747, 120
      %v753 = vpop.permute.xlu0 %752
      %754 = vrot.lane.b32.xlu0 %v741, 120
      %v755 = vpop.permute.xlu0 %754
      %756 = vrot.lane.b32.xlu0 %v749, 120
      %v757 = vpop.permute.xlu0 %756
      %v758 = vsel %vm585, %v751, %v753
      %v759 = vsel %vm585, %v755, %v757
      %762 = vrot.lane.b32.xlu0 %v739, 112
      %v763 = vpop.permute.xlu0 %762
      %764 = vrot.lane.b32.xlu0 %v747, 112
      %v765 = vpop.permute.xlu0 %764
      %766 = vrot.lane.b32.xlu0 %v741, 112
      %v767 = vpop.permute.xlu0 %766
      %768 = vrot.lane.b32.xlu0 %v749, 112
      %v769 = vpop.permute.xlu0 %768
      %v770 = vsel %vm598, %v763, %v765
      %v771 = vsel %vm598, %v767, %v769
      %v774 = vrot.slane %v706, 2
      %v775 = vrot.slane %v698, 2
      %v776 = vsel %vm642, %v774, %v775
      %v777 = vrot.slane %v708, 2
      %v778 = vsel %vm642, %v775, %v777
      %v781 = vrot.slane %v707, 2
      %v782 = vrot.slane %v700, 2
      %v783 = vsel %vm642, %v781, %v782
      %v784 = vrot.slane %v709, 2
      %v785 = vsel %vm642, %v782, %v784
      %786 = vrot.lane.b32.xlu0 %v776, 120
      %v787 = vpop.permute.xlu0 %786
      %788 = vrot.lane.b32.xlu0 %v783, 120
      %v789 = vpop.permute.xlu0 %788
      %790 = vrot.lane.b32.xlu0 %v778, 120
      %v791 = vpop.permute.xlu0 %790
      %792 = vrot.lane.b32.xlu0 %v785, 120
      %v793 = vpop.permute.xlu0 %792
      %v794 = vsel %vm585, %v787, %v789
      %v795 = vsel %vm585, %v791, %v793
      %798 = vrot.lane.b32.xlu0 %v776, 112
      %v799 = vpop.permute.xlu0 %798
      %800 = vrot.lane.b32.xlu0 %v783, 112
      %v801 = vpop.permute.xlu0 %800
      %802 = vrot.lane.b32.xlu0 %v778, 112
      %v803 = vpop.permute.xlu0 %802
      %804 = vrot.lane.b32.xlu0 %v785, 112
      %v805 = vpop.permute.xlu0 %804
      %v806 = vsel %vm598, %v799, %v801
      %v807 = vsel %vm598, %v803, %v805
      %812 = vrot.lane.b32.xlu0 %v337, 8
      %v813 = vpop.permute.xlu0 %812
      %814 = vrot.lane.b32.xlu0 %v338, 8
      %v815 = vpop.permute.xlu0 %814
      %v818 = vsel %vm550, 0.0, %v813
      %v819 = vsel %vm550, 0.0, %v815
      %v820 = vsel %vm550, %v813, 0.0
      %v821 = vsel %vm550, %v815, 0.0
      %v826 = vrot.slane %v818, 7
      %v827 = vrot.slane %v820, 7
      %v828 = vrot.slane %v819, 7
      %v829 = vsel %vm559, %v826, %v828
      %v830 = vrot.slane %v821, 7
      %v831 = vsel %vm559, %v827, %v830
      %v837 = vsel %vm559, 0.0, %v826
      %v838 = vsel %vm559, 0.0, %v827
      %v839 = vsel %vm559, %v828, 0.0
      %v840 = vsel %vm559, %v830, 0.0
      %843 = vrot.lane.b32.xlu0 %v837, 120
      %v844 = vpop.permute.xlu0 %843
      %845 = vrot.lane.b32.xlu0 %v838, 120
      %v846 = vpop.permute.xlu0 %845
      %847 = vrot.lane.b32.xlu0 %v829, 120
      %v848 = vpop.permute.xlu0 %847
      %849 = vrot.lane.b32.xlu0 %v831, 120
      %v850 = vpop.permute.xlu0 %849
      %v851 = vsel %vm585, %v844, %v846
      %v852 = vsel %vm585, %v848, %v850
      %855 = vrot.lane.b32.xlu0 %v837, 112
      %v856 = vpop.permute.xlu0 %855
      %857 = vrot.lane.b32.xlu0 %v838, 112
      %v858 = vpop.permute.xlu0 %857
      %859 = vrot.lane.b32.xlu0 %v829, 112
      %v860 = vpop.permute.xlu0 %859
      %861 = vrot.lane.b32.xlu0 %v831, 112
      %v862 = vpop.permute.xlu0 %861
      %v863 = vsel %vm598, %v856, %v858
      %v864 = vsel %vm598, %v860, %v862
      %v868 = vrot.slane %v837, 1
      %v869 = vrot.slane %v829, 1
      %v870 = vsel %vm604, %v868, %v869
      %v871 = vrot.slane %v839, 1
      %v872 = vsel %vm604, %v869, %v871
      %v876 = vrot.slane %v838, 1
      %v877 = vrot.slane %v831, 1
      %v878 = vsel %vm604, %v876, %v877
      %v879 = vrot.slane %v840, 1
      %v880 = vsel %vm604, %v877, %v879
      %881 = vrot.lane.b32.xlu0 %v870, 120
      %v882 = vpop.permute.xlu0 %881
      %883 = vrot.lane.b32.xlu0 %v878, 120
      %v884 = vpop.permute.xlu0 %883
      %885 = vrot.lane.b32.xlu0 %v872, 120
      %v886 = vpop.permute.xlu0 %885
      %887 = vrot.lane.b32.xlu0 %v880, 120
      %v888 = vpop.permute.xlu0 %887
      %v889 = vsel %vm585, %v882, %v884
      %v890 = vsel %vm585, %v886, %v888
      %893 = vrot.lane.b32.xlu0 %v870, 112
      %v894 = vpop.permute.xlu0 %893
      %895 = vrot.lane.b32.xlu0 %v878, 112
      %v896 = vpop.permute.xlu0 %895
      %897 = vrot.lane.b32.xlu0 %v872, 112
      %v898 = vpop.permute.xlu0 %897
      %899 = vrot.lane.b32.xlu0 %v880, 112
      %v900 = vpop.permute.xlu0 %899
      %v901 = vsel %vm598, %v894, %v896
      %v902 = vsel %vm598, %v898, %v900
      %v905 = vrot.slane %v837, 2
      %v906 = vrot.slane %v829, 2
      %v907 = vsel %vm642, %v905, %v906
      %v908 = vrot.slane %v839, 2
      %v909 = vsel %vm642, %v906, %v908
      %v912 = vrot.slane %v838, 2
      %v913 = vrot.slane %v831, 2
      %v914 = vsel %vm642, %v912, %v913
      %v915 = vrot.slane %v840, 2
      %v916 = vsel %vm642, %v913, %v915
      %917 = vrot.lane.b32.xlu0 %v907, 120
      %v918 = vpop.permute.xlu0 %917
      %919 = vrot.lane.b32.xlu0 %v914, 120
      %v920 = vpop.permute.xlu0 %919
      %921 = vrot.lane.b32.xlu0 %v909, 120
      %v922 = vpop.permute.xlu0 %921
      %923 = vrot.lane.b32.xlu0 %v916, 120
      %v924 = vpop.permute.xlu0 %923
      %v925 = vsel %vm585, %v918, %v920
      %v926 = vsel %vm585, %v922, %v924
      %929 = vrot.lane.b32.xlu0 %v907, 112
      %v930 = vpop.permute.xlu0 %929
      %931 = vrot.lane.b32.xlu0 %v914, 112
      %v932 = vpop.permute.xlu0 %931
      %933 = vrot.lane.b32.xlu0 %v909, 112
      %v934 = vpop.permute.xlu0 %933
      %935 = vrot.lane.b32.xlu0 %v916, 112
      %v936 = vpop.permute.xlu0 %935
      %v937 = vsel %vm598, %v930, %v932
      %v938 = vsel %vm598, %v934, %v936
      %v941 = vpack.c.bf16 %v563, %v571
      %v942 = vpack.c.bf16 %v587, %v586
      %v943 = vpack.c.bf16 %v600, %v599
      %v944 = vpack.c.bf16 %v609, %v607
      %v945 = vpack.c.bf16 %v627, %v626
      %v946 = vpack.c.bf16 %v639, %v638
      %v947 = vpack.c.bf16 %v647, %v645
      %v948 = vpack.c.bf16 %v664, %v663
      %v949 = vpack.c.bf16 %v676, %v675
      %v950 = vpack.c.bf16 %v698, %v706
      %v951 = vpack.c.bf16 %v721, %v720
      %v952 = vpack.c.bf16 %v733, %v732
      %v953 = vpack.c.bf16 %v741, %v739
      %v954 = vpack.c.bf16 %v759, %v758
      %v955 = vpack.c.bf16 %v771, %v770
      %v956 = vpack.c.bf16 %v778, %v776
      %v957 = vpack.c.bf16 %v795, %v794
      %v958 = vpack.c.bf16 %v807, %v806
      %v959 = vpack.c.bf16 %v829, %v837
      %v960 = vpack.c.bf16 %v852, %v851
      %v961 = vpack.c.bf16 %v864, %v863
      %v962 = vpack.c.bf16 %v872, %v870
      %v963 = vpack.c.bf16 %v890, %v889
      %v964 = vpack.c.bf16 %v902, %v901
      %v965 = vpack.c.bf16 %v909, %v907
      %v966 = vpack.c.bf16 %v926, %v925
      %v967 = vpack.c.bf16 %v938, %v937
      %v1112 = vunpack.c.l.b16 %v397
      %v1113 = vunpack.c.l.b16 %v398
      %v1114 = vunpack.c.l.b16 %v399
      %v1115 = vunpack.c.l.b16 %v400
      %v1116 = vunpack.c.l.b16 %v401
      %v1117 = vunpack.c.l.b16 %v402
      %v1118 = vunpack.c.l.b16 %v403
      %v1119 = vunpack.c.l.b16 %v404
      %v1120 = vunpack.c.l.b16 %v405
      %v1121 = vunpack.c.l.b16 %v406
      %v1122 = vunpack.c.l.b16 %v407
      %v1123 = vunpack.c.l.b16 %v408
      %v1124 = vunpack.c.l.b16 %v409
      %v1125 = vunpack.c.l.b16 %v410
      %v1126 = vunpack.c.l.b16 %v411
      %v1127 = vunpack.c.l.b16 %v412
      %v1128 = vunpack.c.l.b16 %v413
      %v1129 = vunpack.c.l.b16 %v414
      %v1130 = vunpack.c.l.b16 %v415
      %v1131 = vunpack.c.l.b16 %v416
      %v1132 = vunpack.c.l.b16 %v417
      %v1133 = vunpack.c.l.b16 %v418
      %v1134 = vunpack.c.l.b16 %v419
      %v1135 = vunpack.c.l.b16 %v420
      %v1136 = vunpack.c.l.b16 %v421
      %v1137 = vunpack.c.l.b16 %v422
      %v1138 = vunpack.c.l.b16 %v423
      %v1139 = vunpack.c.l.b16 %v424
      %v1140 = vunpack.c.l.b16 %v425
      %v1141 = vunpack.c.l.b16 %v426
      %v1142 = vunpack.c.l.b16 %v427
      %v1143 = vunpack.c.l.b16 %v428
      %v1144 = vunpack.c.l.b16 %v429
      %v1145 = vunpack.c.l.b16 %v430
      %v1146 = vunpack.c.l.b16 %v431
      %v1147 = vunpack.c.l.b16 %v432
      %v1148 = vunpack.c.l.b16 %v433
      %v1149 = vunpack.c.l.b16 %v434
      %v1150 = vunpack.c.l.b16 %v435
      %v1151 = vunpack.c.l.b16 %v436
      %v1152 = vunpack.c.l.b16 %v437
      %v1153 = vunpack.c.l.b16 %v438
      %v1154 = vunpack.c.l.b16 %v439
      %v1155 = vunpack.c.l.b16 %v440
      %v1156 = vunpack.c.l.b16 %v441
      %v1157 = vunpack.c.l.b16 %v442
      %v1158 = vunpack.c.l.b16 %v443
      %v1159 = vunpack.c.l.b16 %v444
      %v1160 = vunpack.c.l.b16 %v445
      %v1161 = vunpack.c.l.b16 %v446
      %v1162 = vunpack.c.l.b16 %v447
      %v1163 = vunpack.c.l.b16 %v448
      %v1164 = vunpack.c.l.b16 %v449
      %v1165 = vunpack.c.l.b16 %v450
      %v1166 = vunpack.c.l.b16 %v451
      %v1167 = vunpack.c.l.b16 %v452
      %v1168 = vunpack.c.l.b16 %v453
      %v1169 = vunpack.c.l.b16 %v454
      %v1170 = vunpack.c.l.b16 %v455
      %v1171 = vunpack.c.l.b16 %v456
      %v1172 = vunpack.c.l.b16 %v457
      %v1173 = vunpack.c.l.b16 %v458
      %v1174 = vunpack.c.l.b16 %v459
      %v1175 = vunpack.c.l.b16 %v460
      %v1176 = vunpack.c.l.b16 %v461
      %v1177 = vunpack.c.l.b16 %v462
      %v1178 = vunpack.c.l.b16 %v463
      %v1179 = vunpack.c.l.b16 %v464
      %v1180 = vunpack.c.l.b16 %v465
      %v1181 = vunpack.c.l.b16 %v466
      %v1182 = vunpack.c.l.b16 %v467
      %v1183 = vunpack.c.l.b16 %v468
      %v1184 = vunpack.c.l.b16 %v469
      %v1185 = vunpack.c.l.b16 %v470
      %v1186 = vunpack.c.l.b16 %v471
      %v1187 = vunpack.c.l.b16 %v472
      %v1188 = vunpack.c.l.b16 %v473
      %v1189 = vunpack.c.l.b16 %v474
      %v1190 = vunpack.c.l.b16 %v475
      %v1191 = vunpack.c.l.b16 %v476
      %v1192 = vunpack.c.l.b16 %v477
      %v1193 = vunpack.c.l.b16 %v478
      %v1194 = vunpack.c.l.b16 %v479
      %v1195 = vunpack.c.l.b16 %v480
      %v1196 = vunpack.c.l.b16 %v481
      %v1197 = vunpack.c.l.b16 %v482
      %v1198 = vunpack.c.l.b16 %v483
      %v1199 = vunpack.c.l.b16 %v484
      %v1200 = vunpack.c.l.b16 %v485
      %v1201 = vunpack.c.l.b16 %v486
      %v1202 = vunpack.c.l.b16 %v487
      %v1203 = vunpack.c.l.b16 %v488
      %v1204 = vunpack.c.l.b16 %v489
      %v1205 = vunpack.c.l.b16 %v490
      %v1206 = vunpack.c.l.b16 %v491
      %v1207 = vunpack.c.l.b16 %v492
      %v1208 = vunpack.c.l.b16 %v493
      %v1209 = vunpack.c.l.b16 %v494
      %v1210 = vunpack.c.l.b16 %v495
      %v1211 = vunpack.c.l.b16 %v496
      %v1212 = vunpack.c.l.b16 %v497
      %v1213 = vunpack.c.l.b16 %v498
      %v1214 = vunpack.c.l.b16 %v499
      %v1215 = vunpack.c.l.b16 %v500
      %v1216 = vunpack.c.l.b16 %v501
      %v1217 = vunpack.c.l.b16 %v502
      %v1218 = vunpack.c.l.b16 %v503
      %v1219 = vunpack.c.l.b16 %v504
      %v1220 = vunpack.c.l.b16 %v505
      %v1221 = vunpack.c.l.b16 %v506
      %v1222 = vunpack.c.l.b16 %v507
      %v1223 = vunpack.c.l.b16 %v508
      %v1224 = vunpack.c.l.b16 %v509
      %v1225 = vunpack.c.l.b16 %v510
      %v1226 = vunpack.c.l.b16 %v511
      %v1227 = vunpack.c.l.b16 %v512
      %v1228 = vunpack.c.l.b16 %v513
      %v1229 = vunpack.c.l.b16 %v514
      %v1230 = vunpack.c.l.b16 %v515
      %v1231 = vunpack.c.l.b16 %v516
      %v1232 = vunpack.c.l.b16 %v517
      %v1233 = vunpack.c.l.b16 %v518
      %v1234 = vunpack.c.l.b16 %v519
      %v1235 = vunpack.c.l.b16 %v520
      %v1236 = vunpack.c.l.b16 %v521
      %v1237 = vunpack.c.l.b16 %v522
      %v1238 = vunpack.c.l.b16 %v523
      %v1239 = vunpack.c.l.b16 %v524
      %v1240 = vunpack.c.l.b16 %v525
      %v1241 = vunpack.c.l.b16 %v526
      %v1242 = vunpack.c.l.b16 %v527
      %v1243 = vunpack.c.l.b16 %v528
      %v1244 = vunpack.c.l.b16 %v529
      %v1245 = vunpack.c.l.b16 %v530
      %v1246 = vunpack.c.l.b16 %v531
      %v1247 = vunpack.c.l.b16 %v532
      %v1248 = vunpack.c.l.b16 %v533
      %v1249 = vunpack.c.l.b16 %v534
      %v1250 = vunpack.c.l.b16 %v535
      %v1251 = vunpack.c.l.b16 %v536
      %v1252 = vunpack.c.l.b16 %v537
      %v1253 = vunpack.c.l.b16 %v538
      %v1254 = vunpack.c.l.b16 %v539
      %v1255 = vunpack.c.l.b16 %v540
      %v1256 = vpack.c.b16 %v1113, %v1112
      %v1257 = vpack.c.b16 %v1115, %v1114
      %v1258 = vpack.c.b16 %v1117, %v1116
      %v1259 = vpack.c.b16 %v1119, %v1118
      %v1260 = vpack.c.b16 %v1121, %v1120
      %v1261 = vpack.c.b16 %v1123, %v1122
      %v1262 = vpack.c.b16 %v1125, %v1124
      %v1263 = vpack.c.b16 %v1127, %v1126
      %v1264 = vpack.c.b16 %v1129, %v1128
      %v1265 = vpack.c.b16 %v1131, %v1130
      %v1266 = vpack.c.b16 %v1133, %v1132
      %v1267 = vpack.c.b16 %v1135, %v1134
      %v1268 = vpack.c.b16 %v1137, %v1136
      %v1269 = vpack.c.b16 %v1139, %v1138
      %v1270 = vpack.c.b16 %v1141, %v1140
      %v1271 = vpack.c.b16 %v1143, %v1142
      %v1272 = vpack.c.b16 %v1145, %v1144
      %v1273 = vpack.c.b16 %v1147, %v1146
      %v1274 = vpack.c.b16 %v1149, %v1148
      %v1275 = vpack.c.b16 %v1151, %v1150
      %v1276 = vpack.c.b16 %v1153, %v1152
      %v1277 = vpack.c.b16 %v1155, %v1154
      %v1278 = vpack.c.b16 %v1157, %v1156
      %v1279 = vpack.c.b16 %v1159, %v1158
      %v1280 = vpack.c.b16 %v1161, %v1160
      %v1281 = vpack.c.b16 %v1163, %v1162
      %v1282 = vpack.c.b16 %v1165, %v1164
      %v1283 = vpack.c.b16 %v1167, %v1166
      %v1284 = vpack.c.b16 %v1169, %v1168
      %v1285 = vpack.c.b16 %v1171, %v1170
      %v1286 = vpack.c.b16 %v1173, %v1172
      %v1287 = vpack.c.b16 %v1175, %v1174
      %v1288 = vpack.c.b16 %v1177, %v1176
      %v1289 = vpack.c.b16 %v1179, %v1178
      %v1290 = vpack.c.b16 %v1181, %v1180
      %v1291 = vpack.c.b16 %v1183, %v1182
      %v1292 = vpack.c.b16 %v1185, %v1184
      %v1293 = vpack.c.b16 %v1187, %v1186
      %v1294 = vpack.c.b16 %v1189, %v1188
      %v1295 = vpack.c.b16 %v1191, %v1190
      %v1296 = vpack.c.b16 %v1193, %v1192
      %v1297 = vpack.c.b16 %v1195, %v1194
      %v1298 = vpack.c.b16 %v1197, %v1196
      %v1299 = vpack.c.b16 %v1199, %v1198
      %v1300 = vpack.c.b16 %v1201, %v1200
      %v1301 = vpack.c.b16 %v1203, %v1202
      %v1302 = vpack.c.b16 %v1205, %v1204
      %v1303 = vpack.c.b16 %v1207, %v1206
      %v1304 = vpack.c.b16 %v1209, %v1208
      %v1305 = vpack.c.b16 %v1211, %v1210
      %v1306 = vpack.c.b16 %v1213, %v1212
      %v1307 = vpack.c.b16 %v1215, %v1214
      %v1308 = vpack.c.b16 %v1217, %v1216
      %v1309 = vpack.c.b16 %v1219, %v1218
      %v1310 = vpack.c.b16 %v1221, %v1220
      %v1311 = vpack.c.b16 %v1223, %v1222
      %v1312 = vpack.c.b16 %v1225, %v1224
      %v1313 = vpack.c.b16 %v1227, %v1226
      %v1314 = vpack.c.b16 %v1229, %v1228
      %v1315 = vpack.c.b16 %v1231, %v1230
      %v1316 = vpack.c.b16 %v1233, %v1232
      %v1317 = vpack.c.b16 %v1235, %v1234
      %v1318 = vpack.c.b16 %v1237, %v1236
      %v1319 = vpack.c.b16 %v1239, %v1238
      %v1320 = vpack.c.b16 %v1241, %v1240
      %v1321 = vpack.c.b16 %v1243, %v1242
      %v1322 = vpack.c.b16 %v1245, %v1244
      %v1323 = vpack.c.b16 %v1247, %v1246
      %v1324 = vpack.c.b16 %v1249, %v1248
      %v1325 = vpack.c.b16 %v1251, %v1250
      %v1326 = vpack.c.b16 %v1253, %v1252
      %v1327 = vpack.c.b16 %v1255, %v1254
      %1400 = vmatpush.bf16.msra.mxu0 %v1263
      %1401 = vmatpush.bf16.msra.mxu0 %v1262
      %1402 = vmatpush.bf16.msra.mxu0 %v1261
      %1403 = vmatpush.bf16.msra.mxu0 %v1260
      %1404 = vmatpush.bf16.msra.mxu0 %v1259
      %1405 = vmatpush.bf16.msra.mxu0 %v1258
      %1406 = vmatpush.bf16.msra.mxu0 %v1257
      %1407 = vmatpush.bf16.msra.mxu0 %v1256
      %1408 = vmatmul.bf16.gmra.mxu0 %v941
      %v1409 = vpop.f32.mrf.mxu0
      %v1410 = vadd.f32 0.0, %v1409
      %v1411 = vpop.f32.mrf.mxu0
      %v1412 = vadd.f32 0.0, %v1411
      %1413 = vmatmul.bf16.gmra.mxu0 %v950
      %v1414 = vpop.f32.mrf.mxu0
      %v1415 = vadd.f32 0.0, %v1414
      %v1416 = vpop.f32.mrf.mxu0
      %v1417 = vadd.f32 0.0, %v1416
      %1418 = vmatmul.bf16.gmra.mxu0 %v959
      %v1419 = vpop.f32.mrf.mxu0
      %v1420 = vadd.f32 0.0, %v1419
      %v1421 = vpop.f32.mrf.mxu0
      %v1422 = vadd.f32 0.0, %v1421
      %1423 = vdwg.mxu0
      %1424 = vmatpush.bf16.msra.mxu0 %v1271
      %1425 = vmatpush.bf16.msra.mxu0 %v1270
      %1426 = vmatpush.bf16.msra.mxu0 %v1269
      %1427 = vmatpush.bf16.msra.mxu0 %v1268
      %1428 = vmatpush.bf16.msra.mxu0 %v1267
      %1429 = vmatpush.bf16.msra.mxu0 %v1266
      %1430 = vmatpush.bf16.msra.mxu0 %v1265
      %1431 = vmatpush.bf16.msra.mxu0 %v1264
      %1432 = vmatmul.bf16.gmra.mxu0 %v942
      %v1433 = vpop.f32.mrf.mxu0
      %v1434 = vadd.f32 %v1410, %v1433
      %v1435 = vpop.f32.mrf.mxu0
      %v1436 = vadd.f32 %v1412, %v1435
      %1437 = vmatmul.bf16.gmra.mxu0 %v951
      %v1438 = vpop.f32.mrf.mxu0
      %v1439 = vadd.f32 %v1415, %v1438
      %v1440 = vpop.f32.mrf.mxu0
      %v1441 = vadd.f32 %v1417, %v1440
      %1442 = vmatmul.bf16.gmra.mxu0 %v960
      %v1443 = vpop.f32.mrf.mxu0
      %v1444 = vadd.f32 %v1420, %v1443
      %v1445 = vpop.f32.mrf.mxu0
      %v1446 = vadd.f32 %v1422, %v1445
      %1447 = vdwg.mxu0
      %1448 = vmatpush.bf16.msra.mxu0 %v1279
      %1449 = vmatpush.bf16.msra.mxu0 %v1278
      %1450 = vmatpush.bf16.msra.mxu0 %v1277
      %1451 = vmatpush.bf16.msra.mxu0 %v1276
      %1452 = vmatpush.bf16.msra.mxu0 %v1275
      %1453 = vmatpush.bf16.msra.mxu0 %v1274
      %1454 = vmatpush.bf16.msra.mxu0 %v1273
      %1455 = vmatpush.bf16.msra.mxu0 %v1272
      %1456 = vmatmul.bf16.gmra.mxu0 %v943
      %v1457 = vpop.f32.mrf.mxu0
      %v1458 = vadd.f32 %v1434, %v1457
      %v1459 = vpop.f32.mrf.mxu0
      %v1460 = vadd.f32 %v1436, %v1459
      %1461 = vmatmul.bf16.gmra.mxu0 %v952
      %v1462 = vpop.f32.mrf.mxu0
      %v1463 = vadd.f32 %v1439, %v1462
      %v1464 = vpop.f32.mrf.mxu0
      %v1465 = vadd.f32 %v1441, %v1464
      %1466 = vmatmul.bf16.gmra.mxu0 %v961
      %v1467 = vpop.f32.mrf.mxu0
      %v1468 = vadd.f32 %v1444, %v1467
      %v1469 = vpop.f32.mrf.mxu0
      %v1470 = vadd.f32 %v1446, %v1469
      %1471 = vdwg.mxu0
      %1472 = vmatpush.bf16.msra.mxu0 %v1287
      %1473 = vmatpush.bf16.msra.mxu0 %v1286
      %1474 = vmatpush.bf16.msra.mxu0 %v1285
      %1475 = vmatpush.bf16.msra.mxu0 %v1284
      %1476 = vmatpush.bf16.msra.mxu0 %v1283
      %1477 = vmatpush.bf16.msra.mxu0 %v1282
      %1478 = vmatpush.bf16.msra.mxu0 %v1281
      %1479 = vmatpush.bf16.msra.mxu0 %v1280
      %1480 = vmatmul.bf16.gmra.mxu0 %v944
      %v1481 = vpop.f32.mrf.mxu0
      %v1482 = vadd.f32 %v1458, %v1481
      %v1483 = vpop.f32.mrf.mxu0
      %v1484 = vadd.f32 %v1460, %v1483
      %1485 = vmatmul.bf16.gmra.mxu0 %v953
      %v1486 = vpop.f32.mrf.mxu0
      %v1487 = vadd.f32 %v1463, %v1486
      %v1488 = vpop.f32.mrf.mxu0
      %v1489 = vadd.f32 %v1465, %v1488
      %1490 = vmatmul.bf16.gmra.mxu0 %v962
      %v1491 = vpop.f32.mrf.mxu0
      %v1492 = vadd.f32 %v1468, %v1491
      %v1493 = vpop.f32.mrf.mxu0
      %v1494 = vadd.f32 %v1470, %v1493
      %1495 = vdwg.mxu0
      %1496 = vmatpush.bf16.msra.mxu0 %v1295
      %1497 = vmatpush.bf16.msra.mxu0 %v1294
      %1498 = vmatpush.bf16.msra.mxu0 %v1293
      %1499 = vmatpush.bf16.msra.mxu0 %v1292
      %1500 = vmatpush.bf16.msra.mxu0 %v1291
      %1501 = vmatpush.bf16.msra.mxu0 %v1290
      %1502 = vmatpush.bf16.msra.mxu0 %v1289
      %1503 = vmatpush.bf16.msra.mxu0 %v1288
      %1504 = vmatmul.bf16.gmra.mxu0 %v945
      %v1505 = vpop.f32.mrf.mxu0
      %v1506 = vadd.f32 %v1482, %v1505
      %v1507 = vpop.f32.mrf.mxu0
      %v1508 = vadd.f32 %v1484, %v1507
      %1509 = vmatmul.bf16.gmra.mxu0 %v954
      %v1510 = vpop.f32.mrf.mxu0
      %v1511 = vadd.f32 %v1487, %v1510
      %v1512 = vpop.f32.mrf.mxu0
      %v1513 = vadd.f32 %v1489, %v1512
      %1514 = vmatmul.bf16.gmra.mxu0 %v963
      %v1515 = vpop.f32.mrf.mxu0
      %v1516 = vadd.f32 %v1492, %v1515
      %v1517 = vpop.f32.mrf.mxu0
      %v1518 = vadd.f32 %v1494, %v1517
      %1519 = vdwg.mxu0
      %1520 = vmatpush.bf16.msra.mxu0 %v1303
      %1521 = vmatpush.bf16.msra.mxu0 %v1302
      %1522 = vmatpush.bf16.msra.mxu0 %v1301
      %1523 = vmatpush.bf16.msra.mxu0 %v1300
      %1524 = vmatpush.bf16.msra.mxu0 %v1299
      %1525 = vmatpush.bf16.msra.mxu0 %v1298
      %1526 = vmatpush.bf16.msra.mxu0 %v1297
      %1527 = vmatpush.bf16.msra.mxu0 %v1296
      %1528 = vmatmul.bf16.gmra.mxu0 %v946
      %v1529 = vpop.f32.mrf.mxu0
      %v1530 = vadd.f32 %v1506, %v1529
      %v1531 = vpop.f32.mrf.mxu0
      %v1532 = vadd.f32 %v1508, %v1531
      %1533 = vmatmul.bf16.gmra.mxu0 %v955
      %v1534 = vpop.f32.mrf.mxu0
      %v1535 = vadd.f32 %v1511, %v1534
      %v1536 = vpop.f32.mrf.mxu0
      %v1537 = vadd.f32 %v1513, %v1536
      %1538 = vmatmul.bf16.gmra.mxu0 %v964
      %v1539 = vpop.f32.mrf.mxu0
      %v1540 = vadd.f32 %v1516, %v1539
      %v1541 = vpop.f32.mrf.mxu0
      %v1542 = vadd.f32 %v1518, %v1541
      %1543 = vdwg.mxu0
      %1544 = vmatpush.bf16.msra.mxu0 %v1311
      %1545 = vmatpush.bf16.msra.mxu0 %v1310
      %1546 = vmatpush.bf16.msra.mxu0 %v1309
      %1547 = vmatpush.bf16.msra.mxu0 %v1308
      %1548 = vmatpush.bf16.msra.mxu0 %v1307
      %1549 = vmatpush.bf16.msra.mxu0 %v1306
      %1550 = vmatpush.bf16.msra.mxu0 %v1305
      %1551 = vmatpush.bf16.msra.mxu0 %v1304
      %1552 = vmatmul.bf16.gmra.mxu0 %v947
      %v1553 = vpop.f32.mrf.mxu0
      %v1554 = vadd.f32 %v1530, %v1553
      %v1555 = vpop.f32.mrf.mxu0
      %v1556 = vadd.f32 %v1532, %v1555
      %1557 = vmatmul.bf16.gmra.mxu0 %v956
      %v1558 = vpop.f32.mrf.mxu0
      %v1559 = vadd.f32 %v1535, %v1558
      %v1560 = vpop.f32.mrf.mxu0
      %v1561 = vadd.f32 %v1537, %v1560
      %1562 = vmatmul.bf16.gmra.mxu0 %v965
      %v1563 = vpop.f32.mrf.mxu0
      %v1564 = vadd.f32 %v1540, %v1563
      %v1565 = vpop.f32.mrf.mxu0
      %v1566 = vadd.f32 %v1542, %v1565
      %1567 = vdwg.mxu0
      %1568 = vmatpush.bf16.msra.mxu0 %v1319
      %1569 = vmatpush.bf16.msra.mxu0 %v1318
      %1570 = vmatpush.bf16.msra.mxu0 %v1317
      %1571 = vmatpush.bf16.msra.mxu0 %v1316
      %1572 = vmatpush.bf16.msra.mxu0 %v1315
      %1573 = vmatpush.bf16.msra.mxu0 %v1314
      %1574 = vmatpush.bf16.msra.mxu0 %v1313
      %1575 = vmatpush.bf16.msra.mxu0 %v1312
      %1576 = vmatmul.bf16.gmra.mxu0 %v948
      %v1577 = vpop.f32.mrf.mxu0
      %v1578 = vadd.f32 %v1554, %v1577
      %v1579 = vpop.f32.mrf.mxu0
      %v1580 = vadd.f32 %v1556, %v1579
      %1581 = vmatmul.bf16.gmra.mxu0 %v957
      %v1582 = vpop.f32.mrf.mxu0
      %v1583 = vadd.f32 %v1559, %v1582
      %v1584 = vpop.f32.mrf.mxu0
      %v1585 = vadd.f32 %v1561, %v1584
      %1586 = vmatmul.bf16.gmra.mxu0 %v966
      %v1587 = vpop.f32.mrf.mxu0
      %v1588 = vadd.f32 %v1564, %v1587
      %v1589 = vpop.f32.mrf.mxu0
      %v1590 = vadd.f32 %v1566, %v1589
      %1591 = vdwg.mxu0
      %1592 = vmatpush.bf16.msra.mxu0 %v1327
      %1593 = vmatpush.bf16.msra.mxu0 %v1326
      %1594 = vmatpush.bf16.msra.mxu0 %v1325
      %1595 = vmatpush.bf16.msra.mxu0 %v1324
      %1596 = vmatpush.bf16.msra.mxu0 %v1323
      %1597 = vmatpush.bf16.msra.mxu0 %v1322
      %1598 = vmatpush.bf16.msra.mxu0 %v1321
      %1599 = vmatpush.bf16.msra.mxu0 %v1320
      %1600 = vmatmul.bf16.gmra.mxu0 %v949
      %v1601 = vpop.f32.mrf.mxu0
      %v1602 = vadd.f32 %v1578, %v1601
      %v1603 = vpop.f32.mrf.mxu0
      %v1604 = vadd.f32 %v1580, %v1603
      %1605 = vmatmul.bf16.gmra.mxu0 %v958
      %v1606 = vpop.f32.mrf.mxu0
      %v1607 = vadd.f32 %v1583, %v1606
      %v1608 = vpop.f32.mrf.mxu0
      %v1609 = vadd.f32 %v1585, %v1608
      %1610 = vmatmul.bf16.gmra.mxu0 %v967
      %v1611 = vpop.f32.mrf.mxu0
      %v1612 = vadd.f32 %v1588, %v1611
      %v1613 = vpop.f32.mrf.mxu0
      %v1614 = vadd.f32 %v1590, %v1613
      %1615 = vdwg.mxu0
      %v1616 = vmul.f32 %v1602, %v1602
      %v1617 = vmul.f32 %v1604, %v1604
      %v1618 = vmul.f32 %v1607, %v1607
      %v1619 = vmul.f32 %v1609, %v1609
      %v1620 = vadd.f32 %v1616, %v1618
      %v1621 = vadd.f32 %v1617, %v1619
      %v1622 = vrsqrt.pop %v1620
      %v1623 = vmul.f32 %v1622, %v1620
      %v1624 = vmul.f32 %v1623, %v1622
      %v1625 = vmul.f32 0.5, %v1624
      %v1626 = vsub.f32 1.5, %v1625
      %v1627 = vmul.f32 %v1622, %v1626
      %v1628 = vmul.f32 %v1620, %v1627
      %vm1629 = vcmp.eq.f32.partialorder %v1620, inf
      %v1630 = vsel %vm1629, %v1620, %v1628
      %vm1631 = vcmp.eq.f32.partialorder %v1620, 0.0
      %v1632 = vand.u32 %v1620, 2147483648
      %v1633 = vsel %vm1631, %v1632, %v1630
      %v1634 = vrsqrt.pop %v1621
      %v1635 = vmul.f32 %v1634, %v1621
      %v1636 = vmul.f32 %v1635, %v1634
      %v1637 = vmul.f32 0.5, %v1636
      %v1638 = vsub.f32 1.5, %v1637
      %v1639 = vmul.f32 %v1634, %v1638
      %v1640 = vmul.f32 %v1621, %v1639
      %vm1641 = vcmp.eq.f32.partialorder %v1621, inf
      %v1642 = vsel %vm1641, %v1621, %v1640
      %vm1643 = vcmp.eq.f32.partialorder %v1621, 0.0
      %v1644 = vand.u32 %v1621, 2147483648
      %v1645 = vsel %vm1643, %v1644, %v1642
      %v1646 = vmul.f32 %v1633, 0.5
      %v1647 = vmul.f32 %v1645, 0.5
      %v1648 = vmul.f32 %v1612, 0.5
      %v1649 = vmul.f32 %v1614, 0.5
      %v1650 = vadd.f32 %v1646, %v1648
      %v1651 = vadd.f32 %v1647, %v1649
      %v1653 = vperm.slane %v541, 0
      %v1655 = vadd.f32 %v1650, %v1653
      %v1656 = vadd.f32 %v1651, %v1653
      %1657 = vst [vmem:[%s312] sm:$0xff] %v1602
      %1658 = vst [vmem:[%s312 + $0x8] sm:$0xff] %v1604
      %1659 = vst [vmem:[%s312 + $0x10] sm:$0xff] %v1607
      %1660 = vst [vmem:[%s312 + $0x18] sm:$0xff] %v1609
      %1661 = vst [vmem:[%s312 + $0x20] sm:$0xff] %v1655
      %1662 = vst [vmem:[%s312 + $0x28] sm:$0xff] %v1656
      %v1663 = vadd.f32 %v1655, %v1656
      %v1664 = vrot.slane %v1663, 4
      %v1665 = vadd.f32 %v1663, %v1664
      %v1666 = vrot.slane %v1665, 2
      %v1667 = vadd.f32 %v1665, %v1666
      %v1668 = vrot.slane %v1667, 1
      %v1669 = vadd.f32 %v1667, %v1668
      %v1670 = vmul.f32 %v1655, %v1655
      %v1671 = vmul.f32 %v1656, %v1656
      %v1672 = vadd.f32 %v1670, %v1671
      %v1673 = vrot.slane %v1672, 4
      %v1674 = vadd.f32 %v1672, %v1673
      %v1675 = vrot.slane %v1674, 2
      %v1676 = vadd.f32 %v1674, %v1675
      %v1677 = vrot.slane %v1676, 1
      %v1678 = vadd.f32 %v1676, %v1677
      %v1679 = vsel %vm559, %v1669, %v1678
      %1680 = vst [vmem:[%s316] sm:$0x3] %v1679
      %p1681 = scmp.lt.s32.totalorder %s20, 1
      %s1682 = scalar_select %p1681, %s20, 1
      %s1683 = smul.addr %s1682, 6
      %s1684 = smul.addr %s1683, 8
      %s1685 = scalar_lea.vmem %s7, %s1684
      %p1686 = scmp.lt.s32.totalorder %s20, 1
      %s1687 = scalar_select %p1686, %s20, 1
      %s1688 = smul.addr %s1687, 2
      %s1689 = scalar_lea.vmem %s8, %s1688
      // Predicated region
      $region49: #{complex_conv_u_block2.4} parent=47 // pred_check
        %p1690 = pneg %p190
      $region50: #{complex_conv_u_block2.4} parent=47 // pred_check_branch
        %1692 = sbr.rel (%p1690) target = $region52
      $region51: #{complex_conv_u_block2.4} parent=47 // pred_region
        _
      $region52: #{complex_conv_u_block2.4} parent=47 // pred_fallthru
        _
      // Predicated region
      $region53: #{complex_conv_u_block2.4} parent=47 // pred_check
        %p1693 = pneg %p216
      $region54: #{complex_conv_u_block2.4} parent=47 // pred_check_branch
        %1695 = sbr.rel (%p1693) target = $region56
      $region55: #{complex_conv_u_block2.4} parent=47 // pred_region
        _
      $region56: #{complex_conv_u_block2.4} parent=47 // pred_fallthru
        _
    $region48: #{complex_conv_u_block2.4} parent=5 // pred_fallthru
      _
    %p1696 = scmp.le.s32.totalorder 2, %s15
    // Predicated region
    $region57: #{complex_conv_u_block2.4} parent=5 // pred_check
      %p1697 = pneg %p1696
    $region58: #{complex_conv_u_block2.4} parent=5 // pred_check_branch
      %1699 = sbr.rel (%p1697) target = $region60
    $region59: #{complex_conv_u_block2.4} parent=5 // pred_region
      %s1700 = ssub.s32 %s15, 2
      // Predicated region
      $region61: #{complex_conv_u_block2.4} parent=59 // pred_check
        %p1701 = pneg %p196
      $region62: #{complex_conv_u_block2.4} parent=59 // pred_check_branch
        %1703 = sbr.rel (%p1701) target = $region64
      $region63: #{complex_conv_u_block2.4} parent=59 // pred_region
        %p1704 = scmp.lt.s32.totalorder %s21, 1
        %s1705 = scalar_select %p1704, %s21, 1
        %s1706 = smul.addr %s1705, 6
        %s1707 = smul.addr %s1706, 8
        %s1708 = scalar_lea.vmem %s7, %s1707
      $region64: #{complex_conv_u_block2.4} parent=59 // pred_fallthru
        _
      // Predicated region
      $region65: #{complex_conv_u_block2.4} parent=59 // pred_check
        %p1709 = pneg %p222
      $region66: #{complex_conv_u_block2.4} parent=59 // pred_check_branch
        %1711 = sbr.rel (%p1709) target = $region68
      $region67: #{complex_conv_u_block2.4} parent=59 // pred_region
        %p1712 = scmp.lt.s32.totalorder %s21, 1
        %s1713 = scalar_select %p1712, %s21, 1
        %s1714 = smul.addr %s1713, 2
        %s1715 = scalar_lea.vmem %s8, %s1714
      $region68: #{complex_conv_u_block2.4} parent=59 // pred_fallthru
        _
    $region60: #{complex_conv_u_block2.4} parent=5 // pred_fallthru
      _
  $region6: #{complex_conv_u_block2.4} parent=0 // loop_footer
    %s19 = sadd.s32 1, %s15
  $region7: #{complex_conv_u_block2.4} parent=0 // loop_footer_branch
    %14 = sbr.rel target = $region3
  $region8: #{complex_conv_u_block2.4} parent=0 // loop_exit
    _

</llo_original>
